<compile_context>
chip_gen: v5e
topology: v5e:2x2
jax: 0.10.0
libtpu: 0.0.40
codegen_flags: <defaults>
</compile_context>

<pallas_src>
import functools

import jax
import jax.numpy as jnp
from jax.experimental import pallas as pl
from jax.experimental.pallas import tpu as pltpu


def get_relative_position_index_1d(T):
    # Same semantics as the torch helper: (T, T) int index in [0, 2T-2].
    coords = jnp.arange(T)
    rel = coords[:, None] - coords[None, :]
    return rel + (T - 1)


def _relative_positional_bias(bias_table, rel_index, num_heads,
                              partition_size, rel_type):
    """Returns bias of shape (H, N, N) with N = P0*P1, matching the torch code
    (including its repeat/tile semantics for type_1/type_3)."""
    P0, P1 = partition_size
    N = P0 * P1
    H = num_heads
    if rel_type in ("type_1", "type_3"):
        # table: (2*P0-1, H) -> gather -> (P0, P0, H); torch's
        # unsqueeze/repeat/view is equivalent to tiling over both axes.
        gathered = bias_table[rel_index.reshape(-1)].reshape(P0, P0, H)
        bias = jnp.tile(gathered, (P1, P1, 1))                  # (N, N, H)
    elif rel_type in ("type_2", "type_4"):
        # table: (2*P0-1, P1, P1, H)
        gathered = bias_table[rel_index.reshape(-1)].reshape(P0, P0, P1, P1, H)
        bias = gathered.transpose(0, 2, 1, 3, 4).reshape(N, N, H)
    else:
        raise ValueError(rel_type)
    return bias.transpose(2, 0, 1)                              # (H, N, N)


def _mhsa_kernel(*refs, scale, num_heads, head_dim, has_bias):
    """Blocks: x -> (Bt, N, 3*H*D), bias -> (H, N, N), out -> (Bt, N*H*D),
    scratch acc -> (Bt, N, H*D) f32."""
    if has_bias:
        x_ref, bias_ref, o_ref, acc_ref = refs
    else:
        x_ref, o_ref, acc_ref = refs
        bias_ref = None

    H, D = num_heads, head_dim
    HD = H * D
    Bt, N, _ = x_ref.shape

    for h in range(H):                   # H is small & static -> unrolled
        # Ref-sliced loads: only one head's q/k/v is live at a time.
        # scale = num_heads ** -0.5 on purpose (SkateFormer quirk); applied to
        # q in the input dtype (N*D elems) instead of to the f32 logits.
        qh = x_ref[:, :, h * D:(h + 1) * D] * scale              # (Bt, N, D)
        kh = x_ref[:, :, HD + h * D:HD + (h + 1) * D]            # (Bt, N, D)
        vh = x_ref[:, :, 2 * HD + h * D:2 * HD + (h + 1) * D]    # (Bt, N, D)

        # QK^T with f32 accumulation.
        logits = jnp.einsum("bnd,bmd->bnm", qh, kh,
                            preferred_element_type=jnp.float32)  # (Bt, N, N)
        if has_bias:
            logits = logits + bias_ref[h][None]                  # bias is f32

        # Numerically-stable softmax in f32 with an EXACT reciprocal
        # (approx vrcp was not accurate enough vs the reference).
        m = jnp.max(logits, axis=-1, keepdims=True)
        p = jnp.exp(logits - m)
        p = p / jnp.sum(p, axis=-1, keepdims=True)
        # TODO(synk): attn_drop with p>0 (training) would need pltpu.prng_*
        # masking; the module default p=0.0 makes dropout the identity.

        oh = jnp.einsum("bnm,bmd->bnd", p.astype(vh.dtype), vh,
                        preferred_element_type=jnp.float32)      # (Bt, N, D)
        # Per-head store into the VMEM scratch -> per-head vregs die here.
        acc_ref[:, :, h * D:(h + 1) * D] = oh

    # Single lane-dense store (N*HD is a multiple of 128) in the final layout.
    o_ref[...] = acc_ref[...].reshape(Bt, N * HD).astype(o_ref.dtype)


def _device_kind():
    try:
        return jax.devices()[0].device_kind.lower()
    except Exception:
        return ""


def _pick_block_batch(B, N, C, HD, H, itemsize, has_bias):
    """Choose batch elements per grid step + a VMEM limit for the compiler."""
    lanes, sub = 128, 8
    pad = lambda n, m=lanes: ((n + m - 1) // m) * m
    kind = _device_kind()
    if any(v in kind for v in ("v3", "v4", "v5", "v6")):
        # Single TensorCore, 128 MiB physical VMEM: go big, serial grid.
        budget, limit, min_grid = 80 << 20, 100 << 20, 1
    else:
        # v7x (64 MiB VMEM, 2 TCs) or unknown: conservative budget and
        # >= 2 grid steps per TensorCore so prefetch/compute can overlap.
        budget, limit, min_grid = 20 << 20, 48 << 20, 4

    if has_bias:
        budget -= 2 * H * N * pad(N) * 4          # double-buffered bias block
    per_elem = (2 * N * pad(C) * itemsize         # x block (double buffered)
                + 2 * pad(N * HD) * itemsize      # flat out block (double buffered)
                + N * pad(HD) * 4                 # f32 accumulator scratch
                + 3 * N * pad(N) * 4)             # f32 logits/probs (one live head)
    bt = max(1, min(256, budget // max(per_elem, 1)))
    if min_grid > 1 and B > min_grid * sub:
        bt = min(bt, B // min_grid)               # >= min_grid grid steps
    bt = max(sub, (bt // sub) * sub)              # sublane-aligned output rows
    bt = min(bt, pad(B, sub))                     # never bigger than padded batch
    # Rebalance: smallest sublane-aligned bt that keeps the same grid size.
    grid = -(-B // bt)
    bt = ((-(-B // grid) + sub - 1) // sub) * sub
    return bt, limit


def multi_head_self_attention(x, bias_table=None, rel_index=None, *, num_heads,
                              partition_size, rel_type="type_1", rel=True,
                              block_batch=None):
    """x: (B, N, C) with C = 3 * num_heads * head_dim, N = P0*P1.
    Returns (B, N, num_heads * head_dim)."""
    B, N, C = x.shape
    H = num_heads
    assert C % (3 * H) == 0
    D = C // (3 * H)
    HD = H * D
    assert N == partition_size[0] * partition_size[1]
    # NOTE: the module scales by num_heads ** -0.5 (not head_dim ** -0.5).
    scale = float(H) ** (-0.5)

    itemsize = jnp.dtype(x.dtype).itemsize
    auto_bt, vmem_limit = _pick_block_batch(B, N, C, HD, H, itemsize, rel)
    Bt = auto_bt if block_batch is None else block_batch

    # Zero-pad the batch instead of shrinking Bt (keeps large, aligned DMAs).
    grid_b = -(-B // Bt)
    B_pad = grid_b * Bt
    if B_pad != B:
        x = jnp.pad(x, ((0, B_pad - B), (0, 0), (0, 0)))

    kernel = functools.partial(_mhsa_kernel, scale=scale, num_heads=H,
                               head_dim=D, has_bias=rel)

    in_specs = [pl.BlockSpec((Bt, N, C), lambda b: (b, 0, 0))]
    args = [x]
    if rel:
        bias = _relative_positional_bias(bias_table, rel_index, H,
                                         partition_size, rel_type)
        in_specs.append(pl.BlockSpec((H, N, N), lambda b: (0, 0, 0)))
        args.append(bias.astype(jnp.float32))

    out_flat = pl.pallas_call(
        kernel,
        out_shape=jax.ShapeDtypeStruct((B_pad, N * HD), x.dtype),
        grid=(grid_b,),
        in_specs=in_specs,
        out_specs=pl.BlockSpec((Bt, N * HD), lambda b: (b, 0)),
        scratch_shapes=[pltpu.VMEM((Bt, N, HD), jnp.float32)],
        compiler_params=pltpu.CompilerParams(
            dimension_semantics=("parallel",),
            vmem_limit_bytes=vmem_limit),
    )(*args)

    # Slice off batch padding; reshape (B, N*HD) -> (B, N, HD) is free.
    return out_flat[:B].reshape(B, N, HD)


def _reference(x, bias_table, rel_index, *, num_heads, partition_size,
               rel_type="type_1", rel=True):
    """Pure-JAX reference mirroring the PyTorch forward."""
    B, N, C = x.shape
    H = num_heads
    D = C // (3 * H)
    scale = H ** (-0.5)
    qkv = x.reshape(B, N, 3, H, D).transpose(2, 0, 3, 1, 4)
    q, k, v = qkv[0] * scale, qkv[1], qkv[2]
    attn = jnp.einsum("bhnd,bhmd->bhnm", q, k)
    if rel:
        bias = _relative_positional_bias(bias_table, rel_index, H,
                                         partition_size, rel_type)
        attn = attn + bias[None]
    attn = jax.nn.softmax(attn, axis=-1)
    out = jnp.einsum("bhnm,bhmd->bhnd", attn, v)
    return out.transpose(0, 2, 1, 3).reshape(B, N, H * D)


if __name__ == "__main__":
    # Small, module-consistent shapes.
    B = 8
    num_heads = 4
    head_dim = 8
    partition_size = (4, 4)          # N = 16
    N = partition_size[0] * partition_size[1]
    C = 3 * num_heads * head_dim     # 96

    key = jax.random.PRNGKey(0)
    kx, kb1, kb2 = jax.random.split(key, 3)

    x = jax.random.normal(kx, (B, N, C), dtype=jnp.float32)

    # trunc_normal_(std=0.02) init for the relative position bias tables.
    table_type1 = (jax.random.truncated_normal(
        kb1, -2.0, 2.0, (2 * partition_size[0] - 1, num_heads),
        dtype=jnp.float32) * 0.02)
    table_type2 = (jax.random.truncated_normal(
        kb2, -2.0, 2.0,
        (2 * partition_size[0] - 1, partition_size[1], partition_size[1],
         num_heads), dtype=jnp.float32) * 0.02)
    rel_index = get_relative_position_index_1d(partition_size[0])

    cases = [
        dict(rel=True, rel_type="type_1", table=table_type1),
        dict(rel=True, rel_type="type_2", table=table_type2),
        dict(rel=False, rel_type="type_1", table=table_type1),
    ]
    for cfg in cases:
        out = multi_head_self_attention(
            x, cfg["table"], rel_index,
            num_heads=num_heads, partition_size=partition_size,
            rel_type=cfg["rel_type"], rel=cfg["rel"])
        out = jax.block_until_ready(out)

        ref = _reference(
            x, cfg["table"], rel_index,
            num_heads=num_heads, partition_size=partition_size,
            rel_type=cfg["rel_type"], rel=cfg["rel"])

        assert out.shape == (B, N, num_heads * head_dim)
        err = float(jnp.max(jnp.abs(out - ref)))
        assert jnp.allclose(out, ref, atol=1e-3, rtol=1e-3), (cfg, err)

    print("KERNEL_OK")
</pallas_src>

<mosaic_0001>
module attributes {stable_mosaic.version = 11 : i64} {
  func.func @_mhsa_kernel(%arg0: i32, %arg1: memref<8x16x96xf32, #tpu.memory_space<vmem>>, %arg2: memref<4x16x16xf32, #tpu.memory_space<vmem>>, %arg3: memref<8x512xf32, #tpu.memory_space<vmem>>, %arg4: memref<8x16x32xf32, #tpu.memory_space<vmem>>) attributes {dimension_semantics = [#tpu.dimension_semantics<parallel>], iteration_bounds = array<i64: 1>, scalar_prefetch = 0 : i64, scratch_operands = 1 : i64, tpu.core_type = #tpu.core_type<tc>, window_params = [{transform_indices = @transform_0, window_bounds = array<i64: 8, 16, 96>}, {pipeline_mode = #tpu.pipeline_mode<synchronous>, transform_indices = @transform_1, window_bounds = array<i64: 4, 16, 16>}, {transform_indices = @transform_2, window_bounds = array<i64: 8, 512>}]} {
    %c0 = arith.constant 0 : index
    %c0_0 = arith.constant 0 : index
    %c0_1 = arith.constant 0 : index
    %0 = vector.load %arg1[%c0, %c0_0, %c0_1] : memref<8x16x96xf32, #tpu.memory_space<vmem>>, vector<8x16x8xf32>
    %cst = arith.constant 5.000000e-01 : f32
    %1 = vector.broadcast %cst : f32 to vector<8x16x8xf32>
    %2 = arith.mulf %0, %1 : vector<8x16x8xf32>
    %c0_2 = arith.constant 0 : index
    %c0_3 = arith.constant 0 : index
    %c32 = arith.constant 32 : index
    %3 = vector.load %arg1[%c0_2, %c0_3, %c32] : memref<8x16x96xf32, #tpu.memory_space<vmem>>, vector<8x16x8xf32>
    %c0_4 = arith.constant 0 : index
    %c0_5 = arith.constant 0 : index
    %c64 = arith.constant 64 : index
    %4 = vector.load %arg1[%c0_4, %c0_5, %c64] : memref<8x16x96xf32, #tpu.memory_space<vmem>>, vector<8x16x8xf32>
    "tpu.trace_start"() <{level = 10 : i32, message = "bnd,bmd->bnm"}> : () -> ()
    %cst_6 = arith.constant dense<0.000000e+00> : vector<8x16x16xf32>
    %5 = tpu.matmul %2, %3, %cst_6 {dimension_numbers = #tpu.dot_dimension_numbers<[2], [2], [1], [1], [0, 0, 0, 1, 1, 1], [0], [0]>} : vector<8x16x8xf32>, vector<8x16x8xf32>, vector<8x16x16xf32> -> vector<8x16x16xf32>
    "tpu.trace_stop"() : () -> ()
    %c0_7 = arith.constant 0 : index
    %c0_8 = arith.constant 0 : index
    %c0_9 = arith.constant 0 : index
    %6 = vector.load %arg2[%c0_7, %c0_8, %c0_9] : memref<4x16x16xf32, #tpu.memory_space<vmem>>, vector<1x16x16xf32>
    %7 = vector.shape_cast %6 : vector<1x16x16xf32> to vector<16x16xf32>
    %8 = vector.shape_cast %7 : vector<16x16xf32> to vector<1x16x16xf32>
    %9 = vector.broadcast %8 : vector<1x16x16xf32> to vector<8x16x16xf32>
    %10 = arith.addf %5, %9 : vector<8x16x16xf32>
    %cst_10 = arith.constant dense<0xFF800000> : vector<8x16xf32>
    %11 = vector.multi_reduction <maximumf>, %10, %cst_10 [2] : vector<8x16x16xf32> to vector<8x16xf32>
    %12 = vector.shape_cast %11 : vector<8x16xf32> to vector<8x16x1xf32>
    %13 = vector.broadcast %12 : vector<8x16x1xf32> to vector<8x16x16xf32>
    %14 = arith.subf %10, %13 : vector<8x16x16xf32>
    %15 = math.exp %14 : vector<8x16x16xf32>
    %cst_11 = arith.constant dense<0.000000e+00> : vector<8x16xf32>
    %16 = vector.multi_reduction <add>, %15, %cst_11 [2] : vector<8x16x16xf32> to vector<8x16xf32>
    %17 = vector.shape_cast %16 : vector<8x16xf32> to vector<8x16x1xf32>
    %18 = vector.broadcast %17 : vector<8x16x1xf32> to vector<8x16x16xf32>
    %19 = arith.divf %15, %18 : vector<8x16x16xf32>
    "tpu.trace_start"() <{level = 10 : i32, message = "bnm,bmd->bnd"}> : () -> ()
    %cst_12 = arith.constant dense<0.000000e+00> : vector<8x16x8xf32>
    %20 = tpu.matmul %19, %4, %cst_12 {dimension_numbers = #tpu.dot_dimension_numbers<[2], [1], [1], [2], [0, 0, 0, 1, 1, 2], [0], [0]>} : vector<8x16x16xf32>, vector<8x16x8xf32>, vector<8x16x8xf32> -> vector<8x16x8xf32>
    "tpu.trace_stop"() : () -> ()
    %c0_13 = arith.constant 0 : index
    %c0_14 = arith.constant 0 : index
    %c0_15 = arith.constant 0 : index
    %21 = vector.load %arg4[%c0_13, %c0_14, %c0_15] : memref<8x16x32xf32, #tpu.memory_space<vmem>>, vector<8x16x8xf32>
    tpu.vector_store %arg4[%c0_13, %c0_14, %c0_15], %20 {strides = array<i32>} : memref<8x16x32xf32, #tpu.memory_space<vmem>>, vector<8x16x8xf32>,
    %c0_16 = arith.constant 0 : index
    %c0_17 = arith.constant 0 : index
    %c8 = arith.constant 8 : index
    %22 = vector.load %arg1[%c0_16, %c0_17, %c8] : memref<8x16x96xf32, #tpu.memory_space<vmem>>, vector<8x16x8xf32>
    %cst_18 = arith.constant 5.000000e-01 : f32
    %23 = vector.broadcast %cst_18 : f32 to vector<8x16x8xf32>
    %24 = arith.mulf %22, %23 : vector<8x16x8xf32>
    %c0_19 = arith.constant 0 : index
    %c0_20 = arith.constant 0 : index
    %c40 = arith.constant 40 : index
    %25 = vector.load %arg1[%c0_19, %c0_20, %c40] : memref<8x16x96xf32, #tpu.memory_space<vmem>>, vector<8x16x8xf32>
    %c0_21 = arith.constant 0 : index
    %c0_22 = arith.constant 0 : index
    %c72 = arith.constant 72 : index
    %26 = vector.load %arg1[%c0_21, %c0_22, %c72] : memref<8x16x96xf32, #tpu.memory_space<vmem>>, vector<8x16x8xf32>
    "tpu.trace_start"() <{level = 10 : i32, message = "bnd,bmd->bnm"}> : () -> ()
    %cst_23 = arith.constant dense<0.000000e+00> : vector<8x16x16xf32>
    %27 = tpu.matmul %24, %25, %cst_23 {dimension_numbers = #tpu.dot_dimension_numbers<[2], [2], [1], [1], [0, 0, 0, 1, 1, 1], [0], [0]>} : vector<8x16x8xf32>, vector<8x16x8xf32>, vector<8x16x16xf32> -> vector<8x16x16xf32>
    "tpu.trace_stop"() : () -> ()
    %c1 = arith.constant 1 : index
    %c0_24 = arith.constant 0 : index
    %c0_25 = arith.constant 0 : index
    %28 = vector.load %arg2[%c1, %c0_24, %c0_25] : memref<4x16x16xf32, #tpu.memory_space<vmem>>, vector<1x16x16xf32>
    %29 = vector.shape_cast %28 : vector<1x16x16xf32> to vector<16x16xf32>
    %30 = vector.shape_cast %29 : vector<16x16xf32> to vector<1x16x16xf32>
    %31 = vector.broadcast %30 : vector<1x16x16xf32> to vector<8x16x16xf32>
    %32 = arith.addf %27, %31 : vector<8x16x16xf32>
    %cst_26 = arith.constant dense<0xFF800000> : vector<8x16xf32>
    %33 = vector.multi_reduction <maximumf>, %32, %cst_26 [2] : vector<8x16x16xf32> to vector<8x16xf32>
    %34 = vector.shape_cast %33 : vector<8x16xf32> to vector<8x16x1xf32>
    %35 = vector.broadcast %34 : vector<8x16x1xf32> to vector<8x16x16xf32>
    %36 = arith.subf %32, %35 : vector<8x16x16xf32>
    %37 = math.exp %36 : vector<8x16x16xf32>
    %cst_27 = arith.constant dense<0.000000e+00> : vector<8x16xf32>
    %38 = vector.multi_reduction <add>, %37, %cst_27 [2] : vector<8x16x16xf32> to vector<8x16xf32>
    %39 = vector.shape_cast %38 : vector<8x16xf32> to vector<8x16x1xf32>
    %40 = vector.broadcast %39 : vector<8x16x1xf32> to vector<8x16x16xf32>
    %41 = arith.divf %37, %40 : vector<8x16x16xf32>
    "tpu.trace_start"() <{level = 10 : i32, message = "bnm,bmd->bnd"}> : () -> ()
    %cst_28 = arith.constant dense<0.000000e+00> : vector<8x16x8xf32>
    %42 = tpu.matmul %41, %26, %cst_28 {dimension_numbers = #tpu.dot_dimension_numbers<[2], [1], [1], [2], [0, 0, 0, 1, 1, 2], [0], [0]>} : vector<8x16x16xf32>, vector<8x16x8xf32>, vector<8x16x8xf32> -> vector<8x16x8xf32>
    "tpu.trace_stop"() : () -> ()
    %c0_29 = arith.constant 0 : index
    %c0_30 = arith.constant 0 : index
    %c8_31 = arith.constant 8 : index
    %43 = vector.load %arg4[%c0_29, %c0_30, %c8_31] : memref<8x16x32xf32, #tpu.memory_space<vmem>>, vector<8x16x8xf32>
    tpu.vector_store %arg4[%c0_29, %c0_30, %c8_31], %42 {strides = array<i32>} : memref<8x16x32xf32, #tpu.memory_space<vmem>>, vector<8x16x8xf32>,
    %c0_32 = arith.constant 0 : index
    %c0_33 = arith.constant 0 : index
    %c16 = arith.constant 16 : index
    %44 = vector.load %arg1[%c0_32, %c0_33, %c16] : memref<8x16x96xf32, #tpu.memory_space<vmem>>, vector<8x16x8xf32>
    %cst_34 = arith.constant 5.000000e-01 : f32
    %45 = vector.broadcast %cst_34 : f32 to vector<8x16x8xf32>
    %46 = arith.mulf %44, %45 : vector<8x16x8xf32>
    %c0_35 = arith.constant 0 : index
    %c0_36 = arith.constant 0 : index
    %c48 = arith.constant 48 : index
    %47 = vector.load %arg1[%c0_35, %c0_36, %c48] : memref<8x16x96xf32, #tpu.memory_space<vmem>>, vector<8x16x8xf32>
    %c0_37 = arith.constant 0 : index
    %c0_38 = arith.constant 0 : index
    %c80 = arith.constant 80 : index
    %48 = vector.load %arg1[%c0_37, %c0_38, %c80] : memref<8x16x96xf32, #tpu.memory_space<vmem>>, vector<8x16x8xf32>
    "tpu.trace_start"() <{level = 10 : i32, message = "bnd,bmd->bnm"}> : () -> ()
    %cst_39 = arith.constant dense<0.000000e+00> : vector<8x16x16xf32>
    %49 = tpu.matmul %46, %47, %cst_39 {dimension_numbers = #tpu.dot_dimension_numbers<[2], [2], [1], [1], [0, 0, 0, 1, 1, 1], [0], [0]>} : vector<8x16x8xf32>, vector<8x16x8xf32>, vector<8x16x16xf32> -> vector<8x16x16xf32>
    "tpu.trace_stop"() : () -> ()
    %c2 = arith.constant 2 : index
    %c0_40 = arith.constant 0 : index
    %c0_41 = arith.constant 0 : index
    %50 = vector.load %arg2[%c2, %c0_40, %c0_41] : memref<4x16x16xf32, #tpu.memory_space<vmem>>, vector<1x16x16xf32>
    %51 = vector.shape_cast %50 : vector<1x16x16xf32> to vector<16x16xf32>
    %52 = vector.shape_cast %51 : vector<16x16xf32> to vector<1x16x16xf32>
    %53 = vector.broadcast %52 : vector<1x16x16xf32> to vector<8x16x16xf32>
    %54 = arith.addf %49, %53 : vector<8x16x16xf32>
    %cst_42 = arith.constant dense<0xFF800000> : vector<8x16xf32>
    %55 = vector.multi_reduction <maximumf>, %54, %cst_42 [2] : vector<8x16x16xf32> to vector<8x16xf32>
    %56 = vector.shape_cast %55 : vector<8x16xf32> to vector<8x16x1xf32>
    %57 = vector.broadcast %56 : vector<8x16x1xf32> to vector<8x16x16xf32>
    %58 = arith.subf %54, %57 : vector<8x16x16xf32>
    %59 = math.exp %58 : vector<8x16x16xf32>
    %cst_43 = arith.constant dense<0.000000e+00> : vector<8x16xf32>
    %60 = vector.multi_reduction <add>, %59, %cst_43 [2] : vector<8x16x16xf32> to vector<8x16xf32>
    %61 = vector.shape_cast %60 : vector<8x16xf32> to vector<8x16x1xf32>
    %62 = vector.broadcast %61 : vector<8x16x1xf32> to vector<8x16x16xf32>
    %63 = arith.divf %59, %62 : vector<8x16x16xf32>
    "tpu.trace_start"() <{level = 10 : i32, message = "bnm,bmd->bnd"}> : () -> ()
    %cst_44 = arith.constant dense<0.000000e+00> : vector<8x16x8xf32>
    %64 = tpu.matmul %63, %48, %cst_44 {dimension_numbers = #tpu.dot_dimension_numbers<[2], [1], [1], [2], [0, 0, 0, 1, 1, 2], [0], [0]>} : vector<8x16x16xf32>, vector<8x16x8xf32>, vector<8x16x8xf32> -> vector<8x16x8xf32>
    "tpu.trace_stop"() : () -> ()
    %c0_45 = arith.constant 0 : index
    %c0_46 = arith.constant 0 : index
    %c16_47 = arith.constant 16 : index
    %65 = vector.load %arg4[%c0_45, %c0_46, %c16_47] : memref<8x16x32xf32, #tpu.memory_space<vmem>>, vector<8x16x8xf32>
    tpu.vector_store %arg4[%c0_45, %c0_46, %c16_47], %64 {strides = array<i32>} : memref<8x16x32xf32, #tpu.memory_space<vmem>>, vector<8x16x8xf32>,
    %c0_48 = arith.constant 0 : index
    %c0_49 = arith.constant 0 : index
    %c24 = arith.constant 24 : index
    %66 = vector.load %arg1[%c0_48, %c0_49, %c24] : memref<8x16x96xf32, #tpu.memory_space<vmem>>, vector<8x16x8xf32>
    %cst_50 = arith.constant 5.000000e-01 : f32
    %67 = vector.broadcast %cst_50 : f32 to vector<8x16x8xf32>
    %68 = arith.mulf %66, %67 : vector<8x16x8xf32>
    %c0_51 = arith.constant 0 : index
    %c0_52 = arith.constant 0 : index
    %c56 = arith.constant 56 : index
    %69 = vector.load %arg1[%c0_51, %c0_52, %c56] : memref<8x16x96xf32, #tpu.memory_space<vmem>>, vector<8x16x8xf32>
    %c0_53 = arith.constant 0 : index
    %c0_54 = arith.constant 0 : index
    %c88 = arith.constant 88 : index
    %70 = vector.load %arg1[%c0_53, %c0_54, %c88] : memref<8x16x96xf32, #tpu.memory_space<vmem>>, vector<8x16x8xf32>
    "tpu.trace_start"() <{level = 10 : i32, message = "bnd,bmd->bnm"}> : () -> ()
    %cst_55 = arith.constant dense<0.000000e+00> : vector<8x16x16xf32>
    %71 = tpu.matmul %68, %69, %cst_55 {dimension_numbers = #tpu.dot_dimension_numbers<[2], [2], [1], [1], [0, 0, 0, 1, 1, 1], [0], [0]>} : vector<8x16x8xf32>, vector<8x16x8xf32>, vector<8x16x16xf32> -> vector<8x16x16xf32>
    "tpu.trace_stop"() : () -> ()
    %c3 = arith.constant 3 : index
    %c0_56 = arith.constant 0 : index
    %c0_57 = arith.constant 0 : index
    %72 = vector.load %arg2[%c3, %c0_56, %c0_57] : memref<4x16x16xf32, #tpu.memory_space<vmem>>, vector<1x16x16xf32>
    %73 = vector.shape_cast %72 : vector<1x16x16xf32> to vector<16x16xf32>
    %74 = vector.shape_cast %73 : vector<16x16xf32> to vector<1x16x16xf32>
    %75 = vector.broadcast %74 : vector<1x16x16xf32> to vector<8x16x16xf32>
    %76 = arith.addf %71, %75 : vector<8x16x16xf32>
    %cst_58 = arith.constant dense<0xFF800000> : vector<8x16xf32>
    %77 = vector.multi_reduction <maximumf>, %76, %cst_58 [2] : vector<8x16x16xf32> to vector<8x16xf32>
    %78 = vector.shape_cast %77 : vector<8x16xf32> to vector<8x16x1xf32>
    %79 = vector.broadcast %78 : vector<8x16x1xf32> to vector<8x16x16xf32>
    %80 = arith.subf %76, %79 : vector<8x16x16xf32>
    %81 = math.exp %80 : vector<8x16x16xf32>
    %cst_59 = arith.constant dense<0.000000e+00> : vector<8x16xf32>
    %82 = vector.multi_reduction <add>, %81, %cst_59 [2] : vector<8x16x16xf32> to vector<8x16xf32>
    %83 = vector.shape_cast %82 : vector<8x16xf32> to vector<8x16x1xf32>
    %84 = vector.broadcast %83 : vector<8x16x1xf32> to vector<8x16x16xf32>
    %85 = arith.divf %81, %84 : vector<8x16x16xf32>
    "tpu.trace_start"() <{level = 10 : i32, message = "bnm,bmd->bnd"}> : () -> ()
    %cst_60 = arith.constant dense<0.000000e+00> : vector<8x16x8xf32>
    %86 = tpu.matmul %85, %70, %cst_60 {dimension_numbers = #tpu.dot_dimension_numbers<[2], [1], [1], [2], [0, 0, 0, 1, 1, 2], [0], [0]>} : vector<8x16x16xf32>, vector<8x16x8xf32>, vector<8x16x8xf32> -> vector<8x16x8xf32>
    "tpu.trace_stop"() : () -> ()
    %c0_61 = arith.constant 0 : index
    %c0_62 = arith.constant 0 : index
    %c24_63 = arith.constant 24 : index
    %87 = vector.load %arg4[%c0_61, %c0_62, %c24_63] : memref<8x16x32xf32, #tpu.memory_space<vmem>>, vector<8x16x8xf32>
    tpu.vector_store %arg4[%c0_61, %c0_62, %c24_63], %86 {strides = array<i32>} : memref<8x16x32xf32, #tpu.memory_space<vmem>>, vector<8x16x8xf32>,
    %c0_64 = arith.constant 0 : index
    %c0_65 = arith.constant 0 : index
    %c0_66 = arith.constant 0 : index
    %88 = vector.load %arg4[%c0_64, %c0_65, %c0_66] : memref<8x16x32xf32, #tpu.memory_space<vmem>>, vector<8x16x32xf32>
    %89 = vector.shape_cast %88 : vector<8x16x32xf32> to vector<8x512xf32>
    %c0_67 = arith.constant 0 : index
    %c0_68 = arith.constant 0 : index
    %90 = vector.load %arg3[%c0_67, %c0_68] : memref<8x512xf32, #tpu.memory_space<vmem>>, vector<8x512xf32>
    tpu.vector_store %arg3[%c0_67, %c0_68], %89 {strides = array<i32>} : memref<8x512xf32, #tpu.memory_space<vmem>>, vector<8x512xf32>,
    return
  }
  func.func @transform_0(%arg0: i32) -> (i32, i32, i32) {
    %c0_i32 = arith.constant 0 : i32
    %c0_i32_0 = arith.constant 0 : i32
    %c0_i32_1 = arith.constant 0 : i32
    return %arg0, %c0_i32, %c0_i32_0 : i32, i32, i32
  }
  func.func @transform_1(%arg0: i32) -> (i32, i32, i32) {
    %c0_i32 = arith.constant 0 : i32
    %c0_i32_0 = arith.constant 0 : i32
    %c0_i32_1 = arith.constant 0 : i32
    %c0_i32_2 = arith.constant 0 : i32
    return %c0_i32, %c0_i32_0, %c0_i32_1 : i32, i32, i32
  }
  func.func @transform_2(%arg0: i32) -> (i32, i32) {
    %c0_i32 = arith.constant 0 : i32
    %c0_i32_0 = arith.constant 0 : i32
    return %arg0, %c0_i32 : i32, i32
  }
}

</mosaic_0001>

<llo_original>
// kernel: tpu_custom_call.1
$region0: #{tpu_custom_call.1}
  #allocation0 [shape = 'u32[]', space=smem, size = 0x4, offset = 0x4, fixed_abs, tag = 'smem constant byte address 0x4 - core index']
  #allocation1 [shape = 'u32[72,128]{1,0:T(1,128)}', space=vmem, size = 0x9000, scoped, tag = 'internal scratch']
  #allocation2 [shape = 'f32[8,16,32]{2,1,0:T(8,128)}', space=vmem, size = 0x10000, scoped, tag = 'scratch operand']
  %s0 = inlined_call_operand.hbm [shape: f32[8,16,96], index: 0, kind: input, shape index: {}]
  %s1 = inlined_call_operand.hbm [shape: f32[4,16,16], index: 1, kind: input, shape index: {}]
  %s2 = inlined_call_operand.hbm [shape: f32[8,512], index: 2, kind: output, shape index: {}]
  %s3 = sld [smem:[#allocation0]]
  $region26: #{tpu_custom_call.1} parent=0
    _
  %s5 = ssub.s32 1, %s3
  %s6 = scalar_select 0, %s5, %s3
  $region1: #{tpu_custom_call.1} parent=0
    #allocation3 [shape = 'u8[65536]{0}', space=vmem, size = 0x10000, scoped, tag = 'input window, operand 0, single buffered']
    #allocation4 [shape = 's32[1]{0}', space=sflag, size = 0x4, scoped, tag = 'scoped memory for tpu_custom_call.1']
    #allocation5 [shape = 's32[1]{0}', space=sflag, size = 0x4, scoped, tag = 'scoped memory for tpu_custom_call.1']
    #allocation6 [shape = 'u8[32768]{0}', space=vmem, size = 0x8000, scoped, tag = 'input window, operand 1, single buffered']
    #allocation7 [shape = 's32[1]{0}', space=sflag, size = 0x4, scoped, tag = 'scoped memory for tpu_custom_call.1']
    #allocation8 [shape = 'u8[16384]{0}', space=vmem, size = 0x4000, scoped, tag = 'output window, operand 0, single buffered']
    %7 = vsyncpa [#allocation4], 0
    %8 = vsyncpa [#allocation7], 0
    %9 = vsyncpa [#allocation5], 0
    // Predicated region
    $region2: #{tpu_custom_call.1} parent=1 // pred_check
      _
    $region3: #{tpu_custom_call.1} parent=1 // pred_check_branch
      %11 = sbr.rel (0) target = $region5
    $region4: #{tpu_custom_call.1} parent=1 // pred_region
      %13 = vsyncadd [#allocation4], 0
      %s14 = sshll.u32 %s0, 4
      %s15 = int_to_ptr.hbm [resolvable:$true] %s14
      %s16 = sshll.u32 [#allocation3], 4
      %s17 = int_to_ptr.vmem [resolvable:$true] %s16
      %22 = dma.hbm_to_vmem [thread:$0]  %s15, 2048, %s17, [#allocation4], 128, 128, 8
    $region5: #{tpu_custom_call.1} parent=1 // pred_fallthru
      _
    // Predicated region
    $region6: #{tpu_custom_call.1} parent=1 // pred_check
      _
    $region7: #{tpu_custom_call.1} parent=1 // pred_check_branch
      %24 = sbr.rel (0) target = $region9
    $region8: #{tpu_custom_call.1} parent=1 // pred_region
      %26 = vsyncadd [#allocation7], 0
      %s27 = sshll.u32 %s1, 4
      %s28 = int_to_ptr.hbm [resolvable:$true] %s27
      %s29 = sshll.u32 [#allocation6], 4
      %s30 = int_to_ptr.vmem [resolvable:$true] %s29
      %35 = dma.hbm_to_vmem [thread:$0]  %s28, 1024, %s30, [#allocation7], 128, 128, 8
    $region9: #{tpu_custom_call.1} parent=1 // pred_fallthru
      _
    // Predicated region
    $region10: #{tpu_custom_call.1} parent=1 // pred_check
      _
    $region11: #{tpu_custom_call.1} parent=1 // pred_check_branch
      %37 = sbr.rel (0) target = $region13
    $region12: #{tpu_custom_call.1} parent=1 // pred_region
      %39 = dma.done [#allocation4], 2048
    $region13: #{tpu_custom_call.1} parent=1 // pred_fallthru
      _
    // Predicated region
    $region14: #{tpu_custom_call.1} parent=1 // pred_check
      _
    $region15: #{tpu_custom_call.1} parent=1 // pred_check_branch
      %41 = sbr.rel (0) target = $region17
    $region16: #{tpu_custom_call.1} parent=1 // pred_region
      %43 = dma.done [#allocation7], 1024
    $region17: #{tpu_custom_call.1} parent=1 // pred_fallthru
      _
    %v44 = vld [vmem:[#allocation3] sm:$0xff]
    %v45 = vld [vmem:[#allocation3 + $0x8] sm:$0xff]
    %v46 = vld [vmem:[#allocation3 + $0x10] sm:$0xff]
    %v47 = vld [vmem:[#allocation3 + $0x18] sm:$0xff]
    %v48 = vld [vmem:[#allocation3 + $0x20] sm:$0xff]
    %v49 = vld [vmem:[#allocation3 + $0x28] sm:$0xff]
    %v50 = vld [vmem:[#allocation3 + $0x30] sm:$0xff]
    %v51 = vld [vmem:[#allocation3 + $0x38] sm:$0xff]
    %v52 = vld [vmem:[#allocation3 + $0x40] sm:$0xff]
    %v53 = vld [vmem:[#allocation3 + $0x48] sm:$0xff]
    %v54 = vld [vmem:[#allocation3 + $0x50] sm:$0xff]
    %v55 = vld [vmem:[#allocation3 + $0x58] sm:$0xff]
    %v56 = vld [vmem:[#allocation3 + $0x60] sm:$0xff]
    %v57 = vld [vmem:[#allocation3 + $0x68] sm:$0xff]
    %v58 = vld [vmem:[#allocation3 + $0x70] sm:$0xff]
    %v59 = vld [vmem:[#allocation3 + $0x78] sm:$0xff]
    %v60 = vmul.f32 %v44, 0.5
    %v61 = vmul.f32 %v45, 0.5
    %v62 = vmul.f32 %v46, 0.5
    %v63 = vmul.f32 %v47, 0.5
    %v64 = vmul.f32 %v48, 0.5
    %v65 = vmul.f32 %v49, 0.5
    %v66 = vmul.f32 %v50, 0.5
    %v67 = vmul.f32 %v51, 0.5
    %v68 = vmul.f32 %v52, 0.5
    %v69 = vmul.f32 %v53, 0.5
    %v70 = vmul.f32 %v54, 0.5
    %v71 = vmul.f32 %v55, 0.5
    %v72 = vmul.f32 %v56, 0.5
    %v73 = vmul.f32 %v57, 0.5
    %v74 = vmul.f32 %v58, 0.5
    %v75 = vmul.f32 %v59, 0.5
    %v76 = vld [vmem:[#allocation6] sm:$0xff]
    %v77 = vld [vmem:[#allocation6 + $0x8] sm:$0xff]
    %80 = vrot.lane.b32.xlu0 %v44, 96
    %v81 = vpop.permute.xlu0 %80
    %82 = vrot.lane.b32.xlu0 %v45, 96
    %v83 = vpop.permute.xlu0 %82
    %vm84 = vcmask 64512
    %v86 = vsel %vm84, %v60, 0
    %v89 = vsel %vm84, %v61, 0
    %v91 = vsel %vm84, %v81, 0
    %v93 = vsel %vm84, %v83, 0
    %95 = vmatpush.xpose.msra.mxu0 0.0
    %96 = vmatpush.xpose.msra.mxu0 0.0
    %97 = vmatpush.xpose.msra.mxu0 0.0
    %98 = vmatpush.xpose.msra.mxu0 0.0
    %99 = vmatpush.xpose.msra.mxu0 0.0
    %100 = vmatpush.xpose.msra.mxu0 0.0
    %101 = vmatpush.xpose.msra.mxu0 0.0
    %102 = vmatpush.xpose.msra.mxu0 0.0
    %103 = vmatpush.xpose.msra.mxu0 0.0
    %104 = vmatpush.xpose.msra.mxu0 0.0
    %105 = vmatpush.xpose.msra.mxu0 0.0
    %106 = vmatpush.xpose.msra.mxu0 0.0
    %107 = vmatpush.xpose.msra.mxu0 0.0
    %108 = vmatpush.xpose.msra.mxu0 0.0
    %109 = vmatpush.xpose.msra.mxu0 %v93
    %110 = vmatpush.xpose.msra.mxu0 %v91
    %111 = vmatmul.f32.gmra.mxu0 %v86
    %v112 = vpop.f32.mrf.mxu0
    %v113 = vadd.f32 %v76, %v112
    %114 = vmatmul.f32.gmra.mxu0 %v89
    %v115 = vpop.f32.mrf.mxu0
    %v116 = vadd.f32 %v77, %v115
    %117 = vdwg.mxu0
    %120 = vrot.lane.b32.xlu0 %v46, 96
    %v121 = vpop.permute.xlu0 %120
    %122 = vrot.lane.b32.xlu0 %v47, 96
    %v123 = vpop.permute.xlu0 %122
    %v125 = vsel %vm84, %v62, 0
    %v128 = vsel %vm84, %v63, 0
    %v130 = vsel %vm84, %v121, 0
    %v132 = vsel %vm84, %v123, 0
    %134 = vmatpush.xpose.msra.mxu0 0.0
    %135 = vmatpush.xpose.msra.mxu0 0.0
    %136 = vmatpush.xpose.msra.mxu0 0.0
    %137 = vmatpush.xpose.msra.mxu0 0.0
    %138 = vmatpush.xpose.msra.mxu0 0.0
    %139 = vmatpush.xpose.msra.mxu0 0.0
    %140 = vmatpush.xpose.msra.mxu0 0.0
    %141 = vmatpush.xpose.msra.mxu0 0.0
    %142 = vmatpush.xpose.msra.mxu0 0.0
    %143 = vmatpush.xpose.msra.mxu0 0.0
    %144 = vmatpush.xpose.msra.mxu0 0.0
    %145 = vmatpush.xpose.msra.mxu0 0.0
    %146 = vmatpush.xpose.msra.mxu0 0.0
    %147 = vmatpush.xpose.msra.mxu0 0.0
    %148 = vmatpush.xpose.msra.mxu0 %v132
    %149 = vmatpush.xpose.msra.mxu0 %v130
    %150 = vmatmul.f32.gmra.mxu0 %v125
    %v151 = vpop.f32.mrf.mxu0
    %v152 = vadd.f32 %v76, %v151
    %153 = vmatmul.f32.gmra.mxu0 %v128
    %v154 = vpop.f32.mrf.mxu0
    %v155 = vadd.f32 %v77, %v154
    %156 = vdwg.mxu0
    %159 = vrot.lane.b32.xlu0 %v48, 96
    %v160 = vpop.permute.xlu0 %159
    %161 = vrot.lane.b32.xlu0 %v49, 96
    %v162 = vpop.permute.xlu0 %161
    %v164 = vsel %vm84, %v64, 0
    %v167 = vsel %vm84, %v65, 0
    %v169 = vsel %vm84, %v160, 0
    %v171 = vsel %vm84, %v162, 0
    %173 = vmatpush.xpose.msra.mxu0 0.0
    %174 = vmatpush.xpose.msra.mxu0 0.0
    %175 = vmatpush.xpose.msra.mxu0 0.0
    %176 = vmatpush.xpose.msra.mxu0 0.0
    %177 = vmatpush.xpose.msra.mxu0 0.0
    %178 = vmatpush.xpose.msra.mxu0 0.0
    %179 = vmatpush.xpose.msra.mxu0 0.0
    %180 = vmatpush.xpose.msra.mxu0 0.0
    %181 = vmatpush.xpose.msra.mxu0 0.0
    %182 = vmatpush.xpose.msra.mxu0 0.0
    %183 = vmatpush.xpose.msra.mxu0 0.0
    %184 = vmatpush.xpose.msra.mxu0 0.0
    %185 = vmatpush.xpose.msra.mxu0 0.0
    %186 = vmatpush.xpose.msra.mxu0 0.0
    %187 = vmatpush.xpose.msra.mxu0 %v171
    %188 = vmatpush.xpose.msra.mxu0 %v169
    %189 = vmatmul.f32.gmra.mxu0 %v164
    %v190 = vpop.f32.mrf.mxu0
    %v191 = vadd.f32 %v76, %v190
    %192 = vmatmul.f32.gmra.mxu0 %v167
    %v193 = vpop.f32.mrf.mxu0
    %v194 = vadd.f32 %v77, %v193
    %195 = vdwg.mxu0
    %198 = vrot.lane.b32.xlu0 %v50, 96
    %v199 = vpop.permute.xlu0 %198
    %200 = vrot.lane.b32.xlu0 %v51, 96
    %v201 = vpop.permute.xlu0 %200
    %v203 = vsel %vm84, %v66, 0
    %v206 = vsel %vm84, %v67, 0
    %v208 = vsel %vm84, %v199, 0
    %v210 = vsel %vm84, %v201, 0
    %212 = vmatpush.xpose.msra.mxu0 0.0
    %213 = vmatpush.xpose.msra.mxu0 0.0
    %214 = vmatpush.xpose.msra.mxu0 0.0
    %215 = vmatpush.xpose.msra.mxu0 0.0
    %216 = vmatpush.xpose.msra.mxu0 0.0
    %217 = vmatpush.xpose.msra.mxu0 0.0
    %218 = vmatpush.xpose.msra.mxu0 0.0
    %219 = vmatpush.xpose.msra.mxu0 0.0
    %220 = vmatpush.xpose.msra.mxu0 0.0
    %221 = vmatpush.xpose.msra.mxu0 0.0
    %222 = vmatpush.xpose.msra.mxu0 0.0
    %223 = vmatpush.xpose.msra.mxu0 0.0
    %224 = vmatpush.xpose.msra.mxu0 0.0
    %225 = vmatpush.xpose.msra.mxu0 0.0
    %226 = vmatpush.xpose.msra.mxu0 %v210
    %227 = vmatpush.xpose.msra.mxu0 %v208
    %228 = vmatmul.f32.gmra.mxu0 %v203
    %v229 = vpop.f32.mrf.mxu0
    %v230 = vadd.f32 %v76, %v229
    %231 = vmatmul.f32.gmra.mxu0 %v206
    %v232 = vpop.f32.mrf.mxu0
    %v233 = vadd.f32 %v77, %v232
    %234 = vdwg.mxu0
    %237 = vrot.lane.b32.xlu0 %v52, 96
    %v238 = vpop.permute.xlu0 %237
    %239 = vrot.lane.b32.xlu0 %v53, 96
    %v240 = vpop.permute.xlu0 %239
    %v242 = vsel %vm84, %v68, 0
    %v245 = vsel %vm84, %v69, 0
    %v247 = vsel %vm84, %v238, 0
    %v249 = vsel %vm84, %v240, 0
    %251 = vmatpush.xpose.msra.mxu0 0.0
    %252 = vmatpush.xpose.msra.mxu0 0.0
    %253 = vmatpush.xpose.msra.mxu0 0.0
    %254 = vmatpush.xpose.msra.mxu0 0.0
    %255 = vmatpush.xpose.msra.mxu0 0.0
    %256 = vmatpush.xpose.msra.mxu0 0.0
    %257 = vmatpush.xpose.msra.mxu0 0.0
    %258 = vmatpush.xpose.msra.mxu0 0.0
    %259 = vmatpush.xpose.msra.mxu0 0.0
    %260 = vmatpush.xpose.msra.mxu0 0.0
    %261 = vmatpush.xpose.msra.mxu0 0.0
    %262 = vmatpush.xpose.msra.mxu0 0.0
    %263 = vmatpush.xpose.msra.mxu0 0.0
    %264 = vmatpush.xpose.msra.mxu0 0.0
    %265 = vmatpush.xpose.msra.mxu0 %v249
    %266 = vmatpush.xpose.msra.mxu0 %v247
    %267 = vmatmul.f32.gmra.mxu0 %v242
    %v268 = vpop.f32.mrf.mxu0
    %v269 = vadd.f32 %v76, %v268
    %270 = vmatmul.f32.gmra.mxu0 %v245
    %v271 = vpop.f32.mrf.mxu0
    %v272 = vadd.f32 %v77, %v271
    %273 = vdwg.mxu0
    %276 = vrot.lane.b32.xlu0 %v54, 96
    %v277 = vpop.permute.xlu0 %276
    %278 = vrot.lane.b32.xlu0 %v55, 96
    %v279 = vpop.permute.xlu0 %278
    %v281 = vsel %vm84, %v70, 0
    %v284 = vsel %vm84, %v71, 0
    %v286 = vsel %vm84, %v277, 0
    %v288 = vsel %vm84, %v279, 0
    %290 = vmatpush.xpose.msra.mxu0 0.0
    %291 = vmatpush.xpose.msra.mxu0 0.0
    %292 = vmatpush.xpose.msra.mxu0 0.0
    %293 = vmatpush.xpose.msra.mxu0 0.0
    %294 = vmatpush.xpose.msra.mxu0 0.0
    %295 = vmatpush.xpose.msra.mxu0 0.0
    %296 = vmatpush.xpose.msra.mxu0 0.0
    %297 = vmatpush.xpose.msra.mxu0 0.0
    %298 = vmatpush.xpose.msra.mxu0 0.0
    %299 = vmatpush.xpose.msra.mxu0 0.0
    %300 = vmatpush.xpose.msra.mxu0 0.0
    %301 = vmatpush.xpose.msra.mxu0 0.0
    %302 = vmatpush.xpose.msra.mxu0 0.0
    %303 = vmatpush.xpose.msra.mxu0 0.0
    %304 = vmatpush.xpose.msra.mxu0 %v288
    %305 = vmatpush.xpose.msra.mxu0 %v286
    %306 = vmatmul.f32.gmra.mxu0 %v281
    %v307 = vpop.f32.mrf.mxu0
    %v308 = vadd.f32 %v76, %v307
    %309 = vmatmul.f32.gmra.mxu0 %v284
    %v310 = vpop.f32.mrf.mxu0
    %v311 = vadd.f32 %v77, %v310
    %312 = vdwg.mxu0
    %315 = vrot.lane.b32.xlu0 %v56, 96
    %v316 = vpop.permute.xlu0 %315
    %317 = vrot.lane.b32.xlu0 %v57, 96
    %v318 = vpop.permute.xlu0 %317
    %v320 = vsel %vm84, %v72, 0
    %v323 = vsel %vm84, %v73, 0
    %v325 = vsel %vm84, %v316, 0
    %v327 = vsel %vm84, %v318, 0
    %329 = vmatpush.xpose.msra.mxu0 0.0
    %330 = vmatpush.xpose.msra.mxu0 0.0
    %331 = vmatpush.xpose.msra.mxu0 0.0
    %332 = vmatpush.xpose.msra.mxu0 0.0
    %333 = vmatpush.xpose.msra.mxu0 0.0
    %334 = vmatpush.xpose.msra.mxu0 0.0
    %335 = vmatpush.xpose.msra.mxu0 0.0
    %336 = vmatpush.xpose.msra.mxu0 0.0
    %337 = vmatpush.xpose.msra.mxu0 0.0
    %338 = vmatpush.xpose.msra.mxu0 0.0
    %339 = vmatpush.xpose.msra.mxu0 0.0
    %340 = vmatpush.xpose.msra.mxu0 0.0
    %341 = vmatpush.xpose.msra.mxu0 0.0
    %342 = vmatpush.xpose.msra.mxu0 0.0
    %343 = vmatpush.xpose.msra.mxu0 %v327
    %344 = vmatpush.xpose.msra.mxu0 %v325
    %345 = vmatmul.f32.gmra.mxu0 %v320
    %v346 = vpop.f32.mrf.mxu0
    %v347 = vadd.f32 %v76, %v346
    %348 = vmatmul.f32.gmra.mxu0 %v323
    %v349 = vpop.f32.mrf.mxu0
    %v350 = vadd.f32 %v77, %v349
    %351 = vdwg.mxu0
    %354 = vrot.lane.b32.xlu0 %v58, 96
    %v355 = vpop.permute.xlu0 %354
    %356 = vrot.lane.b32.xlu0 %v59, 96
    %v357 = vpop.permute.xlu0 %356
    %v359 = vsel %vm84, %v74, 0
    %v362 = vsel %vm84, %v75, 0
    %v364 = vsel %vm84, %v355, 0
    %v366 = vsel %vm84, %v357, 0
    %368 = vmatpush.xpose.msra.mxu0 0.0
    %369 = vmatpush.xpose.msra.mxu0 0.0
    %370 = vmatpush.xpose.msra.mxu0 0.0
    %371 = vmatpush.xpose.msra.mxu0 0.0
    %372 = vmatpush.xpose.msra.mxu0 0.0
    %373 = vmatpush.xpose.msra.mxu0 0.0
    %374 = vmatpush.xpose.msra.mxu0 0.0
    %375 = vmatpush.xpose.msra.mxu0 0.0
    %376 = vmatpush.xpose.msra.mxu0 0.0
    %377 = vmatpush.xpose.msra.mxu0 0.0
    %378 = vmatpush.xpose.msra.mxu0 0.0
    %379 = vmatpush.xpose.msra.mxu0 0.0
    %380 = vmatpush.xpose.msra.mxu0 0.0
    %381 = vmatpush.xpose.msra.mxu0 0.0
    %382 = vmatpush.xpose.msra.mxu0 %v366
    %383 = vmatpush.xpose.msra.mxu0 %v364
    %384 = vmatmul.f32.gmra.mxu0 %v359
    %v385 = vpop.f32.mrf.mxu0
    %v386 = vadd.f32 %v76, %v385
    %387 = vmatmul.f32.gmra.mxu0 %v362
    %v388 = vpop.f32.mrf.mxu0
    %v389 = vadd.f32 %v77, %v388
    %390 = vdwg.mxu0
    %vm391 = vcmask 130048
    %v392 = vsel %vm391, %v113, -inf
    %393 = vmax.xlane.f32.xlu0 %v392
    %v394 = vpop.xlane.xlu0 %393
    %v395 = vsel %vm391, %v116, -inf
    %396 = vmax.xlane.f32.xlu0 %v395
    %v397 = vpop.xlane.xlu0 %396
    %v398 = vsel %vm391, %v152, -inf
    %399 = vmax.xlane.f32.xlu0 %v398
    %v400 = vpop.xlane.xlu0 %399
    %v401 = vsel %vm391, %v155, -inf
    %402 = vmax.xlane.f32.xlu0 %v401
    %v403 = vpop.xlane.xlu0 %402
    %v404 = vsel %vm391, %v191, -inf
    %405 = vmax.xlane.f32.xlu0 %v404
    %v406 = vpop.xlane.xlu0 %405
    %v407 = vsel %vm391, %v194, -inf
    %408 = vmax.xlane.f32.xlu0 %v407
    %v409 = vpop.xlane.xlu0 %408
    %v410 = vsel %vm391, %v230, -inf
    %411 = vmax.xlane.f32.xlu0 %v410
    %v412 = vpop.xlane.xlu0 %411
    %v413 = vsel %vm391, %v233, -inf
    %414 = vmax.xlane.f32.xlu0 %v413
    %v415 = vpop.xlane.xlu0 %414
    %v416 = vsel %vm391, %v269, -inf
    %417 = vmax.xlane.f32.xlu0 %v416
    %v418 = vpop.xlane.xlu0 %417
    %v419 = vsel %vm391, %v272, -inf
    %420 = vmax.xlane.f32.xlu0 %v419
    %v421 = vpop.xlane.xlu0 %420
    %v422 = vsel %vm391, %v308, -inf
    %423 = vmax.xlane.f32.xlu0 %v422
    %v424 = vpop.xlane.xlu0 %423
    %v425 = vsel %vm391, %v311, -inf
    %426 = vmax.xlane.f32.xlu0 %v425
    %v427 = vpop.xlane.xlu0 %426
    %v428 = vsel %vm391, %v347, -inf
    %429 = vmax.xlane.f32.xlu0 %v428
    %v430 = vpop.xlane.xlu0 %429
    %v431 = vsel %vm391, %v350, -inf
    %432 = vmax.xlane.f32.xlu0 %v431
    %v433 = vpop.xlane.xlu0 %432
    %v434 = vsel %vm391, %v386, -inf
    %435 = vmax.xlane.f32.xlu0 %v434
    %v436 = vpop.xlane.xlu0 %435
    %v437 = vsel %vm391, %v389, -inf
    %438 = vmax.xlane.f32.xlu0 %v437
    %v439 = vpop.xlane.xlu0 %438
    %v440 = vsub.f32 %v113, %v394
    %v441 = vsub.f32 %v116, %v397
    %v442 = vsub.f32 %v152, %v400
    %v443 = vsub.f32 %v155, %v403
    %v444 = vsub.f32 %v191, %v406
    %v445 = vsub.f32 %v194, %v409
    %v446 = vsub.f32 %v230, %v412
    %v447 = vsub.f32 %v233, %v415
    %v448 = vsub.f32 %v269, %v418
    %v449 = vsub.f32 %v272, %v421
    %v450 = vsub.f32 %v308, %v424
    %v451 = vsub.f32 %v311, %v427
    %v452 = vsub.f32 %v347, %v430
    %v453 = vsub.f32 %v350, %v433
    %v454 = vsub.f32 %v386, %v436
    %v455 = vsub.f32 %v389, %v439
    %v456 = vmul.f32 %v440, 1.442695
    %v457 = vpow.pop %v456
    %v458 = vmul.f32 %v441, 1.442695
    %v459 = vpow.pop %v458
    %v460 = vmul.f32 %v442, 1.442695
    %v461 = vpow.pop %v460
    %v462 = vmul.f32 %v443, 1.442695
    %v463 = vpow.pop %v462
    %v464 = vmul.f32 %v444, 1.442695
    %v465 = vpow.pop %v464
    %v466 = vmul.f32 %v445, 1.442695
    %v467 = vpow.pop %v466
    %v468 = vmul.f32 %v446, 1.442695
    %v469 = vpow.pop %v468
    %v470 = vmul.f32 %v447, 1.442695
    %v471 = vpow.pop %v470
    %v472 = vmul.f32 %v448, 1.442695
    %v473 = vpow.pop %v472
    %v474 = vmul.f32 %v449, 1.442695
    %v475 = vpow.pop %v474
    %v476 = vmul.f32 %v450, 1.442695
    %v477 = vpow.pop %v476
    %v478 = vmul.f32 %v451, 1.442695
    %v479 = vpow.pop %v478
    %v480 = vmul.f32 %v452, 1.442695
    %v481 = vpow.pop %v480
    %v482 = vmul.f32 %v453, 1.442695
    %v483 = vpow.pop %v482
    %v484 = vmul.f32 %v454, 1.442695
    %v485 = vpow.pop %v484
    %v486 = vmul.f32 %v455, 1.442695
    %v487 = vpow.pop %v486
    %v488 = vsel %vm391, %v457, 0.0
    %489 = vadd.xlane.f32.xlu0 %v488
    %v490 = vpop.xlane.xlu0 %489
    %v491 = vsel %vm391, %v459, 0.0
    %492 = vadd.xlane.f32.xlu0 %v491
    %v493 = vpop.xlane.xlu0 %492
    %v494 = vsel %vm391, %v461, 0.0
    %495 = vadd.xlane.f32.xlu0 %v494
    %v496 = vpop.xlane.xlu0 %495
    %v497 = vsel %vm391, %v463, 0.0
    %498 = vadd.xlane.f32.xlu0 %v497
    %v499 = vpop.xlane.xlu0 %498
    %v500 = vsel %vm391, %v465, 0.0
    %501 = vadd.xlane.f32.xlu0 %v500
    %v502 = vpop.xlane.xlu0 %501
    %v503 = vsel %vm391, %v467, 0.0
    %504 = vadd.xlane.f32.xlu0 %v503
    %v505 = vpop.xlane.xlu0 %504
    %v506 = vsel %vm391, %v469, 0.0
    %507 = vadd.xlane.f32.xlu0 %v506
    %v508 = vpop.xlane.xlu0 %507
    %v509 = vsel %vm391, %v471, 0.0
    %510 = vadd.xlane.f32.xlu0 %v509
    %v511 = vpop.xlane.xlu0 %510
    %v512 = vsel %vm391, %v473, 0.0
    %513 = vadd.xlane.f32.xlu0 %v512
    %v514 = vpop.xlane.xlu0 %513
    %v515 = vsel %vm391, %v475, 0.0
    %516 = vadd.xlane.f32.xlu0 %v515
    %v517 = vpop.xlane.xlu0 %516
    %v518 = vsel %vm391, %v477, 0.0
    %519 = vadd.xlane.f32.xlu0 %v518
    %v520 = vpop.xlane.xlu0 %519
    %v521 = vsel %vm391, %v479, 0.0
    %522 = vadd.xlane.f32.xlu0 %v521
    %v523 = vpop.xlane.xlu0 %522
    %v524 = vsel %vm391, %v481, 0.0
    %525 = vadd.xlane.f32.xlu0 %v524
    %v526 = vpop.xlane.xlu0 %525
    %v527 = vsel %vm391, %v483, 0.0
    %528 = vadd.xlane.f32.xlu0 %v527
    %v529 = vpop.xlane.xlu0 %528
    %v530 = vsel %vm391, %v485, 0.0
    %531 = vadd.xlane.f32.xlu0 %v530
    %v532 = vpop.xlane.xlu0 %531
    %v533 = vsel %vm391, %v487, 0.0
    %534 = vadd.xlane.f32.xlu0 %v533
    %v535 = vpop.xlane.xlu0 %534
    %v536 = vrcp.pop %v490
    %v537 = vmul.f32 %v490, %v536
    %v538 = vsub.f32 1.0, %v537
    %v539 = vmul.f32 %v536, %v538
    %v540 = vadd.f32 %v536, %v539
    %vm541 = vweird.f32 %v490
    %vm542 = vweird.f32 %v536
    %vm543 = vmor %vm541, %vm542
    %v544 = vsel %vm543, %v536, %v540
    %v545 = vand.u32 2147483647, %v490
    %vm546 = vcmp.eq.f32.partialorder %v545, 8.507059e+37
    %v547 = vand.u32 %v490, 2147483648
    %v548 = vor.u32 1.1754944e-38, %v547
    %v549 = vsel %vm546, %v548, %v544
    %v550 = vmul.f32 %v457, %v549
    %v551 = vrcp.pop %v493
    %v552 = vmul.f32 %v493, %v551
    %v553 = vsub.f32 1.0, %v552
    %v554 = vmul.f32 %v551, %v553
    %v555 = vadd.f32 %v551, %v554
    %vm556 = vweird.f32 %v493
    %vm557 = vweird.f32 %v551
    %vm558 = vmor %vm556, %vm557
    %v559 = vsel %vm558, %v551, %v555
    %v560 = vand.u32 2147483647, %v493
    %vm561 = vcmp.eq.f32.partialorder %v560, 8.507059e+37
    %v562 = vand.u32 %v493, 2147483648
    %v563 = vor.u32 1.1754944e-38, %v562
    %v564 = vsel %vm561, %v563, %v559
    %v565 = vmul.f32 %v459, %v564
    %v566 = vrcp.pop %v496
    %v567 = vmul.f32 %v496, %v566
    %v568 = vsub.f32 1.0, %v567
    %v569 = vmul.f32 %v566, %v568
    %v570 = vadd.f32 %v566, %v569
    %vm571 = vweird.f32 %v496
    %vm572 = vweird.f32 %v566
    %vm573 = vmor %vm571, %vm572
    %v574 = vsel %vm573, %v566, %v570
    %v575 = vand.u32 2147483647, %v496
    %vm576 = vcmp.eq.f32.partialorder %v575, 8.507059e+37
    %v577 = vand.u32 %v496, 2147483648
    %v578 = vor.u32 1.1754944e-38, %v577
    %v579 = vsel %vm576, %v578, %v574
    %v580 = vmul.f32 %v461, %v579
    %v581 = vrcp.pop %v499
    %v582 = vmul.f32 %v499, %v581
    %v583 = vsub.f32 1.0, %v582
    %v584 = vmul.f32 %v581, %v583
    %v585 = vadd.f32 %v581, %v584
    %vm586 = vweird.f32 %v499
    %vm587 = vweird.f32 %v581
    %vm588 = vmor %vm586, %vm587
    %v589 = vsel %vm588, %v581, %v585
    %v590 = vand.u32 2147483647, %v499
    %vm591 = vcmp.eq.f32.partialorder %v590, 8.507059e+37
    %v592 = vand.u32 %v499, 2147483648
    %v593 = vor.u32 1.1754944e-38, %v592
    %v594 = vsel %vm591, %v593, %v589
    %v595 = vmul.f32 %v463, %v594
    %v596 = vrcp.pop %v502
    %v597 = vmul.f32 %v502, %v596
    %v598 = vsub.f32 1.0, %v597
    %v599 = vmul.f32 %v596, %v598
    %v600 = vadd.f32 %v596, %v599
    %vm601 = vweird.f32 %v502
    %vm602 = vweird.f32 %v596
    %vm603 = vmor %vm601, %vm602
    %v604 = vsel %vm603, %v596, %v600
    %v605 = vand.u32 2147483647, %v502
    %vm606 = vcmp.eq.f32.partialorder %v605, 8.507059e+37
    %v607 = vand.u32 %v502, 2147483648
    %v608 = vor.u32 1.1754944e-38, %v607
    %v609 = vsel %vm606, %v608, %v604
    %v610 = vmul.f32 %v465, %v609
    %v611 = vrcp.pop %v505
    %v612 = vmul.f32 %v505, %v611
    %v613 = vsub.f32 1.0, %v612
    %v614 = vmul.f32 %v611, %v613
    %v615 = vadd.f32 %v611, %v614
    %vm616 = vweird.f32 %v505
    %vm617 = vweird.f32 %v611
    %vm618 = vmor %vm616, %vm617
    %v619 = vsel %vm618, %v611, %v615
    %v620 = vand.u32 2147483647, %v505
    %vm621 = vcmp.eq.f32.partialorder %v620, 8.507059e+37
    %v622 = vand.u32 %v505, 2147483648
    %v623 = vor.u32 1.1754944e-38, %v622
    %v624 = vsel %vm621, %v623, %v619
    %v625 = vmul.f32 %v467, %v624
    %v626 = vrcp.pop %v508
    %v627 = vmul.f32 %v508, %v626
    %v628 = vsub.f32 1.0, %v627
    %v629 = vmul.f32 %v626, %v628
    %v630 = vadd.f32 %v626, %v629
    %vm631 = vweird.f32 %v508
    %vm632 = vweird.f32 %v626
    %vm633 = vmor %vm631, %vm632
    %v634 = vsel %vm633, %v626, %v630
    %v635 = vand.u32 2147483647, %v508
    %vm636 = vcmp.eq.f32.partialorder %v635, 8.507059e+37
    %v637 = vand.u32 %v508, 2147483648
    %v638 = vor.u32 1.1754944e-38, %v637
    %v639 = vsel %vm636, %v638, %v634
    %v640 = vmul.f32 %v469, %v639
    %v641 = vrcp.pop %v511
    %v642 = vmul.f32 %v511, %v641
    %v643 = vsub.f32 1.0, %v642
    %v644 = vmul.f32 %v641, %v643
    %v645 = vadd.f32 %v641, %v644
    %vm646 = vweird.f32 %v511
    %vm647 = vweird.f32 %v641
    %vm648 = vmor %vm646, %vm647
    %v649 = vsel %vm648, %v641, %v645
    %v650 = vand.u32 2147483647, %v511
    %vm651 = vcmp.eq.f32.partialorder %v650, 8.507059e+37
    %v652 = vand.u32 %v511, 2147483648
    %v653 = vor.u32 1.1754944e-38, %v652
    %v654 = vsel %vm651, %v653, %v649
    %v655 = vmul.f32 %v471, %v654
    %v656 = vrcp.pop %v514
    %v657 = vmul.f32 %v514, %v656
    %v658 = vsub.f32 1.0, %v657
    %v659 = vmul.f32 %v656, %v658
    %v660 = vadd.f32 %v656, %v659
    %vm661 = vweird.f32 %v514
    %vm662 = vweird.f32 %v656
    %vm663 = vmor %vm661, %vm662
    %v664 = vsel %vm663, %v656, %v660
    %v665 = vand.u32 2147483647, %v514
    %vm666 = vcmp.eq.f32.partialorder %v665, 8.507059e+37
    %v667 = vand.u32 %v514, 2147483648
    %v668 = vor.u32 1.1754944e-38, %v667
    %v669 = vsel %vm666, %v668, %v664
    %v670 = vmul.f32 %v473, %v669
    %v671 = vrcp.pop %v517
    %v672 = vmul.f32 %v517, %v671
    %v673 = vsub.f32 1.0, %v672
    %v674 = vmul.f32 %v671, %v673
    %v675 = vadd.f32 %v671, %v674
    %vm676 = vweird.f32 %v517
    %vm677 = vweird.f32 %v671
    %vm678 = vmor %vm676, %vm677
    %v679 = vsel %vm678, %v671, %v675
    %v680 = vand.u32 2147483647, %v517
    %vm681 = vcmp.eq.f32.partialorder %v680, 8.507059e+37
    %v682 = vand.u32 %v517, 2147483648
    %v683 = vor.u32 1.1754944e-38, %v682
    %v684 = vsel %vm681, %v683, %v679
    %v685 = vmul.f32 %v475, %v684
    %v686 = vrcp.pop %v520
    %v687 = vmul.f32 %v520, %v686
    %v688 = vsub.f32 1.0, %v687
    %v689 = vmul.f32 %v686, %v688
    %v690 = vadd.f32 %v686, %v689
    %vm691 = vweird.f32 %v520
    %vm692 = vweird.f32 %v686
    %vm693 = vmor %vm691, %vm692
    %v694 = vsel %vm693, %v686, %v690
    %v695 = vand.u32 2147483647, %v520
    %vm696 = vcmp.eq.f32.partialorder %v695, 8.507059e+37
    %v697 = vand.u32 %v520, 2147483648
    %v698 = vor.u32 1.1754944e-38, %v697
    %v699 = vsel %vm696, %v698, %v694
    %v700 = vmul.f32 %v477, %v699
    %v701 = vrcp.pop %v523
    %v702 = vmul.f32 %v523, %v701
    %v703 = vsub.f32 1.0, %v702
    %v704 = vmul.f32 %v701, %v703
    %v705 = vadd.f32 %v701, %v704
    %vm706 = vweird.f32 %v523
    %vm707 = vweird.f32 %v701
    %vm708 = vmor %vm706, %vm707
    %v709 = vsel %vm708, %v701, %v705
    %v710 = vand.u32 2147483647, %v523
    %vm711 = vcmp.eq.f32.partialorder %v710, 8.507059e+37
    %v712 = vand.u32 %v523, 2147483648
    %v713 = vor.u32 1.1754944e-38, %v712
    %v714 = vsel %vm711, %v713, %v709
    %v715 = vmul.f32 %v479, %v714
    %v716 = vrcp.pop %v526
    %v717 = vmul.f32 %v526, %v716
    %v718 = vsub.f32 1.0, %v717
    %v719 = vmul.f32 %v716, %v718
    %v720 = vadd.f32 %v716, %v719
    %vm721 = vweird.f32 %v526
    %vm722 = vweird.f32 %v716
    %vm723 = vmor %vm721, %vm722
    %v724 = vsel %vm723, %v716, %v720
    %v725 = vand.u32 2147483647, %v526
    %vm726 = vcmp.eq.f32.partialorder %v725, 8.507059e+37
    %v727 = vand.u32 %v526, 2147483648
    %v728 = vor.u32 1.1754944e-38, %v727
    %v729 = vsel %vm726, %v728, %v724
    %v730 = vmul.f32 %v481, %v729
    %v731 = vrcp.pop %v529
    %v732 = vmul.f32 %v529, %v731
    %v733 = vsub.f32 1.0, %v732
    %v734 = vmul.f32 %v731, %v733
    %v735 = vadd.f32 %v731, %v734
    %vm736 = vweird.f32 %v529
    %vm737 = vweird.f32 %v731
    %vm738 = vmor %vm736, %vm737
    %v739 = vsel %vm738, %v731, %v735
    %v740 = vand.u32 2147483647, %v529
    %vm741 = vcmp.eq.f32.partialorder %v740, 8.507059e+37
    %v742 = vand.u32 %v529, 2147483648
    %v743 = vor.u32 1.1754944e-38, %v742
    %v744 = vsel %vm741, %v743, %v739
    %v745 = vmul.f32 %v483, %v744
    %v746 = vrcp.pop %v532
    %v747 = vmul.f32 %v532, %v746
    %v748 = vsub.f32 1.0, %v747
    %v749 = vmul.f32 %v746, %v748
    %v750 = vadd.f32 %v746, %v749
    %vm751 = vweird.f32 %v532
    %vm752 = vweird.f32 %v746
    %vm753 = vmor %vm751, %vm752
    %v754 = vsel %vm753, %v746, %v750
    %v755 = vand.u32 2147483647, %v532
    %vm756 = vcmp.eq.f32.partialorder %v755, 8.507059e+37
    %v757 = vand.u32 %v532, 2147483648
    %v758 = vor.u32 1.1754944e-38, %v757
    %v759 = vsel %vm756, %v758, %v754
    %v760 = vmul.f32 %v485, %v759
    %v761 = vrcp.pop %v535
    %v762 = vmul.f32 %v535, %v761
    %v763 = vsub.f32 1.0, %v762
    %v764 = vmul.f32 %v761, %v763
    %v765 = vadd.f32 %v761, %v764
    %vm766 = vweird.f32 %v535
    %vm767 = vweird.f32 %v761
    %vm768 = vmor %vm766, %vm767
    %v769 = vsel %vm768, %v761, %v765
    %v770 = vand.u32 2147483647, %v535
    %vm771 = vcmp.eq.f32.partialorder %v770, 8.507059e+37
    %v772 = vand.u32 %v535, 2147483648
    %v773 = vor.u32 1.1754944e-38, %v772
    %v774 = vsel %vm771, %v773, %v769
    %v775 = vmul.f32 %v487, %v774
    %776 = vrot.lane.b32.xlu0 %v44, 64
    %v777 = vpop.permute.xlu0 %776
    %778 = vrot.lane.b32.xlu0 %v45, 64
    %v779 = vpop.permute.xlu0 %778
    %v783 = vsel %vm391, %v550, 0
    %v786 = vsel %vm391, %v565, 0
    %788 = vmatpush.msra.mxu0 0.0
    %789 = vmatpush.msra.mxu0 0.0
    %790 = vmatpush.msra.mxu0 0.0
    %791 = vmatpush.msra.mxu0 0.0
    %792 = vmatpush.msra.mxu0 0.0
    %793 = vmatpush.msra.mxu0 0.0
    %794 = vmatpush.msra.mxu0 0.0
    %795 = vmatpush.msra.mxu0 0.0
    %796 = vmatpush.msra.mxu0 0.0
    %797 = vmatpush.msra.mxu0 0.0
    %798 = vmatpush.msra.mxu0 0.0
    %799 = vmatpush.msra.mxu0 0.0
    %800 = vmatpush.msra.mxu0 0.0
    %801 = vmatpush.msra.mxu0 0.0
    %802 = vmatpush.msra.mxu0 %v779
    %803 = vmatpush.msra.mxu0 %v777
    %804 = vmatmul.f32.gmra.mxu0 %v783
    %v805 = vpop.f32.mrf.mxu0
    %v806 = vadd.f32 0.0, %v805
    %807 = vmatmul.f32.gmra.mxu0 %v786
    %v808 = vpop.f32.mrf.mxu0
    %v809 = vadd.f32 0.0, %v808
    %810 = vdwg.mxu0
    %811 = vrot.lane.b32.xlu0 %v46, 64
    %v812 = vpop.permute.xlu0 %811
    %813 = vrot.lane.b32.xlu0 %v47, 64
    %v814 = vpop.permute.xlu0 %813
    %v818 = vsel %vm391, %v580, 0
    %v821 = vsel %vm391, %v595, 0
    %823 = vmatpush.msra.mxu0 0.0
    %824 = vmatpush.msra.mxu0 0.0
    %825 = vmatpush.msra.mxu0 0.0
    %826 = vmatpush.msra.mxu0 0.0
    %827 = vmatpush.msra.mxu0 0.0
    %828 = vmatpush.msra.mxu0 0.0
    %829 = vmatpush.msra.mxu0 0.0
    %830 = vmatpush.msra.mxu0 0.0
    %831 = vmatpush.msra.mxu0 0.0
    %832 = vmatpush.msra.mxu0 0.0
    %833 = vmatpush.msra.mxu0 0.0
    %834 = vmatpush.msra.mxu0 0.0
    %835 = vmatpush.msra.mxu0 0.0
    %836 = vmatpush.msra.mxu0 0.0
    %837 = vmatpush.msra.mxu0 %v814
    %838 = vmatpush.msra.mxu0 %v812
    %839 = vmatmul.f32.gmra.mxu0 %v818
    %v840 = vpop.f32.mrf.mxu0
    %v841 = vadd.f32 0.0, %v840
    %842 = vmatmul.f32.gmra.mxu0 %v821
    %v843 = vpop.f32.mrf.mxu0
    %v844 = vadd.f32 0.0, %v843
    %845 = vdwg.mxu0
    %846 = vrot.lane.b32.xlu0 %v48, 64
    %v847 = vpop.permute.xlu0 %846
    %848 = vrot.lane.b32.xlu0 %v49, 64
    %v849 = vpop.permute.xlu0 %848
    %v853 = vsel %vm391, %v610, 0
    %v856 = vsel %vm391, %v625, 0
    %858 = vmatpush.msra.mxu0 0.0
    %859 = vmatpush.msra.mxu0 0.0
    %860 = vmatpush.msra.mxu0 0.0
    %861 = vmatpush.msra.mxu0 0.0
    %862 = vmatpush.msra.mxu0 0.0
    %863 = vmatpush.msra.mxu0 0.0
    %864 = vmatpush.msra.mxu0 0.0
    %865 = vmatpush.msra.mxu0 0.0
    %866 = vmatpush.msra.mxu0 0.0
    %867 = vmatpush.msra.mxu0 0.0
    %868 = vmatpush.msra.mxu0 0.0
    %869 = vmatpush.msra.mxu0 0.0
    %870 = vmatpush.msra.mxu0 0.0
    %871 = vmatpush.msra.mxu0 0.0
    %872 = vmatpush.msra.mxu0 %v849
    %873 = vmatpush.msra.mxu0 %v847
    %874 = vmatmul.f32.gmra.mxu0 %v853
    %v875 = vpop.f32.mrf.mxu0
    %v876 = vadd.f32 0.0, %v875
    %877 = vmatmul.f32.gmra.mxu0 %v856
    %v878 = vpop.f32.mrf.mxu0
    %v879 = vadd.f32 0.0, %v878
    %880 = vdwg.mxu0
    %881 = vrot.lane.b32.xlu0 %v50, 64
    %v882 = vpop.permute.xlu0 %881
    %883 = vrot.lane.b32.xlu0 %v51, 64
    %v884 = vpop.permute.xlu0 %883
    %v888 = vsel %vm391, %v640, 0
    %v891 = vsel %vm391, %v655, 0
    %893 = vmatpush.msra.mxu0 0.0
    %894 = vmatpush.msra.mxu0 0.0
    %895 = vmatpush.msra.mxu0 0.0
    %896 = vmatpush.msra.mxu0 0.0
    %897 = vmatpush.msra.mxu0 0.0
    %898 = vmatpush.msra.mxu0 0.0
    %899 = vmatpush.msra.mxu0 0.0
    %900 = vmatpush.msra.mxu0 0.0
    %901 = vmatpush.msra.mxu0 0.0
    %902 = vmatpush.msra.mxu0 0.0
    %903 = vmatpush.msra.mxu0 0.0
    %904 = vmatpush.msra.mxu0 0.0
    %905 = vmatpush.msra.mxu0 0.0
    %906 = vmatpush.msra.mxu0 0.0
    %907 = vmatpush.msra.mxu0 %v884
    %908 = vmatpush.msra.mxu0 %v882
    %909 = vmatmul.f32.gmra.mxu0 %v888
    %v910 = vpop.f32.mrf.mxu0
    %v911 = vadd.f32 0.0, %v910
    %912 = vmatmul.f32.gmra.mxu0 %v891
    %v913 = vpop.f32.mrf.mxu0
    %v914 = vadd.f32 0.0, %v913
    %915 = vdwg.mxu0
    %916 = vrot.lane.b32.xlu0 %v52, 64
    %v917 = vpop.permute.xlu0 %916
    %918 = vrot.lane.b32.xlu0 %v53, 64
    %v919 = vpop.permute.xlu0 %918
    %v923 = vsel %vm391, %v670, 0
    %v926 = vsel %vm391, %v685, 0
    %928 = vmatpush.msra.mxu0 0.0
    %929 = vmatpush.msra.mxu0 0.0
    %930 = vmatpush.msra.mxu0 0.0
    %931 = vmatpush.msra.mxu0 0.0
    %932 = vmatpush.msra.mxu0 0.0
    %933 = vmatpush.msra.mxu0 0.0
    %934 = vmatpush.msra.mxu0 0.0
    %935 = vmatpush.msra.mxu0 0.0
    %936 = vmatpush.msra.mxu0 0.0
    %937 = vmatpush.msra.mxu0 0.0
    %938 = vmatpush.msra.mxu0 0.0
    %939 = vmatpush.msra.mxu0 0.0
    %940 = vmatpush.msra.mxu0 0.0
    %941 = vmatpush.msra.mxu0 0.0
    %942 = vmatpush.msra.mxu0 %v919
    %943 = vmatpush.msra.mxu0 %v917
    %944 = vmatmul.f32.gmra.mxu0 %v923
    %v945 = vpop.f32.mrf.mxu0
    %v946 = vadd.f32 0.0, %v945
    %947 = vmatmul.f32.gmra.mxu0 %v926
    %v948 = vpop.f32.mrf.mxu0
    %v949 = vadd.f32 0.0, %v948
    %950 = vdwg.mxu0
    %951 = vrot.lane.b32.xlu0 %v54, 64
    %v952 = vpop.permute.xlu0 %951
    %953 = vrot.lane.b32.xlu0 %v55, 64
    %v954 = vpop.permute.xlu0 %953
    %v958 = vsel %vm391, %v700, 0
    %v961 = vsel %vm391, %v715, 0
    %963 = vmatpush.msra.mxu0 0.0
    %964 = vmatpush.msra.mxu0 0.0
    %965 = vmatpush.msra.mxu0 0.0
    %966 = vmatpush.msra.mxu0 0.0
    %967 = vmatpush.msra.mxu0 0.0
    %968 = vmatpush.msra.mxu0 0.0
    %969 = vmatpush.msra.mxu0 0.0
    %970 = vmatpush.msra.mxu0 0.0
    %971 = vmatpush.msra.mxu0 0.0
    %972 = vmatpush.msra.mxu0 0.0
    %973 = vmatpush.msra.mxu0 0.0
    %974 = vmatpush.msra.mxu0 0.0
    %975 = vmatpush.msra.mxu0 0.0
    %976 = vmatpush.msra.mxu0 0.0
    %977 = vmatpush.msra.mxu0 %v954
    %978 = vmatpush.msra.mxu0 %v952
    %979 = vmatmul.f32.gmra.mxu0 %v958
    %v980 = vpop.f32.mrf.mxu0
    %v981 = vadd.f32 0.0, %v980
    %982 = vmatmul.f32.gmra.mxu0 %v961
    %v983 = vpop.f32.mrf.mxu0
    %v984 = vadd.f32 0.0, %v983
    %985 = vdwg.mxu0
    %986 = vrot.lane.b32.xlu0 %v56, 64
    %v987 = vpop.permute.xlu0 %986
    %988 = vrot.lane.b32.xlu0 %v57, 64
    %v989 = vpop.permute.xlu0 %988
    %v993 = vsel %vm391, %v730, 0
    %v996 = vsel %vm391, %v745, 0
    %998 = vmatpush.msra.mxu0 0.0
    %999 = vmatpush.msra.mxu0 0.0
    %1000 = vmatpush.msra.mxu0 0.0
    %1001 = vmatpush.msra.mxu0 0.0
    %1002 = vmatpush.msra.mxu0 0.0
    %1003 = vmatpush.msra.mxu0 0.0
    %1004 = vmatpush.msra.mxu0 0.0
    %1005 = vmatpush.msra.mxu0 0.0
    %1006 = vmatpush.msra.mxu0 0.0
    %1007 = vmatpush.msra.mxu0 0.0
    %1008 = vmatpush.msra.mxu0 0.0
    %1009 = vmatpush.msra.mxu0 0.0
    %1010 = vmatpush.msra.mxu0 0.0
    %1011 = vmatpush.msra.mxu0 0.0
    %1012 = vmatpush.msra.mxu0 %v989
    %1013 = vmatpush.msra.mxu0 %v987
    %1014 = vmatmul.f32.gmra.mxu0 %v993
    %v1015 = vpop.f32.mrf.mxu0
    %v1016 = vadd.f32 0.0, %v1015
    %1017 = vmatmul.f32.gmra.mxu0 %v996
    %v1018 = vpop.f32.mrf.mxu0
    %v1019 = vadd.f32 0.0, %v1018
    %1020 = vdwg.mxu0
    %1021 = vrot.lane.b32.xlu0 %v58, 64
    %v1022 = vpop.permute.xlu0 %1021
    %1023 = vrot.lane.b32.xlu0 %v59, 64
    %v1024 = vpop.permute.xlu0 %1023
    %v1028 = vsel %vm391, %v760, 0
    %v1031 = vsel %vm391, %v775, 0
    %1033 = vmatpush.msra.mxu0 0.0
    %1034 = vmatpush.msra.mxu0 0.0
    %1035 = vmatpush.msra.mxu0 0.0
    %1036 = vmatpush.msra.mxu0 0.0
    %1037 = vmatpush.msra.mxu0 0.0
    %1038 = vmatpush.msra.mxu0 0.0
    %1039 = vmatpush.msra.mxu0 0.0
    %1040 = vmatpush.msra.mxu0 0.0
    %1041 = vmatpush.msra.mxu0 0.0
    %1042 = vmatpush.msra.mxu0 0.0
    %1043 = vmatpush.msra.mxu0 0.0
    %1044 = vmatpush.msra.mxu0 0.0
    %1045 = vmatpush.msra.mxu0 0.0
    %1046 = vmatpush.msra.mxu0 0.0
    %1047 = vmatpush.msra.mxu0 %v1024
    %1048 = vmatpush.msra.mxu0 %v1022
    %1049 = vmatmul.f32.gmra.mxu0 %v1028
    %v1050 = vpop.f32.mrf.mxu0
    %v1051 = vadd.f32 0.0, %v1050
    %1052 = vmatmul.f32.gmra.mxu0 %v1031
    %v1053 = vpop.f32.mrf.mxu0
    %v1054 = vadd.f32 0.0, %v1053
    %1055 = vdwg.mxu0
    %1056 = vst.msk [vmem:[#allocation2] sm:$0xff] %vm84, %v806
    %1057 = vst.msk [vmem:[#allocation2 + $0x8] sm:$0xff] %vm84, %v809
    %1058 = vst.msk [vmem:[#allocation2 + $0x10] sm:$0xff] %vm84, %v841
    %1059 = vst.msk [vmem:[#allocation2 + $0x18] sm:$0xff] %vm84, %v844
    %1060 = vst.msk [vmem:[#allocation2 + $0x20] sm:$0xff] %vm84, %v876
    %1061 = vst.msk [vmem:[#allocation2 + $0x28] sm:$0xff] %vm84, %v879
    %1062 = vst.msk [vmem:[#allocation2 + $0x30] sm:$0xff] %vm84, %v911
    %1063 = vst.msk [vmem:[#allocation2 + $0x38] sm:$0xff] %vm84, %v914
    %1064 = vst.msk [vmem:[#allocation2 + $0x40] sm:$0xff] %vm84, %v946
    %1065 = vst.msk [vmem:[#allocation2 + $0x48] sm:$0xff] %vm84, %v949
    %1066 = vst.msk [vmem:[#allocation2 + $0x50] sm:$0xff] %vm84, %v981
    %1067 = vst.msk [vmem:[#allocation2 + $0x58] sm:$0xff] %vm84, %v984
    %1068 = vst.msk [vmem:[#allocation2 + $0x60] sm:$0xff] %vm84, %v1016
    %1069 = vst.msk [vmem:[#allocation2 + $0x68] sm:$0xff] %vm84, %v1019
    %1070 = vst.msk [vmem:[#allocation2 + $0x70] sm:$0xff] %vm84, %v1051
    %1071 = vst.msk [vmem:[#allocation2 + $0x78] sm:$0xff] %vm84, %v1054
    %v1072 = vld [vmem:[#allocation3] sm:$0xff]
    %v1073 = vld [vmem:[#allocation3 + $0x8] sm:$0xff]
    %v1074 = vld [vmem:[#allocation3 + $0x10] sm:$0xff]
    %v1075 = vld [vmem:[#allocation3 + $0x18] sm:$0xff]
    %v1076 = vld [vmem:[#allocation3 + $0x20] sm:$0xff]
    %v1077 = vld [vmem:[#allocation3 + $0x28] sm:$0xff]
    %v1078 = vld [vmem:[#allocation3 + $0x30] sm:$0xff]
    %v1079 = vld [vmem:[#allocation3 + $0x38] sm:$0xff]
    %v1080 = vld [vmem:[#allocation3 + $0x40] sm:$0xff]
    %v1081 = vld [vmem:[#allocation3 + $0x48] sm:$0xff]
    %v1082 = vld [vmem:[#allocation3 + $0x50] sm:$0xff]
    %v1083 = vld [vmem:[#allocation3 + $0x58] sm:$0xff]
    %v1084 = vld [vmem:[#allocation3 + $0x60] sm:$0xff]
    %v1085 = vld [vmem:[#allocation3 + $0x68] sm:$0xff]
    %v1086 = vld [vmem:[#allocation3 + $0x70] sm:$0xff]
    %v1087 = vld [vmem:[#allocation3 + $0x78] sm:$0xff]
    %v1088 = vmul.f32 %v1072, 0.5
    %v1089 = vmul.f32 %v1073, 0.5
    %v1090 = vmul.f32 %v1074, 0.5
    %v1091 = vmul.f32 %v1075, 0.5
    %v1092 = vmul.f32 %v1076, 0.5
    %v1093 = vmul.f32 %v1077, 0.5
    %v1094 = vmul.f32 %v1078, 0.5
    %v1095 = vmul.f32 %v1079, 0.5
    %v1096 = vmul.f32 %v1080, 0.5
    %v1097 = vmul.f32 %v1081, 0.5
    %v1098 = vmul.f32 %v1082, 0.5
    %v1099 = vmul.f32 %v1083, 0.5
    %v1100 = vmul.f32 %v1084, 0.5
    %v1101 = vmul.f32 %v1085, 0.5
    %v1102 = vmul.f32 %v1086, 0.5
    %v1103 = vmul.f32 %v1087, 0.5
    %s1104 = scalar_lea.vmem [#allocation6], 16
    %v1105 = vld [vmem:[%s1104] sm:$0xff]
    %v1106 = vld [vmem:[%s1104 + $0x8] sm:$0xff]
    %1109 = vrot.lane.b32.xlu0 %v1088, 120
    %v1110 = vpop.permute.xlu0 %1109
    %1111 = vrot.lane.b32.xlu0 %v1089, 120
    %v1112 = vpop.permute.xlu0 %1111
    %1115 = vrot.lane.b32.xlu0 %v1072, 88
    %v1116 = vpop.permute.xlu0 %1115
    %1117 = vrot.lane.b32.xlu0 %v1073, 88
    %v1118 = vpop.permute.xlu0 %1117
    %v1119 = vsel %vm84, %v1110, 0
    %v1121 = vsel %vm84, %v1112, 0
    %v1123 = vsel %vm84, %v1116, 0
    %v1125 = vsel %vm84, %v1118, 0
    %1127 = vmatpush.xpose.msra.mxu0 0.0
    %1128 = vmatpush.xpose.msra.mxu0 0.0
    %1129 = vmatpush.xpose.msra.mxu0 0.0
    %1130 = vmatpush.xpose.msra.mxu0 0.0
    %1131 = vmatpush.xpose.msra.mxu0 0.0
    %1132 = vmatpush.xpose.msra.mxu0 0.0
    %1133 = vmatpush.xpose.msra.mxu0 0.0
    %1134 = vmatpush.xpose.msra.mxu0 0.0
    %1135 = vmatpush.xpose.msra.mxu0 0.0
    %1136 = vmatpush.xpose.msra.mxu0 0.0
    %1137 = vmatpush.xpose.msra.mxu0 0.0
    %1138 = vmatpush.xpose.msra.mxu0 0.0
    %1139 = vmatpush.xpose.msra.mxu0 0.0
    %1140 = vmatpush.xpose.msra.mxu0 0.0
    %1141 = vmatpush.xpose.msra.mxu0 %v1125
    %1142 = vmatpush.xpose.msra.mxu0 %v1123
    %1143 = vmatmul.f32.gmra.mxu0 %v1119
    %v1144 = vpop.f32.mrf.mxu0
    %v1145 = vadd.f32 %v1105, %v1144
    %1146 = vmatmul.f32.gmra.mxu0 %v1121
    %v1147 = vpop.f32.mrf.mxu0
    %v1148 = vadd.f32 %v1106, %v1147
    %1149 = vdwg.mxu0
    %1152 = vrot.lane.b32.xlu0 %v1090, 120
    %v1153 = vpop.permute.xlu0 %1152
    %1154 = vrot.lane.b32.xlu0 %v1091, 120
    %v1155 = vpop.permute.xlu0 %1154
    %1158 = vrot.lane.b32.xlu0 %v1074, 88
    %v1159 = vpop.permute.xlu0 %1158
    %1160 = vrot.lane.b32.xlu0 %v1075, 88
    %v1161 = vpop.permute.xlu0 %1160
    %v1162 = vsel %vm84, %v1153, 0
    %v1164 = vsel %vm84, %v1155, 0
    %v1166 = vsel %vm84, %v1159, 0
    %v1168 = vsel %vm84, %v1161, 0
    %1170 = vmatpush.xpose.msra.mxu0 0.0
    %1171 = vmatpush.xpose.msra.mxu0 0.0
    %1172 = vmatpush.xpose.msra.mxu0 0.0
    %1173 = vmatpush.xpose.msra.mxu0 0.0
    %1174 = vmatpush.xpose.msra.mxu0 0.0
    %1175 = vmatpush.xpose.msra.mxu0 0.0
    %1176 = vmatpush.xpose.msra.mxu0 0.0
    %1177 = vmatpush.xpose.msra.mxu0 0.0
    %1178 = vmatpush.xpose.msra.mxu0 0.0
    %1179 = vmatpush.xpose.msra.mxu0 0.0
    %1180 = vmatpush.xpose.msra.mxu0 0.0
    %1181 = vmatpush.xpose.msra.mxu0 0.0
    %1182 = vmatpush.xpose.msra.mxu0 0.0
    %1183 = vmatpush.xpose.msra.mxu0 0.0
    %1184 = vmatpush.xpose.msra.mxu0 %v1168
    %1185 = vmatpush.xpose.msra.mxu0 %v1166
    %1186 = vmatmul.f32.gmra.mxu0 %v1162
    %v1187 = vpop.f32.mrf.mxu0
    %v1188 = vadd.f32 %v1105, %v1187
    %1189 = vmatmul.f32.gmra.mxu0 %v1164
    %v1190 = vpop.f32.mrf.mxu0
    %v1191 = vadd.f32 %v1106, %v1190
    %1192 = vdwg.mxu0
    %1195 = vrot.lane.b32.xlu0 %v1092, 120
    %v1196 = vpop.permute.xlu0 %1195
    %1197 = vrot.lane.b32.xlu0 %v1093, 120
    %v1198 = vpop.permute.xlu0 %1197
    %1201 = vrot.lane.b32.xlu0 %v1076, 88
    %v1202 = vpop.permute.xlu0 %1201
    %1203 = vrot.lane.b32.xlu0 %v1077, 88
    %v1204 = vpop.permute.xlu0 %1203
    %v1205 = vsel %vm84, %v1196, 0
    %v1207 = vsel %vm84, %v1198, 0
    %v1209 = vsel %vm84, %v1202, 0
    %v1211 = vsel %vm84, %v1204, 0
    %1213 = vmatpush.xpose.msra.mxu0 0.0
    %1214 = vmatpush.xpose.msra.mxu0 0.0
    %1215 = vmatpush.xpose.msra.mxu0 0.0
    %1216 = vmatpush.xpose.msra.mxu0 0.0
    %1217 = vmatpush.xpose.msra.mxu0 0.0
    %1218 = vmatpush.xpose.msra.mxu0 0.0
    %1219 = vmatpush.xpose.msra.mxu0 0.0
    %1220 = vmatpush.xpose.msra.mxu0 0.0
    %1221 = vmatpush.xpose.msra.mxu0 0.0
    %1222 = vmatpush.xpose.msra.mxu0 0.0
    %1223 = vmatpush.xpose.msra.mxu0 0.0
    %1224 = vmatpush.xpose.msra.mxu0 0.0
    %1225 = vmatpush.xpose.msra.mxu0 0.0
    %1226 = vmatpush.xpose.msra.mxu0 0.0
    %1227 = vmatpush.xpose.msra.mxu0 %v1211
    %1228 = vmatpush.xpose.msra.mxu0 %v1209
    %1229 = vmatmul.f32.gmra.mxu0 %v1205
    %v1230 = vpop.f32.mrf.mxu0
    %v1231 = vadd.f32 %v1105, %v1230
    %1232 = vmatmul.f32.gmra.mxu0 %v1207
    %v1233 = vpop.f32.mrf.mxu0
    %v1234 = vadd.f32 %v1106, %v1233
    %1235 = vdwg.mxu0
    %1238 = vrot.lane.b32.xlu0 %v1094, 120
    %v1239 = vpop.permute.xlu0 %1238
    %1240 = vrot.lane.b32.xlu0 %v1095, 120
    %v1241 = vpop.permute.xlu0 %1240
    %1244 = vrot.lane.b32.xlu0 %v1078, 88
    %v1245 = vpop.permute.xlu0 %1244
    %1246 = vrot.lane.b32.xlu0 %v1079, 88
    %v1247 = vpop.permute.xlu0 %1246
    %v1248 = vsel %vm84, %v1239, 0
    %v1250 = vsel %vm84, %v1241, 0
    %v1252 = vsel %vm84, %v1245, 0
    %v1254 = vsel %vm84, %v1247, 0
    %1256 = vmatpush.xpose.msra.mxu0 0.0
    %1257 = vmatpush.xpose.msra.mxu0 0.0
    %1258 = vmatpush.xpose.msra.mxu0 0.0
    %1259 = vmatpush.xpose.msra.mxu0 0.0
    %1260 = vmatpush.xpose.msra.mxu0 0.0
    %1261 = vmatpush.xpose.msra.mxu0 0.0
    %1262 = vmatpush.xpose.msra.mxu0 0.0
    %1263 = vmatpush.xpose.msra.mxu0 0.0
    %1264 = vmatpush.xpose.msra.mxu0 0.0
    %1265 = vmatpush.xpose.msra.mxu0 0.0
    %1266 = vmatpush.xpose.msra.mxu0 0.0
    %1267 = vmatpush.xpose.msra.mxu0 0.0
    %1268 = vmatpush.xpose.msra.mxu0 0.0
    %1269 = vmatpush.xpose.msra.mxu0 0.0
    %1270 = vmatpush.xpose.msra.mxu0 %v1254
    %1271 = vmatpush.xpose.msra.mxu0 %v1252
    %1272 = vmatmul.f32.gmra.mxu0 %v1248
    %v1273 = vpop.f32.mrf.mxu0
    %v1274 = vadd.f32 %v1105, %v1273
    %1275 = vmatmul.f32.gmra.mxu0 %v1250
    %v1276 = vpop.f32.mrf.mxu0
    %v1277 = vadd.f32 %v1106, %v1276
    %1278 = vdwg.mxu0
    %1281 = vrot.lane.b32.xlu0 %v1096, 120
    %v1282 = vpop.permute.xlu0 %1281
    %1283 = vrot.lane.b32.xlu0 %v1097, 120
    %v1284 = vpop.permute.xlu0 %1283
    %1287 = vrot.lane.b32.xlu0 %v1080, 88
    %v1288 = vpop.permute.xlu0 %1287
    %1289 = vrot.lane.b32.xlu0 %v1081, 88
    %v1290 = vpop.permute.xlu0 %1289
    %v1291 = vsel %vm84, %v1282, 0
    %v1293 = vsel %vm84, %v1284, 0
    %v1295 = vsel %vm84, %v1288, 0
    %v1297 = vsel %vm84, %v1290, 0
    %1299 = vmatpush.xpose.msra.mxu0 0.0
    %1300 = vmatpush.xpose.msra.mxu0 0.0
    %1301 = vmatpush.xpose.msra.mxu0 0.0
    %1302 = vmatpush.xpose.msra.mxu0 0.0
    %1303 = vmatpush.xpose.msra.mxu0 0.0
    %1304 = vmatpush.xpose.msra.mxu0 0.0
    %1305 = vmatpush.xpose.msra.mxu0 0.0
    %1306 = vmatpush.xpose.msra.mxu0 0.0
    %1307 = vmatpush.xpose.msra.mxu0 0.0
    %1308 = vmatpush.xpose.msra.mxu0 0.0
    %1309 = vmatpush.xpose.msra.mxu0 0.0
    %1310 = vmatpush.xpose.msra.mxu0 0.0
    %1311 = vmatpush.xpose.msra.mxu0 0.0
    %1312 = vmatpush.xpose.msra.mxu0 0.0
    %1313 = vmatpush.xpose.msra.mxu0 %v1297
    %1314 = vmatpush.xpose.msra.mxu0 %v1295
    %1315 = vmatmul.f32.gmra.mxu0 %v1291
    %v1316 = vpop.f32.mrf.mxu0
    %v1317 = vadd.f32 %v1105, %v1316
    %1318 = vmatmul.f32.gmra.mxu0 %v1293
    %v1319 = vpop.f32.mrf.mxu0
    %v1320 = vadd.f32 %v1106, %v1319
    %1321 = vdwg.mxu0
    %1324 = vrot.lane.b32.xlu0 %v1098, 120
    %v1325 = vpop.permute.xlu0 %1324
    %1326 = vrot.lane.b32.xlu0 %v1099, 120
    %v1327 = vpop.permute.xlu0 %1326
    %1330 = vrot.lane.b32.xlu0 %v1082, 88
    %v1331 = vpop.permute.xlu0 %1330
    %1332 = vrot.lane.b32.xlu0 %v1083, 88
    %v1333 = vpop.permute.xlu0 %1332
    %v1334 = vsel %vm84, %v1325, 0
    %v1336 = vsel %vm84, %v1327, 0
    %v1338 = vsel %vm84, %v1331, 0
    %v1340 = vsel %vm84, %v1333, 0
    %1342 = vmatpush.xpose.msra.mxu0 0.0
    %1343 = vmatpush.xpose.msra.mxu0 0.0
    %1344 = vmatpush.xpose.msra.mxu0 0.0
    %1345 = vmatpush.xpose.msra.mxu0 0.0
    %1346 = vmatpush.xpose.msra.mxu0 0.0
    %1347 = vmatpush.xpose.msra.mxu0 0.0
    %1348 = vmatpush.xpose.msra.mxu0 0.0
    %1349 = vmatpush.xpose.msra.mxu0 0.0
    %1350 = vmatpush.xpose.msra.mxu0 0.0
    %1351 = vmatpush.xpose.msra.mxu0 0.0
    %1352 = vmatpush.xpose.msra.mxu0 0.0
    %1353 = vmatpush.xpose.msra.mxu0 0.0
    %1354 = vmatpush.xpose.msra.mxu0 0.0
    %1355 = vmatpush.xpose.msra.mxu0 0.0
    %1356 = vmatpush.xpose.msra.mxu0 %v1340
    %1357 = vmatpush.xpose.msra.mxu0 %v1338
    %1358 = vmatmul.f32.gmra.mxu0 %v1334
    %v1359 = vpop.f32.mrf.mxu0
    %v1360 = vadd.f32 %v1105, %v1359
    %1361 = vmatmul.f32.gmra.mxu0 %v1336
    %v1362 = vpop.f32.mrf.mxu0
    %v1363 = vadd.f32 %v1106, %v1362
    %1364 = vdwg.mxu0
    %1367 = vrot.lane.b32.xlu0 %v1100, 120
    %v1368 = vpop.permute.xlu0 %1367
    %1369 = vrot.lane.b32.xlu0 %v1101, 120
    %v1370 = vpop.permute.xlu0 %1369
    %1373 = vrot.lane.b32.xlu0 %v1084, 88
    %v1374 = vpop.permute.xlu0 %1373
    %1375 = vrot.lane.b32.xlu0 %v1085, 88
    %v1376 = vpop.permute.xlu0 %1375
    %v1377 = vsel %vm84, %v1368, 0
    %v1379 = vsel %vm84, %v1370, 0
    %v1381 = vsel %vm84, %v1374, 0
    %v1383 = vsel %vm84, %v1376, 0
    %1385 = vmatpush.xpose.msra.mxu0 0.0
    %1386 = vmatpush.xpose.msra.mxu0 0.0
    %1387 = vmatpush.xpose.msra.mxu0 0.0
    %1388 = vmatpush.xpose.msra.mxu0 0.0
    %1389 = vmatpush.xpose.msra.mxu0 0.0
    %1390 = vmatpush.xpose.msra.mxu0 0.0
    %1391 = vmatpush.xpose.msra.mxu0 0.0
    %1392 = vmatpush.xpose.msra.mxu0 0.0
    %1393 = vmatpush.xpose.msra.mxu0 0.0
    %1394 = vmatpush.xpose.msra.mxu0 0.0
    %1395 = vmatpush.xpose.msra.mxu0 0.0
    %1396 = vmatpush.xpose.msra.mxu0 0.0
    %1397 = vmatpush.xpose.msra.mxu0 0.0
    %1398 = vmatpush.xpose.msra.mxu0 0.0
    %1399 = vmatpush.xpose.msra.mxu0 %v1383
    %1400 = vmatpush.xpose.msra.mxu0 %v1381
    %1401 = vmatmul.f32.gmra.mxu0 %v1377
    %v1402 = vpop.f32.mrf.mxu0
    %v1403 = vadd.f32 %v1105, %v1402
    %1404 = vmatmul.f32.gmra.mxu0 %v1379
    %v1405 = vpop.f32.mrf.mxu0
    %v1406 = vadd.f32 %v1106, %v1405
    %1407 = vdwg.mxu0
    %1410 = vrot.lane.b32.xlu0 %v1102, 120
    %v1411 = vpop.permute.xlu0 %1410
    %1412 = vrot.lane.b32.xlu0 %v1103, 120
    %v1413 = vpop.permute.xlu0 %1412
    %1416 = vrot.lane.b32.xlu0 %v1086, 88
    %v1417 = vpop.permute.xlu0 %1416
    %1418 = vrot.lane.b32.xlu0 %v1087, 88
    %v1419 = vpop.permute.xlu0 %1418
    %v1420 = vsel %vm84, %v1411, 0
    %v1422 = vsel %vm84, %v1413, 0
    %v1424 = vsel %vm84, %v1417, 0
    %v1426 = vsel %vm84, %v1419, 0
    %1428 = vmatpush.xpose.msra.mxu0 0.0
    %1429 = vmatpush.xpose.msra.mxu0 0.0
    %1430 = vmatpush.xpose.msra.mxu0 0.0
    %1431 = vmatpush.xpose.msra.mxu0 0.0
    %1432 = vmatpush.xpose.msra.mxu0 0.0
    %1433 = vmatpush.xpose.msra.mxu0 0.0
    %1434 = vmatpush.xpose.msra.mxu0 0.0
    %1435 = vmatpush.xpose.msra.mxu0 0.0
    %1436 = vmatpush.xpose.msra.mxu0 0.0
    %1437 = vmatpush.xpose.msra.mxu0 0.0
    %1438 = vmatpush.xpose.msra.mxu0 0.0
    %1439 = vmatpush.xpose.msra.mxu0 0.0
    %1440 = vmatpush.xpose.msra.mxu0 0.0
    %1441 = vmatpush.xpose.msra.mxu0 0.0
    %1442 = vmatpush.xpose.msra.mxu0 %v1426
    %1443 = vmatpush.xpose.msra.mxu0 %v1424
    %1444 = vmatmul.f32.gmra.mxu0 %v1420
    %v1445 = vpop.f32.mrf.mxu0
    %v1446 = vadd.f32 %v1105, %v1445
    %1447 = vmatmul.f32.gmra.mxu0 %v1422
    %v1448 = vpop.f32.mrf.mxu0
    %v1449 = vadd.f32 %v1106, %v1448
    %1450 = vdwg.mxu0
    %v1451 = vsel %vm391, %v1145, -inf
    %1452 = vmax.xlane.f32.xlu0 %v1451
    %v1453 = vpop.xlane.xlu0 %1452
    %v1454 = vsel %vm391, %v1148, -inf
    %1455 = vmax.xlane.f32.xlu0 %v1454
    %v1456 = vpop.xlane.xlu0 %1455
    %v1457 = vsel %vm391, %v1188, -inf
    %1458 = vmax.xlane.f32.xlu0 %v1457
    %v1459 = vpop.xlane.xlu0 %1458
    %v1460 = vsel %vm391, %v1191, -inf
    %1461 = vmax.xlane.f32.xlu0 %v1460
    %v1462 = vpop.xlane.xlu0 %1461
    %v1463 = vsel %vm391, %v1231, -inf
    %1464 = vmax.xlane.f32.xlu0 %v1463
    %v1465 = vpop.xlane.xlu0 %1464
    %v1466 = vsel %vm391, %v1234, -inf
    %1467 = vmax.xlane.f32.xlu0 %v1466
    %v1468 = vpop.xlane.xlu0 %1467
    %v1469 = vsel %vm391, %v1274, -inf
    %1470 = vmax.xlane.f32.xlu0 %v1469
    %v1471 = vpop.xlane.xlu0 %1470
    %v1472 = vsel %vm391, %v1277, -inf
    %1473 = vmax.xlane.f32.xlu0 %v1472
    %v1474 = vpop.xlane.xlu0 %1473
    %v1475 = vsel %vm391, %v1317, -inf
    %1476 = vmax.xlane.f32.xlu0 %v1475
    %v1477 = vpop.xlane.xlu0 %1476
    %v1478 = vsel %vm391, %v1320, -inf
    %1479 = vmax.xlane.f32.xlu0 %v1478
    %v1480 = vpop.xlane.xlu0 %1479
    %v1481 = vsel %vm391, %v1360, -inf
    %1482 = vmax.xlane.f32.xlu0 %v1481
    %v1483 = vpop.xlane.xlu0 %1482
    %v1484 = vsel %vm391, %v1363, -inf
    %1485 = vmax.xlane.f32.xlu0 %v1484
    %v1486 = vpop.xlane.xlu0 %1485
    %v1487 = vsel %vm391, %v1403, -inf
    %1488 = vmax.xlane.f32.xlu0 %v1487
    %v1489 = vpop.xlane.xlu0 %1488
    %v1490 = vsel %vm391, %v1406, -inf
    %1491 = vmax.xlane.f32.xlu0 %v1490
    %v1492 = vpop.xlane.xlu0 %1491
    %v1493 = vsel %vm391, %v1446, -inf
    %1494 = vmax.xlane.f32.xlu0 %v1493
    %v1495 = vpop.xlane.xlu0 %1494
    %v1496 = vsel %vm391, %v1449, -inf
    %1497 = vmax.xlane.f32.xlu0 %v1496
    %v1498 = vpop.xlane.xlu0 %1497
    %v1499 = vsub.f32 %v1145, %v1453
    %v1500 = vsub.f32 %v1148, %v1456
    %v1501 = vsub.f32 %v1188, %v1459
    %v1502 = vsub.f32 %v1191, %v1462
    %v1503 = vsub.f32 %v1231, %v1465
    %v1504 = vsub.f32 %v1234, %v1468
    %v1505 = vsub.f32 %v1274, %v1471
    %v1506 = vsub.f32 %v1277, %v1474
    %v1507 = vsub.f32 %v1317, %v1477
    %v1508 = vsub.f32 %v1320, %v1480
    %v1509 = vsub.f32 %v1360, %v1483
    %v1510 = vsub.f32 %v1363, %v1486
    %v1511 = vsub.f32 %v1403, %v1489
    %v1512 = vsub.f32 %v1406, %v1492
    %v1513 = vsub.f32 %v1446, %v1495
    %v1514 = vsub.f32 %v1449, %v1498
    %v1515 = vmul.f32 %v1499, 1.442695
    %v1516 = vpow.pop %v1515
    %v1517 = vmul.f32 %v1500, 1.442695
    %v1518 = vpow.pop %v1517
    %v1519 = vmul.f32 %v1501, 1.442695
    %v1520 = vpow.pop %v1519
    %v1521 = vmul.f32 %v1502, 1.442695
    %v1522 = vpow.pop %v1521
    %v1523 = vmul.f32 %v1503, 1.442695
    %v1524 = vpow.pop %v1523
    %v1525 = vmul.f32 %v1504, 1.442695
    %v1526 = vpow.pop %v1525
    %v1527 = vmul.f32 %v1505, 1.442695
    %v1528 = vpow.pop %v1527
    %v1529 = vmul.f32 %v1506, 1.442695
    %v1530 = vpow.pop %v1529
    %v1531 = vmul.f32 %v1507, 1.442695
    %v1532 = vpow.pop %v1531
    %v1533 = vmul.f32 %v1508, 1.442695
    %v1534 = vpow.pop %v1533
    %v1535 = vmul.f32 %v1509, 1.442695
    %v1536 = vpow.pop %v1535
    %v1537 = vmul.f32 %v1510, 1.442695
    %v1538 = vpow.pop %v1537
    %v1539 = vmul.f32 %v1511, 1.442695
    %v1540 = vpow.pop %v1539
    %v1541 = vmul.f32 %v1512, 1.442695
    %v1542 = vpow.pop %v1541
    %v1543 = vmul.f32 %v1513, 1.442695
    %v1544 = vpow.pop %v1543
    %v1545 = vmul.f32 %v1514, 1.442695
    %v1546 = vpow.pop %v1545
    %v1547 = vsel %vm391, %v1516, 0.0
    %1548 = vadd.xlane.f32.xlu0 %v1547
    %v1549 = vpop.xlane.xlu0 %1548
    %v1550 = vsel %vm391, %v1518, 0.0
    %1551 = vadd.xlane.f32.xlu0 %v1550
    %v1552 = vpop.xlane.xlu0 %1551
    %v1553 = vsel %vm391, %v1520, 0.0
    %1554 = vadd.xlane.f32.xlu0 %v1553
    %v1555 = vpop.xlane.xlu0 %1554
    %v1556 = vsel %vm391, %v1522, 0.0
    %1557 = vadd.xlane.f32.xlu0 %v1556
    %v1558 = vpop.xlane.xlu0 %1557
    %v1559 = vsel %vm391, %v1524, 0.0
    %1560 = vadd.xlane.f32.xlu0 %v1559
    %v1561 = vpop.xlane.xlu0 %1560
    %v1562 = vsel %vm391, %v1526, 0.0
    %1563 = vadd.xlane.f32.xlu0 %v1562
    %v1564 = vpop.xlane.xlu0 %1563
    %v1565 = vsel %vm391, %v1528, 0.0
    %1566 = vadd.xlane.f32.xlu0 %v1565
    %v1567 = vpop.xlane.xlu0 %1566
    %v1568 = vsel %vm391, %v1530, 0.0
    %1569 = vadd.xlane.f32.xlu0 %v1568
    %v1570 = vpop.xlane.xlu0 %1569
    %v1571 = vsel %vm391, %v1532, 0.0
    %1572 = vadd.xlane.f32.xlu0 %v1571
    %v1573 = vpop.xlane.xlu0 %1572
    %v1574 = vsel %vm391, %v1534, 0.0
    %1575 = vadd.xlane.f32.xlu0 %v1574
    %v1576 = vpop.xlane.xlu0 %1575
    %v1577 = vsel %vm391, %v1536, 0.0
    %1578 = vadd.xlane.f32.xlu0 %v1577
    %v1579 = vpop.xlane.xlu0 %1578
    %v1580 = vsel %vm391, %v1538, 0.0
    %1581 = vadd.xlane.f32.xlu0 %v1580
    %v1582 = vpop.xlane.xlu0 %1581
    %v1583 = vsel %vm391, %v1540, 0.0
    %1584 = vadd.xlane.f32.xlu0 %v1583
    %v1585 = vpop.xlane.xlu0 %1584
    %v1586 = vsel %vm391, %v1542, 0.0
    %1587 = vadd.xlane.f32.xlu0 %v1586
    %v1588 = vpop.xlane.xlu0 %1587
    %v1589 = vsel %vm391, %v1544, 0.0
    %1590 = vadd.xlane.f32.xlu0 %v1589
    %v1591 = vpop.xlane.xlu0 %1590
    %v1592 = vsel %vm391, %v1546, 0.0
    %1593 = vadd.xlane.f32.xlu0 %v1592
    %v1594 = vpop.xlane.xlu0 %1593
    %v1595 = vrcp.pop %v1549
    %v1596 = vmul.f32 %v1549, %v1595
    %v1597 = vsub.f32 1.0, %v1596
    %v1598 = vmul.f32 %v1595, %v1597
    %v1599 = vadd.f32 %v1595, %v1598
    %vm1600 = vweird.f32 %v1549
    %vm1601 = vweird.f32 %v1595
    %vm1602 = vmor %vm1600, %vm1601
    %v1603 = vsel %vm1602, %v1595, %v1599
    %v1604 = vand.u32 2147483647, %v1549
    %vm1605 = vcmp.eq.f32.partialorder %v1604, 8.507059e+37
    %v1606 = vand.u32 %v1549, 2147483648
    %v1607 = vor.u32 1.1754944e-38, %v1606
    %v1608 = vsel %vm1605, %v1607, %v1603
    %v1609 = vmul.f32 %v1516, %v1608
    %v1610 = vrcp.pop %v1552
    %v1611 = vmul.f32 %v1552, %v1610
    %v1612 = vsub.f32 1.0, %v1611
    %v1613 = vmul.f32 %v1610, %v1612
    %v1614 = vadd.f32 %v1610, %v1613
    %vm1615 = vweird.f32 %v1552
    %vm1616 = vweird.f32 %v1610
    %vm1617 = vmor %vm1615, %vm1616
    %v1618 = vsel %vm1617, %v1610, %v1614
    %v1619 = vand.u32 2147483647, %v1552
    %vm1620 = vcmp.eq.f32.partialorder %v1619, 8.507059e+37
    %v1621 = vand.u32 %v1552, 2147483648
    %v1622 = vor.u32 1.1754944e-38, %v1621
    %v1623 = vsel %vm1620, %v1622, %v1618
    %v1624 = vmul.f32 %v1518, %v1623
    %v1625 = vrcp.pop %v1555
    %v1626 = vmul.f32 %v1555, %v1625
    %v1627 = vsub.f32 1.0, %v1626
    %v1628 = vmul.f32 %v1625, %v1627
    %v1629 = vadd.f32 %v1625, %v1628
    %vm1630 = vweird.f32 %v1555
    %vm1631 = vweird.f32 %v1625
    %vm1632 = vmor %vm1630, %vm1631
    %v1633 = vsel %vm1632, %v1625, %v1629
    %v1634 = vand.u32 2147483647, %v1555
    %vm1635 = vcmp.eq.f32.partialorder %v1634, 8.507059e+37
    %v1636 = vand.u32 %v1555, 2147483648
    %v1637 = vor.u32 1.1754944e-38, %v1636
    %v1638 = vsel %vm1635, %v1637, %v1633
    %v1639 = vmul.f32 %v1520, %v1638
    %v1640 = vrcp.pop %v1558
    %v1641 = vmul.f32 %v1558, %v1640
    %v1642 = vsub.f32 1.0, %v1641
    %v1643 = vmul.f32 %v1640, %v1642
    %v1644 = vadd.f32 %v1640, %v1643
    %vm1645 = vweird.f32 %v1558
    %vm1646 = vweird.f32 %v1640
    %vm1647 = vmor %vm1645, %vm1646
    %v1648 = vsel %vm1647, %v1640, %v1644
    %v1649 = vand.u32 2147483647, %v1558
    %vm1650 = vcmp.eq.f32.partialorder %v1649, 8.507059e+37
    %v1651 = vand.u32 %v1558, 2147483648
    %v1652 = vor.u32 1.1754944e-38, %v1651
    %v1653 = vsel %vm1650, %v1652, %v1648
    %v1654 = vmul.f32 %v1522, %v1653
    %v1655 = vrcp.pop %v1561
    %v1656 = vmul.f32 %v1561, %v1655
    %v1657 = vsub.f32 1.0, %v1656
    %v1658 = vmul.f32 %v1655, %v1657
    %v1659 = vadd.f32 %v1655, %v1658
    %vm1660 = vweird.f32 %v1561
    %vm1661 = vweird.f32 %v1655
    %vm1662 = vmor %vm1660, %vm1661
    %v1663 = vsel %vm1662, %v1655, %v1659
    %v1664 = vand.u32 2147483647, %v1561
    %vm1665 = vcmp.eq.f32.partialorder %v1664, 8.507059e+37
    %v1666 = vand.u32 %v1561, 2147483648
    %v1667 = vor.u32 1.1754944e-38, %v1666
    %v1668 = vsel %vm1665, %v1667, %v1663
    %v1669 = vmul.f32 %v1524, %v1668
    %v1670 = vrcp.pop %v1564
    %v1671 = vmul.f32 %v1564, %v1670
    %v1672 = vsub.f32 1.0, %v1671
    %v1673 = vmul.f32 %v1670, %v1672
    %v1674 = vadd.f32 %v1670, %v1673
    %vm1675 = vweird.f32 %v1564
    %vm1676 = vweird.f32 %v1670
    %vm1677 = vmor %vm1675, %vm1676
    %v1678 = vsel %vm1677, %v1670, %v1674
    %v1679 = vand.u32 2147483647, %v1564
    %vm1680 = vcmp.eq.f32.partialorder %v1679, 8.507059e+37
    %v1681 = vand.u32 %v1564, 2147483648
    %v1682 = vor.u32 1.1754944e-38, %v1681
    %v1683 = vsel %vm1680, %v1682, %v1678
    %v1684 = vmul.f32 %v1526, %v1683
    %v1685 = vrcp.pop %v1567
    %v1686 = vmul.f32 %v1567, %v1685
    %v1687 = vsub.f32 1.0, %v1686
    %v1688 = vmul.f32 %v1685, %v1687
    %v1689 = vadd.f32 %v1685, %v1688
    %vm1690 = vweird.f32 %v1567
    %vm1691 = vweird.f32 %v1685
    %vm1692 = vmor %vm1690, %vm1691
    %v1693 = vsel %vm1692, %v1685, %v1689
    %v1694 = vand.u32 2147483647, %v1567
    %vm1695 = vcmp.eq.f32.partialorder %v1694, 8.507059e+37
    %v1696 = vand.u32 %v1567, 2147483648
    %v1697 = vor.u32 1.1754944e-38, %v1696
    %v1698 = vsel %vm1695, %v1697, %v1693
    %v1699 = vmul.f32 %v1528, %v1698
    %v1700 = vrcp.pop %v1570
    %v1701 = vmul.f32 %v1570, %v1700
    %v1702 = vsub.f32 1.0, %v1701
    %v1703 = vmul.f32 %v1700, %v1702
    %v1704 = vadd.f32 %v1700, %v1703
    %vm1705 = vweird.f32 %v1570
    %vm1706 = vweird.f32 %v1700
    %vm1707 = vmor %vm1705, %vm1706
    %v1708 = vsel %vm1707, %v1700, %v1704
    %v1709 = vand.u32 2147483647, %v1570
    %vm1710 = vcmp.eq.f32.partialorder %v1709, 8.507059e+37
    %v1711 = vand.u32 %v1570, 2147483648
    %v1712 = vor.u32 1.1754944e-38, %v1711
    %v1713 = vsel %vm1710, %v1712, %v1708
    %v1714 = vmul.f32 %v1530, %v1713
    %v1715 = vrcp.pop %v1573
    %v1716 = vmul.f32 %v1573, %v1715
    %v1717 = vsub.f32 1.0, %v1716
    %v1718 = vmul.f32 %v1715, %v1717
    %v1719 = vadd.f32 %v1715, %v1718
    %vm1720 = vweird.f32 %v1573
    %vm1721 = vweird.f32 %v1715
    %vm1722 = vmor %vm1720, %vm1721
    %v1723 = vsel %vm1722, %v1715, %v1719
    %v1724 = vand.u32 2147483647, %v1573
    %vm1725 = vcmp.eq.f32.partialorder %v1724, 8.507059e+37
    %v1726 = vand.u32 %v1573, 2147483648
    %v1727 = vor.u32 1.1754944e-38, %v1726
    %v1728 = vsel %vm1725, %v1727, %v1723
    %v1729 = vmul.f32 %v1532, %v1728
    %v1730 = vrcp.pop %v1576
    %v1731 = vmul.f32 %v1576, %v1730
    %v1732 = vsub.f32 1.0, %v1731
    %v1733 = vmul.f32 %v1730, %v1732
    %v1734 = vadd.f32 %v1730, %v1733
    %vm1735 = vweird.f32 %v1576
    %vm1736 = vweird.f32 %v1730
    %vm1737 = vmor %vm1735, %vm1736
    %v1738 = vsel %vm1737, %v1730, %v1734
    %v1739 = vand.u32 2147483647, %v1576
    %vm1740 = vcmp.eq.f32.partialorder %v1739, 8.507059e+37
    %v1741 = vand.u32 %v1576, 2147483648
    %v1742 = vor.u32 1.1754944e-38, %v1741
    %v1743 = vsel %vm1740, %v1742, %v1738
    %v1744 = vmul.f32 %v1534, %v1743
    %v1745 = vrcp.pop %v1579
    %v1746 = vmul.f32 %v1579, %v1745
    %v1747 = vsub.f32 1.0, %v1746
    %v1748 = vmul.f32 %v1745, %v1747
    %v1749 = vadd.f32 %v1745, %v1748
    %vm1750 = vweird.f32 %v1579
    %vm1751 = vweird.f32 %v1745
    %vm1752 = vmor %vm1750, %vm1751
    %v1753 = vsel %vm1752, %v1745, %v1749
    %v1754 = vand.u32 2147483647, %v1579
    %vm1755 = vcmp.eq.f32.partialorder %v1754, 8.507059e+37
    %v1756 = vand.u32 %v1579, 2147483648
    %v1757 = vor.u32 1.1754944e-38, %v1756
    %v1758 = vsel %vm1755, %v1757, %v1753
    %v1759 = vmul.f32 %v1536, %v1758
    %v1760 = vrcp.pop %v1582
    %v1761 = vmul.f32 %v1582, %v1760
    %v1762 = vsub.f32 1.0, %v1761
    %v1763 = vmul.f32 %v1760, %v1762
    %v1764 = vadd.f32 %v1760, %v1763
    %vm1765 = vweird.f32 %v1582
    %vm1766 = vweird.f32 %v1760
    %vm1767 = vmor %vm1765, %vm1766
    %v1768 = vsel %vm1767, %v1760, %v1764
    %v1769 = vand.u32 2147483647, %v1582
    %vm1770 = vcmp.eq.f32.partialorder %v1769, 8.507059e+37
    %v1771 = vand.u32 %v1582, 2147483648
    %v1772 = vor.u32 1.1754944e-38, %v1771
    %v1773 = vsel %vm1770, %v1772, %v1768
    %v1774 = vmul.f32 %v1538, %v1773
    %v1775 = vrcp.pop %v1585
    %v1776 = vmul.f32 %v1585, %v1775
    %v1777 = vsub.f32 1.0, %v1776
    %v1778 = vmul.f32 %v1775, %v1777
    %v1779 = vadd.f32 %v1775, %v1778
    %vm1780 = vweird.f32 %v1585
    %vm1781 = vweird.f32 %v1775
    %vm1782 = vmor %vm1780, %vm1781
    %v1783 = vsel %vm1782, %v1775, %v1779
    %v1784 = vand.u32 2147483647, %v1585
    %vm1785 = vcmp.eq.f32.partialorder %v1784, 8.507059e+37
    %v1786 = vand.u32 %v1585, 2147483648
    %v1787 = vor.u32 1.1754944e-38, %v1786
    %v1788 = vsel %vm1785, %v1787, %v1783
    %v1789 = vmul.f32 %v1540, %v1788
    %v1790 = vrcp.pop %v1588
    %v1791 = vmul.f32 %v1588, %v1790
    %v1792 = vsub.f32 1.0, %v1791
    %v1793 = vmul.f32 %v1790, %v1792
    %v1794 = vadd.f32 %v1790, %v1793
    %vm1795 = vweird.f32 %v1588
    %vm1796 = vweird.f32 %v1790
    %vm1797 = vmor %vm1795, %vm1796
    %v1798 = vsel %vm1797, %v1790, %v1794
    %v1799 = vand.u32 2147483647, %v1588
    %vm1800 = vcmp.eq.f32.partialorder %v1799, 8.507059e+37
    %v1801 = vand.u32 %v1588, 2147483648
    %v1802 = vor.u32 1.1754944e-38, %v1801
    %v1803 = vsel %vm1800, %v1802, %v1798
    %v1804 = vmul.f32 %v1542, %v1803
    %v1805 = vrcp.pop %v1591
    %v1806 = vmul.f32 %v1591, %v1805
    %v1807 = vsub.f32 1.0, %v1806
    %v1808 = vmul.f32 %v1805, %v1807
    %v1809 = vadd.f32 %v1805, %v1808
    %vm1810 = vweird.f32 %v1591
    %vm1811 = vweird.f32 %v1805
    %vm1812 = vmor %vm1810, %vm1811
    %v1813 = vsel %vm1812, %v1805, %v1809
    %v1814 = vand.u32 2147483647, %v1591
    %vm1815 = vcmp.eq.f32.partialorder %v1814, 8.507059e+37
    %v1816 = vand.u32 %v1591, 2147483648
    %v1817 = vor.u32 1.1754944e-38, %v1816
    %v1818 = vsel %vm1815, %v1817, %v1813
    %v1819 = vmul.f32 %v1544, %v1818
    %v1820 = vrcp.pop %v1594
    %v1821 = vmul.f32 %v1594, %v1820
    %v1822 = vsub.f32 1.0, %v1821
    %v1823 = vmul.f32 %v1820, %v1822
    %v1824 = vadd.f32 %v1820, %v1823
    %vm1825 = vweird.f32 %v1594
    %vm1826 = vweird.f32 %v1820
    %vm1827 = vmor %vm1825, %vm1826
    %v1828 = vsel %vm1827, %v1820, %v1824
    %v1829 = vand.u32 2147483647, %v1594
    %vm1830 = vcmp.eq.f32.partialorder %v1829, 8.507059e+37
    %v1831 = vand.u32 %v1594, 2147483648
    %v1832 = vor.u32 1.1754944e-38, %v1831
    %v1833 = vsel %vm1830, %v1832, %v1828
    %v1834 = vmul.f32 %v1546, %v1833
    %1835 = vrot.lane.b32.xlu0 %v1072, 56
    %v1836 = vpop.permute.xlu0 %1835
    %1837 = vrot.lane.b32.xlu0 %v1073, 56
    %v1838 = vpop.permute.xlu0 %1837
    %v1842 = vsel %vm391, %v1609, 0
    %v1845 = vsel %vm391, %v1624, 0
    %1847 = vmatpush.msra.mxu0 0.0
    %1848 = vmatpush.msra.mxu0 0.0
    %1849 = vmatpush.msra.mxu0 0.0
    %1850 = vmatpush.msra.mxu0 0.0
    %1851 = vmatpush.msra.mxu0 0.0
    %1852 = vmatpush.msra.mxu0 0.0
    %1853 = vmatpush.msra.mxu0 0.0
    %1854 = vmatpush.msra.mxu0 0.0
    %1855 = vmatpush.msra.mxu0 0.0
    %1856 = vmatpush.msra.mxu0 0.0
    %1857 = vmatpush.msra.mxu0 0.0
    %1858 = vmatpush.msra.mxu0 0.0
    %1859 = vmatpush.msra.mxu0 0.0
    %1860 = vmatpush.msra.mxu0 0.0
    %1861 = vmatpush.msra.mxu0 %v1838
    %1862 = vmatpush.msra.mxu0 %v1836
    %1863 = vmatmul.f32.gmra.mxu0 %v1842
    %v1864 = vpop.f32.mrf.mxu0
    %v1865 = vadd.f32 0.0, %v1864
    %1866 = vmatmul.f32.gmra.mxu0 %v1845
    %v1867 = vpop.f32.mrf.mxu0
    %v1868 = vadd.f32 0.0, %v1867
    %1869 = vdwg.mxu0
    %1870 = vrot.lane.b32.xlu0 %v1074, 56
    %v1871 = vpop.permute.xlu0 %1870
    %1872 = vrot.lane.b32.xlu0 %v1075, 56
    %v1873 = vpop.permute.xlu0 %1872
    %v1877 = vsel %vm391, %v1639, 0
    %v1880 = vsel %vm391, %v1654, 0
    %1882 = vmatpush.msra.mxu0 0.0
    %1883 = vmatpush.msra.mxu0 0.0
    %1884 = vmatpush.msra.mxu0 0.0
    %1885 = vmatpush.msra.mxu0 0.0
    %1886 = vmatpush.msra.mxu0 0.0
    %1887 = vmatpush.msra.mxu0 0.0
    %1888 = vmatpush.msra.mxu0 0.0
    %1889 = vmatpush.msra.mxu0 0.0
    %1890 = vmatpush.msra.mxu0 0.0
    %1891 = vmatpush.msra.mxu0 0.0
    %1892 = vmatpush.msra.mxu0 0.0
    %1893 = vmatpush.msra.mxu0 0.0
    %1894 = vmatpush.msra.mxu0 0.0
    %1895 = vmatpush.msra.mxu0 0.0
    %1896 = vmatpush.msra.mxu0 %v1873
    %1897 = vmatpush.msra.mxu0 %v1871
    %1898 = vmatmul.f32.gmra.mxu0 %v1877
    %v1899 = vpop.f32.mrf.mxu0
    %v1900 = vadd.f32 0.0, %v1899
    %1901 = vmatmul.f32.gmra.mxu0 %v1880
    %v1902 = vpop.f32.mrf.mxu0
    %v1903 = vadd.f32 0.0, %v1902
    %1904 = vdwg.mxu0
    %1905 = vrot.lane.b32.xlu0 %v1076, 56
    %v1906 = vpop.permute.xlu0 %1905
    %1907 = vrot.lane.b32.xlu0 %v1077, 56
    %v1908 = vpop.permute.xlu0 %1907
    %v1912 = vsel %vm391, %v1669, 0
    %v1915 = vsel %vm391, %v1684, 0
    %1917 = vmatpush.msra.mxu0 0.0
    %1918 = vmatpush.msra.mxu0 0.0
    %1919 = vmatpush.msra.mxu0 0.0
    %1920 = vmatpush.msra.mxu0 0.0
    %1921 = vmatpush.msra.mxu0 0.0
    %1922 = vmatpush.msra.mxu0 0.0
    %1923 = vmatpush.msra.mxu0 0.0
    %1924 = vmatpush.msra.mxu0 0.0
    %1925 = vmatpush.msra.mxu0 0.0
    %1926 = vmatpush.msra.mxu0 0.0
    %1927 = vmatpush.msra.mxu0 0.0
    %1928 = vmatpush.msra.mxu0 0.0
    %1929 = vmatpush.msra.mxu0 0.0
    %1930 = vmatpush.msra.mxu0 0.0
    %1931 = vmatpush.msra.mxu0 %v1908
    %1932 = vmatpush.msra.mxu0 %v1906
    %1933 = vmatmul.f32.gmra.mxu0 %v1912
    %v1934 = vpop.f32.mrf.mxu0
    %v1935 = vadd.f32 0.0, %v1934
    %1936 = vmatmul.f32.gmra.mxu0 %v1915
    %v1937 = vpop.f32.mrf.mxu0
    %v1938 = vadd.f32 0.0, %v1937
    %1939 = vdwg.mxu0
    %1940 = vrot.lane.b32.xlu0 %v1078, 56
    %v1941 = vpop.permute.xlu0 %1940
    %1942 = vrot.lane.b32.xlu0 %v1079, 56
    %v1943 = vpop.permute.xlu0 %1942
    %v1947 = vsel %vm391, %v1699, 0
    %v1950 = vsel %vm391, %v1714, 0
    %1952 = vmatpush.msra.mxu0 0.0
    %1953 = vmatpush.msra.mxu0 0.0
    %1954 = vmatpush.msra.mxu0 0.0
    %1955 = vmatpush.msra.mxu0 0.0
    %1956 = vmatpush.msra.mxu0 0.0
    %1957 = vmatpush.msra.mxu0 0.0
    %1958 = vmatpush.msra.mxu0 0.0
    %1959 = vmatpush.msra.mxu0 0.0
    %1960 = vmatpush.msra.mxu0 0.0
    %1961 = vmatpush.msra.mxu0 0.0
    %1962 = vmatpush.msra.mxu0 0.0
    %1963 = vmatpush.msra.mxu0 0.0
    %1964 = vmatpush.msra.mxu0 0.0
    %1965 = vmatpush.msra.mxu0 0.0
    %1966 = vmatpush.msra.mxu0 %v1943
    %1967 = vmatpush.msra.mxu0 %v1941
    %1968 = vmatmul.f32.gmra.mxu0 %v1947
    %v1969 = vpop.f32.mrf.mxu0
    %v1970 = vadd.f32 0.0, %v1969
    %1971 = vmatmul.f32.gmra.mxu0 %v1950
    %v1972 = vpop.f32.mrf.mxu0
    %v1973 = vadd.f32 0.0, %v1972
    %1974 = vdwg.mxu0
    %1975 = vrot.lane.b32.xlu0 %v1080, 56
    %v1976 = vpop.permute.xlu0 %1975
    %1977 = vrot.lane.b32.xlu0 %v1081, 56
    %v1978 = vpop.permute.xlu0 %1977
    %v1982 = vsel %vm391, %v1729, 0
    %v1985 = vsel %vm391, %v1744, 0
    %1987 = vmatpush.msra.mxu0 0.0
    %1988 = vmatpush.msra.mxu0 0.0
    %1989 = vmatpush.msra.mxu0 0.0
    %1990 = vmatpush.msra.mxu0 0.0
    %1991 = vmatpush.msra.mxu0 0.0
    %1992 = vmatpush.msra.mxu0 0.0
    %1993 = vmatpush.msra.mxu0 0.0
    %1994 = vmatpush.msra.mxu0 0.0
    %1995 = vmatpush.msra.mxu0 0.0
    %1996 = vmatpush.msra.mxu0 0.0
    %1997 = vmatpush.msra.mxu0 0.0
    %1998 = vmatpush.msra.mxu0 0.0
    %1999 = vmatpush.msra.mxu0 0.0
    %2000 = vmatpush.msra.mxu0 0.0
    %2001 = vmatpush.msra.mxu0 %v1978
    %2002 = vmatpush.msra.mxu0 %v1976
    %2003 = vmatmul.f32.gmra.mxu0 %v1982
    %v2004 = vpop.f32.mrf.mxu0
    %v2005 = vadd.f32 0.0, %v2004
    %2006 = vmatmul.f32.gmra.mxu0 %v1985
    %v2007 = vpop.f32.mrf.mxu0
    %v2008 = vadd.f32 0.0, %v2007
    %2009 = vdwg.mxu0
    %2010 = vrot.lane.b32.xlu0 %v1082, 56
    %v2011 = vpop.permute.xlu0 %2010
    %2012 = vrot.lane.b32.xlu0 %v1083, 56
    %v2013 = vpop.permute.xlu0 %2012
    %v2017 = vsel %vm391, %v1759, 0
    %v2020 = vsel %vm391, %v1774, 0
    %2022 = vmatpush.msra.mxu0 0.0
    %2023 = vmatpush.msra.mxu0 0.0
    %2024 = vmatpush.msra.mxu0 0.0
    %2025 = vmatpush.msra.mxu0 0.0
    %2026 = vmatpush.msra.mxu0 0.0
    %2027 = vmatpush.msra.mxu0 0.0
    %2028 = vmatpush.msra.mxu0 0.0
    %2029 = vmatpush.msra.mxu0 0.0
    %2030 = vmatpush.msra.mxu0 0.0
    %2031 = vmatpush.msra.mxu0 0.0
    %2032 = vmatpush.msra.mxu0 0.0
    %2033 = vmatpush.msra.mxu0 0.0
    %2034 = vmatpush.msra.mxu0 0.0
    %2035 = vmatpush.msra.mxu0 0.0
    %2036 = vmatpush.msra.mxu0 %v2013
    %2037 = vmatpush.msra.mxu0 %v2011
    %2038 = vmatmul.f32.gmra.mxu0 %v2017
    %v2039 = vpop.f32.mrf.mxu0
    %v2040 = vadd.f32 0.0, %v2039
    %2041 = vmatmul.f32.gmra.mxu0 %v2020
    %v2042 = vpop.f32.mrf.mxu0
    %v2043 = vadd.f32 0.0, %v2042
    %2044 = vdwg.mxu0
    %2045 = vrot.lane.b32.xlu0 %v1084, 56
    %v2046 = vpop.permute.xlu0 %2045
    %2047 = vrot.lane.b32.xlu0 %v1085, 56
    %v2048 = vpop.permute.xlu0 %2047
    %v2052 = vsel %vm391, %v1789, 0
    %v2055 = vsel %vm391, %v1804, 0
    %2057 = vmatpush.msra.mxu0 0.0
    %2058 = vmatpush.msra.mxu0 0.0
    %2059 = vmatpush.msra.mxu0 0.0
    %2060 = vmatpush.msra.mxu0 0.0
    %2061 = vmatpush.msra.mxu0 0.0
    %2062 = vmatpush.msra.mxu0 0.0
    %2063 = vmatpush.msra.mxu0 0.0
    %2064 = vmatpush.msra.mxu0 0.0
    %2065 = vmatpush.msra.mxu0 0.0
    %2066 = vmatpush.msra.mxu0 0.0
    %2067 = vmatpush.msra.mxu0 0.0
    %2068 = vmatpush.msra.mxu0 0.0
    %2069 = vmatpush.msra.mxu0 0.0
    %2070 = vmatpush.msra.mxu0 0.0
    %2071 = vmatpush.msra.mxu0 %v2048
    %2072 = vmatpush.msra.mxu0 %v2046
    %2073 = vmatmul.f32.gmra.mxu0 %v2052
    %v2074 = vpop.f32.mrf.mxu0
    %v2075 = vadd.f32 0.0, %v2074
    %2076 = vmatmul.f32.gmra.mxu0 %v2055
    %v2077 = vpop.f32.mrf.mxu0
    %v2078 = vadd.f32 0.0, %v2077
    %2079 = vdwg.mxu0
    %2080 = vrot.lane.b32.xlu0 %v1086, 56
    %v2081 = vpop.permute.xlu0 %2080
    %2082 = vrot.lane.b32.xlu0 %v1087, 56
    %v2083 = vpop.permute.xlu0 %2082
    %v2087 = vsel %vm391, %v1819, 0
    %v2090 = vsel %vm391, %v1834, 0
    %2092 = vmatpush.msra.mxu0 0.0
    %2093 = vmatpush.msra.mxu0 0.0
    %2094 = vmatpush.msra.mxu0 0.0
    %2095 = vmatpush.msra.mxu0 0.0
    %2096 = vmatpush.msra.mxu0 0.0
    %2097 = vmatpush.msra.mxu0 0.0
    %2098 = vmatpush.msra.mxu0 0.0
    %2099 = vmatpush.msra.mxu0 0.0
    %2100 = vmatpush.msra.mxu0 0.0
    %2101 = vmatpush.msra.mxu0 0.0
    %2102 = vmatpush.msra.mxu0 0.0
    %2103 = vmatpush.msra.mxu0 0.0
    %2104 = vmatpush.msra.mxu0 0.0
    %2105 = vmatpush.msra.mxu0 0.0
    %2106 = vmatpush.msra.mxu0 %v2083
    %2107 = vmatpush.msra.mxu0 %v2081
    %2108 = vmatmul.f32.gmra.mxu0 %v2087
    %v2109 = vpop.f32.mrf.mxu0
    %v2110 = vadd.f32 0.0, %v2109
    %2111 = vmatmul.f32.gmra.mxu0 %v2090
    %v2112 = vpop.f32.mrf.mxu0
    %v2113 = vadd.f32 0.0, %v2112
    %2114 = vdwg.mxu0
    %2131 = vrot.lane.b32.xlu0 %v1865, 8
    %v2132 = vpop.permute.xlu0 %2131
    %2133 = vrot.lane.b32.xlu0 %v1868, 8
    %v2134 = vpop.permute.xlu0 %2133
    %2135 = vrot.lane.b32.xlu0 %v1900, 8
    %v2136 = vpop.permute.xlu0 %2135
    %2137 = vrot.lane.b32.xlu0 %v1903, 8
    %v2138 = vpop.permute.xlu0 %2137
    %2139 = vrot.lane.b32.xlu0 %v1935, 8
    %v2140 = vpop.permute.xlu0 %2139
    %2141 = vrot.lane.b32.xlu0 %v1938, 8
    %v2142 = vpop.permute.xlu0 %2141
    %2143 = vrot.lane.b32.xlu0 %v1970, 8
    %v2144 = vpop.permute.xlu0 %2143
    %2145 = vrot.lane.b32.xlu0 %v1973, 8
    %v2146 = vpop.permute.xlu0 %2145
    %2147 = vrot.lane.b32.xlu0 %v2005, 8
    %v2148 = vpop.permute.xlu0 %2147
    %2149 = vrot.lane.b32.xlu0 %v2008, 8
    %v2150 = vpop.permute.xlu0 %2149
    %2151 = vrot.lane.b32.xlu0 %v2040, 8
    %v2152 = vpop.permute.xlu0 %2151
    %2153 = vrot.lane.b32.xlu0 %v2043, 8
    %v2154 = vpop.permute.xlu0 %2153
    %2155 = vrot.lane.b32.xlu0 %v2075, 8
    %v2156 = vpop.permute.xlu0 %2155
    %2157 = vrot.lane.b32.xlu0 %v2078, 8
    %v2158 = vpop.permute.xlu0 %2157
    %2159 = vrot.lane.b32.xlu0 %v2110, 8
    %v2160 = vpop.permute.xlu0 %2159
    %2161 = vrot.lane.b32.xlu0 %v2113, 8
    %v2162 = vpop.permute.xlu0 %2161
    %vm2179 = vcmask 130112
    %2180 = vst.msk [vmem:[#allocation2] sm:$0xff] %vm2179, %v2132
    %2181 = vst.msk [vmem:[#allocation2 + $0x8] sm:$0xff] %vm2179, %v2134
    %2182 = vst.msk [vmem:[#allocation2 + $0x10] sm:$0xff] %vm2179, %v2136
    %2183 = vst.msk [vmem:[#allocation2 + $0x18] sm:$0xff] %vm2179, %v2138
    %2184 = vst.msk [vmem:[#allocation2 + $0x20] sm:$0xff] %vm2179, %v2140
    %2185 = vst.msk [vmem:[#allocation2 + $0x28] sm:$0xff] %vm2179, %v2142
    %2186 = vst.msk [vmem:[#allocation2 + $0x30] sm:$0xff] %vm2179, %v2144
    %2187 = vst.msk [vmem:[#allocation2 + $0x38] sm:$0xff] %vm2179, %v2146
    %2188 = vst.msk [vmem:[#allocation2 + $0x40] sm:$0xff] %vm2179, %v2148
    %2189 = vst.msk [vmem:[#allocation2 + $0x48] sm:$0xff] %vm2179, %v2150
    %2190 = vst.msk [vmem:[#allocation2 + $0x50] sm:$0xff] %vm2179, %v2152
    %2191 = vst.msk [vmem:[#allocation2 + $0x58] sm:$0xff] %vm2179, %v2154
    %2192 = vst.msk [vmem:[#allocation2 + $0x60] sm:$0xff] %vm2179, %v2156
    %2193 = vst.msk [vmem:[#allocation2 + $0x68] sm:$0xff] %vm2179, %v2158
    %2194 = vst.msk [vmem:[#allocation2 + $0x70] sm:$0xff] %vm2179, %v2160
    %2195 = vst.msk [vmem:[#allocation2 + $0x78] sm:$0xff] %vm2179, %v2162
    %v2196 = vld [vmem:[#allocation3] sm:$0xff]
    %v2197 = vld [vmem:[#allocation3 + $0x8] sm:$0xff]
    %v2198 = vld [vmem:[#allocation3 + $0x10] sm:$0xff]
    %v2199 = vld [vmem:[#allocation3 + $0x18] sm:$0xff]
    %v2200 = vld [vmem:[#allocation3 + $0x20] sm:$0xff]
    %v2201 = vld [vmem:[#allocation3 + $0x28] sm:$0xff]
    %v2202 = vld [vmem:[#allocation3 + $0x30] sm:$0xff]
    %v2203 = vld [vmem:[#allocation3 + $0x38] sm:$0xff]
    %v2204 = vld [vmem:[#allocation3 + $0x40] sm:$0xff]
    %v2205 = vld [vmem:[#allocation3 + $0x48] sm:$0xff]
    %v2206 = vld [vmem:[#allocation3 + $0x50] sm:$0xff]
    %v2207 = vld [vmem:[#allocation3 + $0x58] sm:$0xff]
    %v2208 = vld [vmem:[#allocation3 + $0x60] sm:$0xff]
    %v2209 = vld [vmem:[#allocation3 + $0x68] sm:$0xff]
    %v2210 = vld [vmem:[#allocation3 + $0x70] sm:$0xff]
    %v2211 = vld [vmem:[#allocation3 + $0x78] sm:$0xff]
    %v2212 = vmul.f32 %v2196, 0.5
    %v2213 = vmul.f32 %v2197, 0.5
    %v2214 = vmul.f32 %v2198, 0.5
    %v2215 = vmul.f32 %v2199, 0.5
    %v2216 = vmul.f32 %v2200, 0.5
    %v2217 = vmul.f32 %v2201, 0.5
    %v2218 = vmul.f32 %v2202, 0.5
    %v2219 = vmul.f32 %v2203, 0.5
    %v2220 = vmul.f32 %v2204, 0.5
    %v2221 = vmul.f32 %v2205, 0.5
    %v2222 = vmul.f32 %v2206, 0.5
    %v2223 = vmul.f32 %v2207, 0.5
    %v2224 = vmul.f32 %v2208, 0.5
    %v2225 = vmul.f32 %v2209, 0.5
    %v2226 = vmul.f32 %v2210, 0.5
    %v2227 = vmul.f32 %v2211, 0.5
    %s2228 = scalar_lea.vmem [#allocation6], 32
    %v2229 = vld [vmem:[%s2228] sm:$0xff]
    %v2230 = vld [vmem:[%s2228 + $0x8] sm:$0xff]
    %2233 = vrot.lane.b32.xlu0 %v2212, 112
    %v2234 = vpop.permute.xlu0 %2233
    %2235 = vrot.lane.b32.xlu0 %v2213, 112
    %v2236 = vpop.permute.xlu0 %2235
    %2239 = vrot.lane.b32.xlu0 %v2196, 80
    %v2240 = vpop.permute.xlu0 %2239
    %2241 = vrot.lane.b32.xlu0 %v2197, 80
    %v2242 = vpop.permute.xlu0 %2241
    %v2243 = vsel %vm84, %v2234, 0
    %v2245 = vsel %vm84, %v2236, 0
    %v2247 = vsel %vm84, %v2240, 0
    %v2249 = vsel %vm84, %v2242, 0
    %2251 = vmatpush.xpose.msra.mxu0 0.0
    %2252 = vmatpush.xpose.msra.mxu0 0.0
    %2253 = vmatpush.xpose.msra.mxu0 0.0
    %2254 = vmatpush.xpose.msra.mxu0 0.0
    %2255 = vmatpush.xpose.msra.mxu0 0.0
    %2256 = vmatpush.xpose.msra.mxu0 0.0
    %2257 = vmatpush.xpose.msra.mxu0 0.0
    %2258 = vmatpush.xpose.msra.mxu0 0.0
    %2259 = vmatpush.xpose.msra.mxu0 0.0
    %2260 = vmatpush.xpose.msra.mxu0 0.0
    %2261 = vmatpush.xpose.msra.mxu0 0.0
    %2262 = vmatpush.xpose.msra.mxu0 0.0
    %2263 = vmatpush.xpose.msra.mxu0 0.0
    %2264 = vmatpush.xpose.msra.mxu0 0.0
    %2265 = vmatpush.xpose.msra.mxu0 %v2249
    %2266 = vmatpush.xpose.msra.mxu0 %v2247
    %2267 = vmatmul.f32.gmra.mxu0 %v2243
    %v2268 = vpop.f32.mrf.mxu0
    %v2269 = vadd.f32 %v2229, %v2268
    %2270 = vmatmul.f32.gmra.mxu0 %v2245
    %v2271 = vpop.f32.mrf.mxu0
    %v2272 = vadd.f32 %v2230, %v2271
    %2273 = vdwg.mxu0
    %2276 = vrot.lane.b32.xlu0 %v2214, 112
    %v2277 = vpop.permute.xlu0 %2276
    %2278 = vrot.lane.b32.xlu0 %v2215, 112
    %v2279 = vpop.permute.xlu0 %2278
    %2282 = vrot.lane.b32.xlu0 %v2198, 80
    %v2283 = vpop.permute.xlu0 %2282
    %2284 = vrot.lane.b32.xlu0 %v2199, 80
    %v2285 = vpop.permute.xlu0 %2284
    %v2286 = vsel %vm84, %v2277, 0
    %v2288 = vsel %vm84, %v2279, 0
    %v2290 = vsel %vm84, %v2283, 0
    %v2292 = vsel %vm84, %v2285, 0
    %2294 = vmatpush.xpose.msra.mxu0 0.0
    %2295 = vmatpush.xpose.msra.mxu0 0.0
    %2296 = vmatpush.xpose.msra.mxu0 0.0
    %2297 = vmatpush.xpose.msra.mxu0 0.0
    %2298 = vmatpush.xpose.msra.mxu0 0.0
    %2299 = vmatpush.xpose.msra.mxu0 0.0
    %2300 = vmatpush.xpose.msra.mxu0 0.0
    %2301 = vmatpush.xpose.msra.mxu0 0.0
    %2302 = vmatpush.xpose.msra.mxu0 0.0
    %2303 = vmatpush.xpose.msra.mxu0 0.0
    %2304 = vmatpush.xpose.msra.mxu0 0.0
    %2305 = vmatpush.xpose.msra.mxu0 0.0
    %2306 = vmatpush.xpose.msra.mxu0 0.0
    %2307 = vmatpush.xpose.msra.mxu0 0.0
    %2308 = vmatpush.xpose.msra.mxu0 %v2292
    %2309 = vmatpush.xpose.msra.mxu0 %v2290
    %2310 = vmatmul.f32.gmra.mxu0 %v2286
    %v2311 = vpop.f32.mrf.mxu0
    %v2312 = vadd.f32 %v2229, %v2311
    %2313 = vmatmul.f32.gmra.mxu0 %v2288
    %v2314 = vpop.f32.mrf.mxu0
    %v2315 = vadd.f32 %v2230, %v2314
    %2316 = vdwg.mxu0
    %2319 = vrot.lane.b32.xlu0 %v2216, 112
    %v2320 = vpop.permute.xlu0 %2319
    %2321 = vrot.lane.b32.xlu0 %v2217, 112
    %v2322 = vpop.permute.xlu0 %2321
    %2325 = vrot.lane.b32.xlu0 %v2200, 80
    %v2326 = vpop.permute.xlu0 %2325
    %2327 = vrot.lane.b32.xlu0 %v2201, 80
    %v2328 = vpop.permute.xlu0 %2327
    %v2329 = vsel %vm84, %v2320, 0
    %v2331 = vsel %vm84, %v2322, 0
    %v2333 = vsel %vm84, %v2326, 0
    %v2335 = vsel %vm84, %v2328, 0
    %2337 = vmatpush.xpose.msra.mxu0 0.0
    %2338 = vmatpush.xpose.msra.mxu0 0.0
    %2339 = vmatpush.xpose.msra.mxu0 0.0
    %2340 = vmatpush.xpose.msra.mxu0 0.0
    %2341 = vmatpush.xpose.msra.mxu0 0.0
    %2342 = vmatpush.xpose.msra.mxu0 0.0
    %2343 = vmatpush.xpose.msra.mxu0 0.0
    %2344 = vmatpush.xpose.msra.mxu0 0.0
    %2345 = vmatpush.xpose.msra.mxu0 0.0
    %2346 = vmatpush.xpose.msra.mxu0 0.0
    %2347 = vmatpush.xpose.msra.mxu0 0.0
    %2348 = vmatpush.xpose.msra.mxu0 0.0
    %2349 = vmatpush.xpose.msra.mxu0 0.0
    %2350 = vmatpush.xpose.msra.mxu0 0.0
    %2351 = vmatpush.xpose.msra.mxu0 %v2335
    %2352 = vmatpush.xpose.msra.mxu0 %v2333
    %2353 = vmatmul.f32.gmra.mxu0 %v2329
    %v2354 = vpop.f32.mrf.mxu0
    %v2355 = vadd.f32 %v2229, %v2354
    %2356 = vmatmul.f32.gmra.mxu0 %v2331
    %v2357 = vpop.f32.mrf.mxu0
    %v2358 = vadd.f32 %v2230, %v2357
    %2359 = vdwg.mxu0
    %2362 = vrot.lane.b32.xlu0 %v2218, 112
    %v2363 = vpop.permute.xlu0 %2362
    %2364 = vrot.lane.b32.xlu0 %v2219, 112
    %v2365 = vpop.permute.xlu0 %2364
    %2368 = vrot.lane.b32.xlu0 %v2202, 80
    %v2369 = vpop.permute.xlu0 %2368
    %2370 = vrot.lane.b32.xlu0 %v2203, 80
    %v2371 = vpop.permute.xlu0 %2370
    %v2372 = vsel %vm84, %v2363, 0
    %v2374 = vsel %vm84, %v2365, 0
    %v2376 = vsel %vm84, %v2369, 0
    %v2378 = vsel %vm84, %v2371, 0
    %2380 = vmatpush.xpose.msra.mxu0 0.0
    %2381 = vmatpush.xpose.msra.mxu0 0.0
    %2382 = vmatpush.xpose.msra.mxu0 0.0
    %2383 = vmatpush.xpose.msra.mxu0 0.0
    %2384 = vmatpush.xpose.msra.mxu0 0.0
    %2385 = vmatpush.xpose.msra.mxu0 0.0
    %2386 = vmatpush.xpose.msra.mxu0 0.0
    %2387 = vmatpush.xpose.msra.mxu0 0.0
    %2388 = vmatpush.xpose.msra.mxu0 0.0
    %2389 = vmatpush.xpose.msra.mxu0 0.0
    %2390 = vmatpush.xpose.msra.mxu0 0.0
    %2391 = vmatpush.xpose.msra.mxu0 0.0
    %2392 = vmatpush.xpose.msra.mxu0 0.0
    %2393 = vmatpush.xpose.msra.mxu0 0.0
    %2394 = vmatpush.xpose.msra.mxu0 %v2378
    %2395 = vmatpush.xpose.msra.mxu0 %v2376
    %2396 = vmatmul.f32.gmra.mxu0 %v2372
    %v2397 = vpop.f32.mrf.mxu0
    %v2398 = vadd.f32 %v2229, %v2397
    %2399 = vmatmul.f32.gmra.mxu0 %v2374
    %v2400 = vpop.f32.mrf.mxu0
    %v2401 = vadd.f32 %v2230, %v2400
    %2402 = vdwg.mxu0
    %2405 = vrot.lane.b32.xlu0 %v2220, 112
    %v2406 = vpop.permute.xlu0 %2405
    %2407 = vrot.lane.b32.xlu0 %v2221, 112
    %v2408 = vpop.permute.xlu0 %2407
    %2411 = vrot.lane.b32.xlu0 %v2204, 80
    %v2412 = vpop.permute.xlu0 %2411
    %2413 = vrot.lane.b32.xlu0 %v2205, 80
    %v2414 = vpop.permute.xlu0 %2413
    %v2415 = vsel %vm84, %v2406, 0
    %v2417 = vsel %vm84, %v2408, 0
    %v2419 = vsel %vm84, %v2412, 0
    %v2421 = vsel %vm84, %v2414, 0
    %2423 = vmatpush.xpose.msra.mxu0 0.0
    %2424 = vmatpush.xpose.msra.mxu0 0.0
    %2425 = vmatpush.xpose.msra.mxu0 0.0
    %2426 = vmatpush.xpose.msra.mxu0 0.0
    %2427 = vmatpush.xpose.msra.mxu0 0.0
    %2428 = vmatpush.xpose.msra.mxu0 0.0
    %2429 = vmatpush.xpose.msra.mxu0 0.0
    %2430 = vmatpush.xpose.msra.mxu0 0.0
    %2431 = vmatpush.xpose.msra.mxu0 0.0
    %2432 = vmatpush.xpose.msra.mxu0 0.0
    %2433 = vmatpush.xpose.msra.mxu0 0.0
    %2434 = vmatpush.xpose.msra.mxu0 0.0
    %2435 = vmatpush.xpose.msra.mxu0 0.0
    %2436 = vmatpush.xpose.msra.mxu0 0.0
    %2437 = vmatpush.xpose.msra.mxu0 %v2421
    %2438 = vmatpush.xpose.msra.mxu0 %v2419
    %2439 = vmatmul.f32.gmra.mxu0 %v2415
    %v2440 = vpop.f32.mrf.mxu0
    %v2441 = vadd.f32 %v2229, %v2440
    %2442 = vmatmul.f32.gmra.mxu0 %v2417
    %v2443 = vpop.f32.mrf.mxu0
    %v2444 = vadd.f32 %v2230, %v2443
    %2445 = vdwg.mxu0
    %2448 = vrot.lane.b32.xlu0 %v2222, 112
    %v2449 = vpop.permute.xlu0 %2448
    %2450 = vrot.lane.b32.xlu0 %v2223, 112
    %v2451 = vpop.permute.xlu0 %2450
    %2454 = vrot.lane.b32.xlu0 %v2206, 80
    %v2455 = vpop.permute.xlu0 %2454
    %2456 = vrot.lane.b32.xlu0 %v2207, 80
    %v2457 = vpop.permute.xlu0 %2456
    %v2458 = vsel %vm84, %v2449, 0
    %v2460 = vsel %vm84, %v2451, 0
    %v2462 = vsel %vm84, %v2455, 0
    %v2464 = vsel %vm84, %v2457, 0
    %2466 = vmatpush.xpose.msra.mxu0 0.0
    %2467 = vmatpush.xpose.msra.mxu0 0.0
    %2468 = vmatpush.xpose.msra.mxu0 0.0
    %2469 = vmatpush.xpose.msra.mxu0 0.0
    %2470 = vmatpush.xpose.msra.mxu0 0.0
    %2471 = vmatpush.xpose.msra.mxu0 0.0
    %2472 = vmatpush.xpose.msra.mxu0 0.0
    %2473 = vmatpush.xpose.msra.mxu0 0.0
    %2474 = vmatpush.xpose.msra.mxu0 0.0
    %2475 = vmatpush.xpose.msra.mxu0 0.0
    %2476 = vmatpush.xpose.msra.mxu0 0.0
    %2477 = vmatpush.xpose.msra.mxu0 0.0
    %2478 = vmatpush.xpose.msra.mxu0 0.0
    %2479 = vmatpush.xpose.msra.mxu0 0.0
    %2480 = vmatpush.xpose.msra.mxu0 %v2464
    %2481 = vmatpush.xpose.msra.mxu0 %v2462
    %2482 = vmatmul.f32.gmra.mxu0 %v2458
    %v2483 = vpop.f32.mrf.mxu0
    %v2484 = vadd.f32 %v2229, %v2483
    %2485 = vmatmul.f32.gmra.mxu0 %v2460
    %v2486 = vpop.f32.mrf.mxu0
    %v2487 = vadd.f32 %v2230, %v2486
    %2488 = vdwg.mxu0
    %2491 = vrot.lane.b32.xlu0 %v2224, 112
    %v2492 = vpop.permute.xlu0 %2491
    %2493 = vrot.lane.b32.xlu0 %v2225, 112
    %v2494 = vpop.permute.xlu0 %2493
    %2497 = vrot.lane.b32.xlu0 %v2208, 80
    %v2498 = vpop.permute.xlu0 %2497
    %2499 = vrot.lane.b32.xlu0 %v2209, 80
    %v2500 = vpop.permute.xlu0 %2499
    %v2501 = vsel %vm84, %v2492, 0
    %v2503 = vsel %vm84, %v2494, 0
    %v2505 = vsel %vm84, %v2498, 0
    %v2507 = vsel %vm84, %v2500, 0
    %2509 = vmatpush.xpose.msra.mxu0 0.0
    %2510 = vmatpush.xpose.msra.mxu0 0.0
    %2511 = vmatpush.xpose.msra.mxu0 0.0
    %2512 = vmatpush.xpose.msra.mxu0 0.0
    %2513 = vmatpush.xpose.msra.mxu0 0.0
    %2514 = vmatpush.xpose.msra.mxu0 0.0
    %2515 = vmatpush.xpose.msra.mxu0 0.0
    %2516 = vmatpush.xpose.msra.mxu0 0.0
    %2517 = vmatpush.xpose.msra.mxu0 0.0
    %2518 = vmatpush.xpose.msra.mxu0 0.0
    %2519 = vmatpush.xpose.msra.mxu0 0.0
    %2520 = vmatpush.xpose.msra.mxu0 0.0
    %2521 = vmatpush.xpose.msra.mxu0 0.0
    %2522 = vmatpush.xpose.msra.mxu0 0.0
    %2523 = vmatpush.xpose.msra.mxu0 %v2507
    %2524 = vmatpush.xpose.msra.mxu0 %v2505
    %2525 = vmatmul.f32.gmra.mxu0 %v2501
    %v2526 = vpop.f32.mrf.mxu0
    %v2527 = vadd.f32 %v2229, %v2526
    %2528 = vmatmul.f32.gmra.mxu0 %v2503
    %v2529 = vpop.f32.mrf.mxu0
    %v2530 = vadd.f32 %v2230, %v2529
    %2531 = vdwg.mxu0
    %2534 = vrot.lane.b32.xlu0 %v2226, 112
    %v2535 = vpop.permute.xlu0 %2534
    %2536 = vrot.lane.b32.xlu0 %v2227, 112
    %v2537 = vpop.permute.xlu0 %2536
    %2540 = vrot.lane.b32.xlu0 %v2210, 80
    %v2541 = vpop.permute.xlu0 %2540
    %2542 = vrot.lane.b32.xlu0 %v2211, 80
    %v2543 = vpop.permute.xlu0 %2542
    %v2544 = vsel %vm84, %v2535, 0
    %v2546 = vsel %vm84, %v2537, 0
    %v2548 = vsel %vm84, %v2541, 0
    %v2550 = vsel %vm84, %v2543, 0
    %2552 = vmatpush.xpose.msra.mxu0 0.0
    %2553 = vmatpush.xpose.msra.mxu0 0.0
    %2554 = vmatpush.xpose.msra.mxu0 0.0
    %2555 = vmatpush.xpose.msra.mxu0 0.0
    %2556 = vmatpush.xpose.msra.mxu0 0.0
    %2557 = vmatpush.xpose.msra.mxu0 0.0
    %2558 = vmatpush.xpose.msra.mxu0 0.0
    %2559 = vmatpush.xpose.msra.mxu0 0.0
    %2560 = vmatpush.xpose.msra.mxu0 0.0
    %2561 = vmatpush.xpose.msra.mxu0 0.0
    %2562 = vmatpush.xpose.msra.mxu0 0.0
    %2563 = vmatpush.xpose.msra.mxu0 0.0
    %2564 = vmatpush.xpose.msra.mxu0 0.0
    %2565 = vmatpush.xpose.msra.mxu0 0.0
    %2566 = vmatpush.xpose.msra.mxu0 %v2550
    %2567 = vmatpush.xpose.msra.mxu0 %v2548
    %2568 = vmatmul.f32.gmra.mxu0 %v2544
    %v2569 = vpop.f32.mrf.mxu0
    %v2570 = vadd.f32 %v2229, %v2569
    %2571 = vmatmul.f32.gmra.mxu0 %v2546
    %v2572 = vpop.f32.mrf.mxu0
    %v2573 = vadd.f32 %v2230, %v2572
    %2574 = vdwg.mxu0
    %v2575 = vsel %vm391, %v2269, -inf
    %2576 = vmax.xlane.f32.xlu0 %v2575
    %v2577 = vpop.xlane.xlu0 %2576
    %v2578 = vsel %vm391, %v2272, -inf
    %2579 = vmax.xlane.f32.xlu0 %v2578
    %v2580 = vpop.xlane.xlu0 %2579
    %v2581 = vsel %vm391, %v2312, -inf
    %2582 = vmax.xlane.f32.xlu0 %v2581
    %v2583 = vpop.xlane.xlu0 %2582
    %v2584 = vsel %vm391, %v2315, -inf
    %2585 = vmax.xlane.f32.xlu0 %v2584
    %v2586 = vpop.xlane.xlu0 %2585
    %v2587 = vsel %vm391, %v2355, -inf
    %2588 = vmax.xlane.f32.xlu0 %v2587
    %v2589 = vpop.xlane.xlu0 %2588
    %v2590 = vsel %vm391, %v2358, -inf
    %2591 = vmax.xlane.f32.xlu0 %v2590
    %v2592 = vpop.xlane.xlu0 %2591
    %v2593 = vsel %vm391, %v2398, -inf
    %2594 = vmax.xlane.f32.xlu0 %v2593
    %v2595 = vpop.xlane.xlu0 %2594
    %v2596 = vsel %vm391, %v2401, -inf
    %2597 = vmax.xlane.f32.xlu0 %v2596
    %v2598 = vpop.xlane.xlu0 %2597
    %v2599 = vsel %vm391, %v2441, -inf
    %2600 = vmax.xlane.f32.xlu0 %v2599
    %v2601 = vpop.xlane.xlu0 %2600
    %v2602 = vsel %vm391, %v2444, -inf
    %2603 = vmax.xlane.f32.xlu0 %v2602
    %v2604 = vpop.xlane.xlu0 %2603
    %v2605 = vsel %vm391, %v2484, -inf
    %2606 = vmax.xlane.f32.xlu0 %v2605
    %v2607 = vpop.xlane.xlu0 %2606
    %v2608 = vsel %vm391, %v2487, -inf
    %2609 = vmax.xlane.f32.xlu0 %v2608
    %v2610 = vpop.xlane.xlu0 %2609
    %v2611 = vsel %vm391, %v2527, -inf
    %2612 = vmax.xlane.f32.xlu0 %v2611
    %v2613 = vpop.xlane.xlu0 %2612
    %v2614 = vsel %vm391, %v2530, -inf
    %2615 = vmax.xlane.f32.xlu0 %v2614
    %v2616 = vpop.xlane.xlu0 %2615
    %v2617 = vsel %vm391, %v2570, -inf
    %2618 = vmax.xlane.f32.xlu0 %v2617
    %v2619 = vpop.xlane.xlu0 %2618
    %v2620 = vsel %vm391, %v2573, -inf
    %2621 = vmax.xlane.f32.xlu0 %v2620
    %v2622 = vpop.xlane.xlu0 %2621
    %v2623 = vsub.f32 %v2269, %v2577
    %v2624 = vsub.f32 %v2272, %v2580
    %v2625 = vsub.f32 %v2312, %v2583
    %v2626 = vsub.f32 %v2315, %v2586
    %v2627 = vsub.f32 %v2355, %v2589
    %v2628 = vsub.f32 %v2358, %v2592
    %v2629 = vsub.f32 %v2398, %v2595
    %v2630 = vsub.f32 %v2401, %v2598
    %v2631 = vsub.f32 %v2441, %v2601
    %v2632 = vsub.f32 %v2444, %v2604
    %v2633 = vsub.f32 %v2484, %v2607
    %v2634 = vsub.f32 %v2487, %v2610
    %v2635 = vsub.f32 %v2527, %v2613
    %v2636 = vsub.f32 %v2530, %v2616
    %v2637 = vsub.f32 %v2570, %v2619
    %v2638 = vsub.f32 %v2573, %v2622
    %v2639 = vmul.f32 %v2623, 1.442695
    %v2640 = vpow.pop %v2639
    %v2641 = vmul.f32 %v2624, 1.442695
    %v2642 = vpow.pop %v2641
    %v2643 = vmul.f32 %v2625, 1.442695
    %v2644 = vpow.pop %v2643
    %v2645 = vmul.f32 %v2626, 1.442695
    %v2646 = vpow.pop %v2645
    %v2647 = vmul.f32 %v2627, 1.442695
    %v2648 = vpow.pop %v2647
    %v2649 = vmul.f32 %v2628, 1.442695
    %v2650 = vpow.pop %v2649
    %v2651 = vmul.f32 %v2629, 1.442695
    %v2652 = vpow.pop %v2651
    %v2653 = vmul.f32 %v2630, 1.442695
    %v2654 = vpow.pop %v2653
    %v2655 = vmul.f32 %v2631, 1.442695
    %v2656 = vpow.pop %v2655
    %v2657 = vmul.f32 %v2632, 1.442695
    %v2658 = vpow.pop %v2657
    %v2659 = vmul.f32 %v2633, 1.442695
    %v2660 = vpow.pop %v2659
    %v2661 = vmul.f32 %v2634, 1.442695
    %v2662 = vpow.pop %v2661
    %v2663 = vmul.f32 %v2635, 1.442695
    %v2664 = vpow.pop %v2663
    %v2665 = vmul.f32 %v2636, 1.442695
    %v2666 = vpow.pop %v2665
    %v2667 = vmul.f32 %v2637, 1.442695
    %v2668 = vpow.pop %v2667
    %v2669 = vmul.f32 %v2638, 1.442695
    %v2670 = vpow.pop %v2669
    %v2671 = vsel %vm391, %v2640, 0.0
    %2672 = vadd.xlane.f32.xlu0 %v2671
    %v2673 = vpop.xlane.xlu0 %2672
    %v2674 = vsel %vm391, %v2642, 0.0
    %2675 = vadd.xlane.f32.xlu0 %v2674
    %v2676 = vpop.xlane.xlu0 %2675
    %v2677 = vsel %vm391, %v2644, 0.0
    %2678 = vadd.xlane.f32.xlu0 %v2677
    %v2679 = vpop.xlane.xlu0 %2678
    %v2680 = vsel %vm391, %v2646, 0.0
    %2681 = vadd.xlane.f32.xlu0 %v2680
    %v2682 = vpop.xlane.xlu0 %2681
    %v2683 = vsel %vm391, %v2648, 0.0
    %2684 = vadd.xlane.f32.xlu0 %v2683
    %v2685 = vpop.xlane.xlu0 %2684
    %v2686 = vsel %vm391, %v2650, 0.0
    %2687 = vadd.xlane.f32.xlu0 %v2686
    %v2688 = vpop.xlane.xlu0 %2687
    %v2689 = vsel %vm391, %v2652, 0.0
    %2690 = vadd.xlane.f32.xlu0 %v2689
    %v2691 = vpop.xlane.xlu0 %2690
    %v2692 = vsel %vm391, %v2654, 0.0
    %2693 = vadd.xlane.f32.xlu0 %v2692
    %v2694 = vpop.xlane.xlu0 %2693
    %v2695 = vsel %vm391, %v2656, 0.0
    %2696 = vadd.xlane.f32.xlu0 %v2695
    %v2697 = vpop.xlane.xlu0 %2696
    %v2698 = vsel %vm391, %v2658, 0.0
    %2699 = vadd.xlane.f32.xlu0 %v2698
    %v2700 = vpop.xlane.xlu0 %2699
    %v2701 = vsel %vm391, %v2660, 0.0
    %2702 = vadd.xlane.f32.xlu0 %v2701
    %v2703 = vpop.xlane.xlu0 %2702
    %v2704 = vsel %vm391, %v2662, 0.0
    %2705 = vadd.xlane.f32.xlu0 %v2704
    %v2706 = vpop.xlane.xlu0 %2705
    %v2707 = vsel %vm391, %v2664, 0.0
    %2708 = vadd.xlane.f32.xlu0 %v2707
    %v2709 = vpop.xlane.xlu0 %2708
    %v2710 = vsel %vm391, %v2666, 0.0
    %2711 = vadd.xlane.f32.xlu0 %v2710
    %v2712 = vpop.xlane.xlu0 %2711
    %v2713 = vsel %vm391, %v2668, 0.0
    %2714 = vadd.xlane.f32.xlu0 %v2713
    %v2715 = vpop.xlane.xlu0 %2714
    %v2716 = vsel %vm391, %v2670, 0.0
    %2717 = vadd.xlane.f32.xlu0 %v2716
    %v2718 = vpop.xlane.xlu0 %2717
    %v2719 = vrcp.pop %v2673
    %v2720 = vmul.f32 %v2673, %v2719
    %v2721 = vsub.f32 1.0, %v2720
    %v2722 = vmul.f32 %v2719, %v2721
    %v2723 = vadd.f32 %v2719, %v2722
    %vm2724 = vweird.f32 %v2673
    %vm2725 = vweird.f32 %v2719
    %vm2726 = vmor %vm2724, %vm2725
    %v2727 = vsel %vm2726, %v2719, %v2723
    %v2728 = vand.u32 2147483647, %v2673
    %vm2729 = vcmp.eq.f32.partialorder %v2728, 8.507059e+37
    %v2730 = vand.u32 %v2673, 2147483648
    %v2731 = vor.u32 1.1754944e-38, %v2730
    %v2732 = vsel %vm2729, %v2731, %v2727
    %v2733 = vmul.f32 %v2640, %v2732
    %v2734 = vrcp.pop %v2676
    %v2735 = vmul.f32 %v2676, %v2734
    %v2736 = vsub.f32 1.0, %v2735
    %v2737 = vmul.f32 %v2734, %v2736
    %v2738 = vadd.f32 %v2734, %v2737
    %vm2739 = vweird.f32 %v2676
    %vm2740 = vweird.f32 %v2734
    %vm2741 = vmor %vm2739, %vm2740
    %v2742 = vsel %vm2741, %v2734, %v2738
    %v2743 = vand.u32 2147483647, %v2676
    %vm2744 = vcmp.eq.f32.partialorder %v2743, 8.507059e+37
    %v2745 = vand.u32 %v2676, 2147483648
    %v2746 = vor.u32 1.1754944e-38, %v2745
    %v2747 = vsel %vm2744, %v2746, %v2742
    %v2748 = vmul.f32 %v2642, %v2747
    %v2749 = vrcp.pop %v2679
    %v2750 = vmul.f32 %v2679, %v2749
    %v2751 = vsub.f32 1.0, %v2750
    %v2752 = vmul.f32 %v2749, %v2751
    %v2753 = vadd.f32 %v2749, %v2752
    %vm2754 = vweird.f32 %v2679
    %vm2755 = vweird.f32 %v2749
    %vm2756 = vmor %vm2754, %vm2755
    %v2757 = vsel %vm2756, %v2749, %v2753
    %v2758 = vand.u32 2147483647, %v2679
    %vm2759 = vcmp.eq.f32.partialorder %v2758, 8.507059e+37
    %v2760 = vand.u32 %v2679, 2147483648
    %v2761 = vor.u32 1.1754944e-38, %v2760
    %v2762 = vsel %vm2759, %v2761, %v2757
    %v2763 = vmul.f32 %v2644, %v2762
    %v2764 = vrcp.pop %v2682
    %v2765 = vmul.f32 %v2682, %v2764
    %v2766 = vsub.f32 1.0, %v2765
    %v2767 = vmul.f32 %v2764, %v2766
    %v2768 = vadd.f32 %v2764, %v2767
    %vm2769 = vweird.f32 %v2682
    %vm2770 = vweird.f32 %v2764
    %vm2771 = vmor %vm2769, %vm2770
    %v2772 = vsel %vm2771, %v2764, %v2768
    %v2773 = vand.u32 2147483647, %v2682
    %vm2774 = vcmp.eq.f32.partialorder %v2773, 8.507059e+37
    %v2775 = vand.u32 %v2682, 2147483648
    %v2776 = vor.u32 1.1754944e-38, %v2775
    %v2777 = vsel %vm2774, %v2776, %v2772
    %v2778 = vmul.f32 %v2646, %v2777
    %v2779 = vrcp.pop %v2685
    %v2780 = vmul.f32 %v2685, %v2779
    %v2781 = vsub.f32 1.0, %v2780
    %v2782 = vmul.f32 %v2779, %v2781
    %v2783 = vadd.f32 %v2779, %v2782
    %vm2784 = vweird.f32 %v2685
    %vm2785 = vweird.f32 %v2779
    %vm2786 = vmor %vm2784, %vm2785
    %v2787 = vsel %vm2786, %v2779, %v2783
    %v2788 = vand.u32 2147483647, %v2685
    %vm2789 = vcmp.eq.f32.partialorder %v2788, 8.507059e+37
    %v2790 = vand.u32 %v2685, 2147483648
    %v2791 = vor.u32 1.1754944e-38, %v2790
    %v2792 = vsel %vm2789, %v2791, %v2787
    %v2793 = vmul.f32 %v2648, %v2792
    %v2794 = vrcp.pop %v2688
    %v2795 = vmul.f32 %v2688, %v2794
    %v2796 = vsub.f32 1.0, %v2795
    %v2797 = vmul.f32 %v2794, %v2796
    %v2798 = vadd.f32 %v2794, %v2797
    %vm2799 = vweird.f32 %v2688
    %vm2800 = vweird.f32 %v2794
    %vm2801 = vmor %vm2799, %vm2800
    %v2802 = vsel %vm2801, %v2794, %v2798
    %v2803 = vand.u32 2147483647, %v2688
    %vm2804 = vcmp.eq.f32.partialorder %v2803, 8.507059e+37
    %v2805 = vand.u32 %v2688, 2147483648
    %v2806 = vor.u32 1.1754944e-38, %v2805
    %v2807 = vsel %vm2804, %v2806, %v2802
    %v2808 = vmul.f32 %v2650, %v2807
    %v2809 = vrcp.pop %v2691
    %v2810 = vmul.f32 %v2691, %v2809
    %v2811 = vsub.f32 1.0, %v2810
    %v2812 = vmul.f32 %v2809, %v2811
    %v2813 = vadd.f32 %v2809, %v2812
    %vm2814 = vweird.f32 %v2691
    %vm2815 = vweird.f32 %v2809
    %vm2816 = vmor %vm2814, %vm2815
    %v2817 = vsel %vm2816, %v2809, %v2813
    %v2818 = vand.u32 2147483647, %v2691
    %vm2819 = vcmp.eq.f32.partialorder %v2818, 8.507059e+37
    %v2820 = vand.u32 %v2691, 2147483648
    %v2821 = vor.u32 1.1754944e-38, %v2820
    %v2822 = vsel %vm2819, %v2821, %v2817
    %v2823 = vmul.f32 %v2652, %v2822
    %v2824 = vrcp.pop %v2694
    %v2825 = vmul.f32 %v2694, %v2824
    %v2826 = vsub.f32 1.0, %v2825
    %v2827 = vmul.f32 %v2824, %v2826
    %v2828 = vadd.f32 %v2824, %v2827
    %vm2829 = vweird.f32 %v2694
    %vm2830 = vweird.f32 %v2824
    %vm2831 = vmor %vm2829, %vm2830
    %v2832 = vsel %vm2831, %v2824, %v2828
    %v2833 = vand.u32 2147483647, %v2694
    %vm2834 = vcmp.eq.f32.partialorder %v2833, 8.507059e+37
    %v2835 = vand.u32 %v2694, 2147483648
    %v2836 = vor.u32 1.1754944e-38, %v2835
    %v2837 = vsel %vm2834, %v2836, %v2832
    %v2838 = vmul.f32 %v2654, %v2837
    %v2839 = vrcp.pop %v2697
    %v2840 = vmul.f32 %v2697, %v2839
    %v2841 = vsub.f32 1.0, %v2840
    %v2842 = vmul.f32 %v2839, %v2841
    %v2843 = vadd.f32 %v2839, %v2842
    %vm2844 = vweird.f32 %v2697
    %vm2845 = vweird.f32 %v2839
    %vm2846 = vmor %vm2844, %vm2845
    %v2847 = vsel %vm2846, %v2839, %v2843
    %v2848 = vand.u32 2147483647, %v2697
    %vm2849 = vcmp.eq.f32.partialorder %v2848, 8.507059e+37
    %v2850 = vand.u32 %v2697, 2147483648
    %v2851 = vor.u32 1.1754944e-38, %v2850
    %v2852 = vsel %vm2849, %v2851, %v2847
    %v2853 = vmul.f32 %v2656, %v2852
    %v2854 = vrcp.pop %v2700
    %v2855 = vmul.f32 %v2700, %v2854
    %v2856 = vsub.f32 1.0, %v2855
    %v2857 = vmul.f32 %v2854, %v2856
    %v2858 = vadd.f32 %v2854, %v2857
    %vm2859 = vweird.f32 %v2700
    %vm2860 = vweird.f32 %v2854
    %vm2861 = vmor %vm2859, %vm2860
    %v2862 = vsel %vm2861, %v2854, %v2858
    %v2863 = vand.u32 2147483647, %v2700
    %vm2864 = vcmp.eq.f32.partialorder %v2863, 8.507059e+37
    %v2865 = vand.u32 %v2700, 2147483648
    %v2866 = vor.u32 1.1754944e-38, %v2865
    %v2867 = vsel %vm2864, %v2866, %v2862
    %v2868 = vmul.f32 %v2658, %v2867
    %v2869 = vrcp.pop %v2703
    %v2870 = vmul.f32 %v2703, %v2869
    %v2871 = vsub.f32 1.0, %v2870
    %v2872 = vmul.f32 %v2869, %v2871
    %v2873 = vadd.f32 %v2869, %v2872
    %vm2874 = vweird.f32 %v2703
    %vm2875 = vweird.f32 %v2869
    %vm2876 = vmor %vm2874, %vm2875
    %v2877 = vsel %vm2876, %v2869, %v2873
    %v2878 = vand.u32 2147483647, %v2703
    %vm2879 = vcmp.eq.f32.partialorder %v2878, 8.507059e+37
    %v2880 = vand.u32 %v2703, 2147483648
    %v2881 = vor.u32 1.1754944e-38, %v2880
    %v2882 = vsel %vm2879, %v2881, %v2877
    %v2883 = vmul.f32 %v2660, %v2882
    %v2884 = vrcp.pop %v2706
    %v2885 = vmul.f32 %v2706, %v2884
    %v2886 = vsub.f32 1.0, %v2885
    %v2887 = vmul.f32 %v2884, %v2886
    %v2888 = vadd.f32 %v2884, %v2887
    %vm2889 = vweird.f32 %v2706
    %vm2890 = vweird.f32 %v2884
    %vm2891 = vmor %vm2889, %vm2890
    %v2892 = vsel %vm2891, %v2884, %v2888
    %v2893 = vand.u32 2147483647, %v2706
    %vm2894 = vcmp.eq.f32.partialorder %v2893, 8.507059e+37
    %v2895 = vand.u32 %v2706, 2147483648
    %v2896 = vor.u32 1.1754944e-38, %v2895
    %v2897 = vsel %vm2894, %v2896, %v2892
    %v2898 = vmul.f32 %v2662, %v2897
    %v2899 = vrcp.pop %v2709
    %v2900 = vmul.f32 %v2709, %v2899
    %v2901 = vsub.f32 1.0, %v2900
    %v2902 = vmul.f32 %v2899, %v2901
    %v2903 = vadd.f32 %v2899, %v2902
    %vm2904 = vweird.f32 %v2709
    %vm2905 = vweird.f32 %v2899
    %vm2906 = vmor %vm2904, %vm2905
    %v2907 = vsel %vm2906, %v2899, %v2903
    %v2908 = vand.u32 2147483647, %v2709
    %vm2909 = vcmp.eq.f32.partialorder %v2908, 8.507059e+37
    %v2910 = vand.u32 %v2709, 2147483648
    %v2911 = vor.u32 1.1754944e-38, %v2910
    %v2912 = vsel %vm2909, %v2911, %v2907
    %v2913 = vmul.f32 %v2664, %v2912
    %v2914 = vrcp.pop %v2712
    %v2915 = vmul.f32 %v2712, %v2914
    %v2916 = vsub.f32 1.0, %v2915
    %v2917 = vmul.f32 %v2914, %v2916
    %v2918 = vadd.f32 %v2914, %v2917
    %vm2919 = vweird.f32 %v2712
    %vm2920 = vweird.f32 %v2914
    %vm2921 = vmor %vm2919, %vm2920
    %v2922 = vsel %vm2921, %v2914, %v2918
    %v2923 = vand.u32 2147483647, %v2712
    %vm2924 = vcmp.eq.f32.partialorder %v2923, 8.507059e+37
    %v2925 = vand.u32 %v2712, 2147483648
    %v2926 = vor.u32 1.1754944e-38, %v2925
    %v2927 = vsel %vm2924, %v2926, %v2922
    %v2928 = vmul.f32 %v2666, %v2927
    %v2929 = vrcp.pop %v2715
    %v2930 = vmul.f32 %v2715, %v2929
    %v2931 = vsub.f32 1.0, %v2930
    %v2932 = vmul.f32 %v2929, %v2931
    %v2933 = vadd.f32 %v2929, %v2932
    %vm2934 = vweird.f32 %v2715
    %vm2935 = vweird.f32 %v2929
    %vm2936 = vmor %vm2934, %vm2935
    %v2937 = vsel %vm2936, %v2929, %v2933
    %v2938 = vand.u32 2147483647, %v2715
    %vm2939 = vcmp.eq.f32.partialorder %v2938, 8.507059e+37
    %v2940 = vand.u32 %v2715, 2147483648
    %v2941 = vor.u32 1.1754944e-38, %v2940
    %v2942 = vsel %vm2939, %v2941, %v2937
    %v2943 = vmul.f32 %v2668, %v2942
    %v2944 = vrcp.pop %v2718
    %v2945 = vmul.f32 %v2718, %v2944
    %v2946 = vsub.f32 1.0, %v2945
    %v2947 = vmul.f32 %v2944, %v2946
    %v2948 = vadd.f32 %v2944, %v2947
    %vm2949 = vweird.f32 %v2718
    %vm2950 = vweird.f32 %v2944
    %vm2951 = vmor %vm2949, %vm2950
    %v2952 = vsel %vm2951, %v2944, %v2948
    %v2953 = vand.u32 2147483647, %v2718
    %vm2954 = vcmp.eq.f32.partialorder %v2953, 8.507059e+37
    %v2955 = vand.u32 %v2718, 2147483648
    %v2956 = vor.u32 1.1754944e-38, %v2955
    %v2957 = vsel %vm2954, %v2956, %v2952
    %v2958 = vmul.f32 %v2670, %v2957
    %2959 = vrot.lane.b32.xlu0 %v2196, 48
    %v2960 = vpop.permute.xlu0 %2959
    %2961 = vrot.lane.b32.xlu0 %v2197, 48
    %v2962 = vpop.permute.xlu0 %2961
    %v2966 = vsel %vm391, %v2733, 0
    %v2969 = vsel %vm391, %v2748, 0
    %2971 = vmatpush.msra.mxu0 0.0
    %2972 = vmatpush.msra.mxu0 0.0
    %2973 = vmatpush.msra.mxu0 0.0
    %2974 = vmatpush.msra.mxu0 0.0
    %2975 = vmatpush.msra.mxu0 0.0
    %2976 = vmatpush.msra.mxu0 0.0
    %2977 = vmatpush.msra.mxu0 0.0
    %2978 = vmatpush.msra.mxu0 0.0
    %2979 = vmatpush.msra.mxu0 0.0
    %2980 = vmatpush.msra.mxu0 0.0
    %2981 = vmatpush.msra.mxu0 0.0
    %2982 = vmatpush.msra.mxu0 0.0
    %2983 = vmatpush.msra.mxu0 0.0
    %2984 = vmatpush.msra.mxu0 0.0
    %2985 = vmatpush.msra.mxu0 %v2962
    %2986 = vmatpush.msra.mxu0 %v2960
    %2987 = vmatmul.f32.gmra.mxu0 %v2966
    %v2988 = vpop.f32.mrf.mxu0
    %v2989 = vadd.f32 0.0, %v2988
    %2990 = vmatmul.f32.gmra.mxu0 %v2969
    %v2991 = vpop.f32.mrf.mxu0
    %v2992 = vadd.f32 0.0, %v2991
    %2993 = vdwg.mxu0
    %2994 = vrot.lane.b32.xlu0 %v2198, 48
    %v2995 = vpop.permute.xlu0 %2994
    %2996 = vrot.lane.b32.xlu0 %v2199, 48
    %v2997 = vpop.permute.xlu0 %2996
    %v3001 = vsel %vm391, %v2763, 0
    %v3004 = vsel %vm391, %v2778, 0
    %3006 = vmatpush.msra.mxu0 0.0
    %3007 = vmatpush.msra.mxu0 0.0
    %3008 = vmatpush.msra.mxu0 0.0
    %3009 = vmatpush.msra.mxu0 0.0
    %3010 = vmatpush.msra.mxu0 0.0
    %3011 = vmatpush.msra.mxu0 0.0
    %3012 = vmatpush.msra.mxu0 0.0
    %3013 = vmatpush.msra.mxu0 0.0
    %3014 = vmatpush.msra.mxu0 0.0
    %3015 = vmatpush.msra.mxu0 0.0
    %3016 = vmatpush.msra.mxu0 0.0
    %3017 = vmatpush.msra.mxu0 0.0
    %3018 = vmatpush.msra.mxu0 0.0
    %3019 = vmatpush.msra.mxu0 0.0
    %3020 = vmatpush.msra.mxu0 %v2997
    %3021 = vmatpush.msra.mxu0 %v2995
    %3022 = vmatmul.f32.gmra.mxu0 %v3001
    %v3023 = vpop.f32.mrf.mxu0
    %v3024 = vadd.f32 0.0, %v3023
    %3025 = vmatmul.f32.gmra.mxu0 %v3004
    %v3026 = vpop.f32.mrf.mxu0
    %v3027 = vadd.f32 0.0, %v3026
    %3028 = vdwg.mxu0
    %3029 = vrot.lane.b32.xlu0 %v2200, 48
    %v3030 = vpop.permute.xlu0 %3029
    %3031 = vrot.lane.b32.xlu0 %v2201, 48
    %v3032 = vpop.permute.xlu0 %3031
    %v3036 = vsel %vm391, %v2793, 0
    %v3039 = vsel %vm391, %v2808, 0
    %3041 = vmatpush.msra.mxu0 0.0
    %3042 = vmatpush.msra.mxu0 0.0
    %3043 = vmatpush.msra.mxu0 0.0
    %3044 = vmatpush.msra.mxu0 0.0
    %3045 = vmatpush.msra.mxu0 0.0
    %3046 = vmatpush.msra.mxu0 0.0
    %3047 = vmatpush.msra.mxu0 0.0
    %3048 = vmatpush.msra.mxu0 0.0
    %3049 = vmatpush.msra.mxu0 0.0
    %3050 = vmatpush.msra.mxu0 0.0
    %3051 = vmatpush.msra.mxu0 0.0
    %3052 = vmatpush.msra.mxu0 0.0
    %3053 = vmatpush.msra.mxu0 0.0
    %3054 = vmatpush.msra.mxu0 0.0
    %3055 = vmatpush.msra.mxu0 %v3032
    %3056 = vmatpush.msra.mxu0 %v3030
    %3057 = vmatmul.f32.gmra.mxu0 %v3036
    %v3058 = vpop.f32.mrf.mxu0
    %v3059 = vadd.f32 0.0, %v3058
    %3060 = vmatmul.f32.gmra.mxu0 %v3039
    %v3061 = vpop.f32.mrf.mxu0
    %v3062 = vadd.f32 0.0, %v3061
    %3063 = vdwg.mxu0
    %3064 = vrot.lane.b32.xlu0 %v2202, 48
    %v3065 = vpop.permute.xlu0 %3064
    %3066 = vrot.lane.b32.xlu0 %v2203, 48
    %v3067 = vpop.permute.xlu0 %3066
    %v3071 = vsel %vm391, %v2823, 0
    %v3074 = vsel %vm391, %v2838, 0
    %3076 = vmatpush.msra.mxu0 0.0
    %3077 = vmatpush.msra.mxu0 0.0
    %3078 = vmatpush.msra.mxu0 0.0
    %3079 = vmatpush.msra.mxu0 0.0
    %3080 = vmatpush.msra.mxu0 0.0
    %3081 = vmatpush.msra.mxu0 0.0
    %3082 = vmatpush.msra.mxu0 0.0
    %3083 = vmatpush.msra.mxu0 0.0
    %3084 = vmatpush.msra.mxu0 0.0
    %3085 = vmatpush.msra.mxu0 0.0
    %3086 = vmatpush.msra.mxu0 0.0
    %3087 = vmatpush.msra.mxu0 0.0
    %3088 = vmatpush.msra.mxu0 0.0
    %3089 = vmatpush.msra.mxu0 0.0
    %3090 = vmatpush.msra.mxu0 %v3067
    %3091 = vmatpush.msra.mxu0 %v3065
    %3092 = vmatmul.f32.gmra.mxu0 %v3071
    %v3093 = vpop.f32.mrf.mxu0
    %v3094 = vadd.f32 0.0, %v3093
    %3095 = vmatmul.f32.gmra.mxu0 %v3074
    %v3096 = vpop.f32.mrf.mxu0
    %v3097 = vadd.f32 0.0, %v3096
    %3098 = vdwg.mxu0
    %3099 = vrot.lane.b32.xlu0 %v2204, 48
    %v3100 = vpop.permute.xlu0 %3099
    %3101 = vrot.lane.b32.xlu0 %v2205, 48
    %v3102 = vpop.permute.xlu0 %3101
    %v3106 = vsel %vm391, %v2853, 0
    %v3109 = vsel %vm391, %v2868, 0
    %3111 = vmatpush.msra.mxu0 0.0
    %3112 = vmatpush.msra.mxu0 0.0
    %3113 = vmatpush.msra.mxu0 0.0
    %3114 = vmatpush.msra.mxu0 0.0
    %3115 = vmatpush.msra.mxu0 0.0
    %3116 = vmatpush.msra.mxu0 0.0
    %3117 = vmatpush.msra.mxu0 0.0
    %3118 = vmatpush.msra.mxu0 0.0
    %3119 = vmatpush.msra.mxu0 0.0
    %3120 = vmatpush.msra.mxu0 0.0
    %3121 = vmatpush.msra.mxu0 0.0
    %3122 = vmatpush.msra.mxu0 0.0
    %3123 = vmatpush.msra.mxu0 0.0
    %3124 = vmatpush.msra.mxu0 0.0
    %3125 = vmatpush.msra.mxu0 %v3102
    %3126 = vmatpush.msra.mxu0 %v3100
    %3127 = vmatmul.f32.gmra.mxu0 %v3106
    %v3128 = vpop.f32.mrf.mxu0
    %v3129 = vadd.f32 0.0, %v3128
    %3130 = vmatmul.f32.gmra.mxu0 %v3109
    %v3131 = vpop.f32.mrf.mxu0
    %v3132 = vadd.f32 0.0, %v3131
    %3133 = vdwg.mxu0
    %3134 = vrot.lane.b32.xlu0 %v2206, 48
    %v3135 = vpop.permute.xlu0 %3134
    %3136 = vrot.lane.b32.xlu0 %v2207, 48
    %v3137 = vpop.permute.xlu0 %3136
    %v3141 = vsel %vm391, %v2883, 0
    %v3144 = vsel %vm391, %v2898, 0
    %3146 = vmatpush.msra.mxu0 0.0
    %3147 = vmatpush.msra.mxu0 0.0
    %3148 = vmatpush.msra.mxu0 0.0
    %3149 = vmatpush.msra.mxu0 0.0
    %3150 = vmatpush.msra.mxu0 0.0
    %3151 = vmatpush.msra.mxu0 0.0
    %3152 = vmatpush.msra.mxu0 0.0
    %3153 = vmatpush.msra.mxu0 0.0
    %3154 = vmatpush.msra.mxu0 0.0
    %3155 = vmatpush.msra.mxu0 0.0
    %3156 = vmatpush.msra.mxu0 0.0
    %3157 = vmatpush.msra.mxu0 0.0
    %3158 = vmatpush.msra.mxu0 0.0
    %3159 = vmatpush.msra.mxu0 0.0
    %3160 = vmatpush.msra.mxu0 %v3137
    %3161 = vmatpush.msra.mxu0 %v3135
    %3162 = vmatmul.f32.gmra.mxu0 %v3141
    %v3163 = vpop.f32.mrf.mxu0
    %v3164 = vadd.f32 0.0, %v3163
    %3165 = vmatmul.f32.gmra.mxu0 %v3144
    %v3166 = vpop.f32.mrf.mxu0
    %v3167 = vadd.f32 0.0, %v3166
    %3168 = vdwg.mxu0
    %3169 = vrot.lane.b32.xlu0 %v2208, 48
    %v3170 = vpop.permute.xlu0 %3169
    %3171 = vrot.lane.b32.xlu0 %v2209, 48
    %v3172 = vpop.permute.xlu0 %3171
    %v3176 = vsel %vm391, %v2913, 0
    %v3179 = vsel %vm391, %v2928, 0
    %3181 = vmatpush.msra.mxu0 0.0
    %3182 = vmatpush.msra.mxu0 0.0
    %3183 = vmatpush.msra.mxu0 0.0
    %3184 = vmatpush.msra.mxu0 0.0
    %3185 = vmatpush.msra.mxu0 0.0
    %3186 = vmatpush.msra.mxu0 0.0
    %3187 = vmatpush.msra.mxu0 0.0
    %3188 = vmatpush.msra.mxu0 0.0
    %3189 = vmatpush.msra.mxu0 0.0
    %3190 = vmatpush.msra.mxu0 0.0
    %3191 = vmatpush.msra.mxu0 0.0
    %3192 = vmatpush.msra.mxu0 0.0
    %3193 = vmatpush.msra.mxu0 0.0
    %3194 = vmatpush.msra.mxu0 0.0
    %3195 = vmatpush.msra.mxu0 %v3172
    %3196 = vmatpush.msra.mxu0 %v3170
    %3197 = vmatmul.f32.gmra.mxu0 %v3176
    %v3198 = vpop.f32.mrf.mxu0
    %v3199 = vadd.f32 0.0, %v3198
    %3200 = vmatmul.f32.gmra.mxu0 %v3179
    %v3201 = vpop.f32.mrf.mxu0
    %v3202 = vadd.f32 0.0, %v3201
    %3203 = vdwg.mxu0
    %3204 = vrot.lane.b32.xlu0 %v2210, 48
    %v3205 = vpop.permute.xlu0 %3204
    %3206 = vrot.lane.b32.xlu0 %v2211, 48
    %v3207 = vpop.permute.xlu0 %3206
    %v3211 = vsel %vm391, %v2943, 0
    %v3214 = vsel %vm391, %v2958, 0
    %3216 = vmatpush.msra.mxu0 0.0
    %3217 = vmatpush.msra.mxu0 0.0
    %3218 = vmatpush.msra.mxu0 0.0
    %3219 = vmatpush.msra.mxu0 0.0
    %3220 = vmatpush.msra.mxu0 0.0
    %3221 = vmatpush.msra.mxu0 0.0
    %3222 = vmatpush.msra.mxu0 0.0
    %3223 = vmatpush.msra.mxu0 0.0
    %3224 = vmatpush.msra.mxu0 0.0
    %3225 = vmatpush.msra.mxu0 0.0
    %3226 = vmatpush.msra.mxu0 0.0
    %3227 = vmatpush.msra.mxu0 0.0
    %3228 = vmatpush.msra.mxu0 0.0
    %3229 = vmatpush.msra.mxu0 0.0
    %3230 = vmatpush.msra.mxu0 %v3207
    %3231 = vmatpush.msra.mxu0 %v3205
    %3232 = vmatmul.f32.gmra.mxu0 %v3211
    %v3233 = vpop.f32.mrf.mxu0
    %v3234 = vadd.f32 0.0, %v3233
    %3235 = vmatmul.f32.gmra.mxu0 %v3214
    %v3236 = vpop.f32.mrf.mxu0
    %v3237 = vadd.f32 0.0, %v3236
    %3238 = vdwg.mxu0
    %3255 = vrot.lane.b32.xlu0 %v2989, 16
    %v3256 = vpop.permute.xlu0 %3255
    %3257 = vrot.lane.b32.xlu0 %v2992, 16
    %v3258 = vpop.permute.xlu0 %3257
    %3259 = vrot.lane.b32.xlu0 %v3024, 16
    %v3260 = vpop.permute.xlu0 %3259
    %3261 = vrot.lane.b32.xlu0 %v3027, 16
    %v3262 = vpop.permute.xlu0 %3261
    %3263 = vrot.lane.b32.xlu0 %v3059, 16
    %v3264 = vpop.permute.xlu0 %3263
    %3265 = vrot.lane.b32.xlu0 %v3062, 16
    %v3266 = vpop.permute.xlu0 %3265
    %3267 = vrot.lane.b32.xlu0 %v3094, 16
    %v3268 = vpop.permute.xlu0 %3267
    %3269 = vrot.lane.b32.xlu0 %v3097, 16
    %v3270 = vpop.permute.xlu0 %3269
    %3271 = vrot.lane.b32.xlu0 %v3129, 16
    %v3272 = vpop.permute.xlu0 %3271
    %3273 = vrot.lane.b32.xlu0 %v3132, 16
    %v3274 = vpop.permute.xlu0 %3273
    %3275 = vrot.lane.b32.xlu0 %v3164, 16
    %v3276 = vpop.permute.xlu0 %3275
    %3277 = vrot.lane.b32.xlu0 %v3167, 16
    %v3278 = vpop.permute.xlu0 %3277
    %3279 = vrot.lane.b32.xlu0 %v3199, 16
    %v3280 = vpop.permute.xlu0 %3279
    %3281 = vrot.lane.b32.xlu0 %v3202, 16
    %v3282 = vpop.permute.xlu0 %3281
    %3283 = vrot.lane.b32.xlu0 %v3234, 16
    %v3284 = vpop.permute.xlu0 %3283
    %3285 = vrot.lane.b32.xlu0 %v3237, 16
    %v3286 = vpop.permute.xlu0 %3285
    %vm3303 = vcmask 195712
    %3304 = vst.msk [vmem:[#allocation2] sm:$0xff] %vm3303, %v3256
    %3305 = vst.msk [vmem:[#allocation2 + $0x8] sm:$0xff] %vm3303, %v3258
    %3306 = vst.msk [vmem:[#allocation2 + $0x10] sm:$0xff] %vm3303, %v3260
    %3307 = vst.msk [vmem:[#allocation2 + $0x18] sm:$0xff] %vm3303, %v3262
    %3308 = vst.msk [vmem:[#allocation2 + $0x20] sm:$0xff] %vm3303, %v3264
    %3309 = vst.msk [vmem:[#allocation2 + $0x28] sm:$0xff] %vm3303, %v3266
    %3310 = vst.msk [vmem:[#allocation2 + $0x30] sm:$0xff] %vm3303, %v3268
    %3311 = vst.msk [vmem:[#allocation2 + $0x38] sm:$0xff] %vm3303, %v3270
    %3312 = vst.msk [vmem:[#allocation2 + $0x40] sm:$0xff] %vm3303, %v3272
    %3313 = vst.msk [vmem:[#allocation2 + $0x48] sm:$0xff] %vm3303, %v3274
    %3314 = vst.msk [vmem:[#allocation2 + $0x50] sm:$0xff] %vm3303, %v3276
    %3315 = vst.msk [vmem:[#allocation2 + $0x58] sm:$0xff] %vm3303, %v3278
    %3316 = vst.msk [vmem:[#allocation2 + $0x60] sm:$0xff] %vm3303, %v3280
    %3317 = vst.msk [vmem:[#allocation2 + $0x68] sm:$0xff] %vm3303, %v3282
    %3318 = vst.msk [vmem:[#allocation2 + $0x70] sm:$0xff] %vm3303, %v3284
    %3319 = vst.msk [vmem:[#allocation2 + $0x78] sm:$0xff] %vm3303, %v3286
    %v3320 = vld [vmem:[#allocation3] sm:$0xff]
    %v3321 = vld [vmem:[#allocation3 + $0x8] sm:$0xff]
    %v3322 = vld [vmem:[#allocation3 + $0x10] sm:$0xff]
    %v3323 = vld [vmem:[#allocation3 + $0x18] sm:$0xff]
    %v3324 = vld [vmem:[#allocation3 + $0x20] sm:$0xff]
    %v3325 = vld [vmem:[#allocation3 + $0x28] sm:$0xff]
    %v3326 = vld [vmem:[#allocation3 + $0x30] sm:$0xff]
    %v3327 = vld [vmem:[#allocation3 + $0x38] sm:$0xff]
    %v3328 = vld [vmem:[#allocation3 + $0x40] sm:$0xff]
    %v3329 = vld [vmem:[#allocation3 + $0x48] sm:$0xff]
    %v3330 = vld [vmem:[#allocation3 + $0x50] sm:$0xff]
    %v3331 = vld [vmem:[#allocation3 + $0x58] sm:$0xff]
    %v3332 = vld [vmem:[#allocation3 + $0x60] sm:$0xff]
    %v3333 = vld [vmem:[#allocation3 + $0x68] sm:$0xff]
    %v3334 = vld [vmem:[#allocation3 + $0x70] sm:$0xff]
    %v3335 = vld [vmem:[#allocation3 + $0x78] sm:$0xff]
    %v3336 = vmul.f32 %v3320, 0.5
    %v3337 = vmul.f32 %v3321, 0.5
    %v3338 = vmul.f32 %v3322, 0.5
    %v3339 = vmul.f32 %v3323, 0.5
    %v3340 = vmul.f32 %v3324, 0.5
    %v3341 = vmul.f32 %v3325, 0.5
    %v3342 = vmul.f32 %v3326, 0.5
    %v3343 = vmul.f32 %v3327, 0.5
    %v3344 = vmul.f32 %v3328, 0.5
    %v3345 = vmul.f32 %v3329, 0.5
    %v3346 = vmul.f32 %v3330, 0.5
    %v3347 = vmul.f32 %v3331, 0.5
    %v3348 = vmul.f32 %v3332, 0.5
    %v3349 = vmul.f32 %v3333, 0.5
    %v3350 = vmul.f32 %v3334, 0.5
    %v3351 = vmul.f32 %v3335, 0.5
    %s3352 = scalar_lea.vmem [#allocation6], 48
    %v3353 = vld [vmem:[%s3352] sm:$0xff]
    %v3354 = vld [vmem:[%s3352 + $0x8] sm:$0xff]
    %3357 = vrot.lane.b32.xlu0 %v3336, 104
    %v3358 = vpop.permute.xlu0 %3357
    %3359 = vrot.lane.b32.xlu0 %v3337, 104
    %v3360 = vpop.permute.xlu0 %3359
    %3363 = vrot.lane.b32.xlu0 %v3320, 72
    %v3364 = vpop.permute.xlu0 %3363
    %3365 = vrot.lane.b32.xlu0 %v3321, 72
    %v3366 = vpop.permute.xlu0 %3365
    %v3367 = vsel %vm84, %v3358, 0
    %v3369 = vsel %vm84, %v3360, 0
    %v3371 = vsel %vm84, %v3364, 0
    %v3373 = vsel %vm84, %v3366, 0
    %3375 = vmatpush.xpose.msra.mxu0 0.0
    %3376 = vmatpush.xpose.msra.mxu0 0.0
    %3377 = vmatpush.xpose.msra.mxu0 0.0
    %3378 = vmatpush.xpose.msra.mxu0 0.0
    %3379 = vmatpush.xpose.msra.mxu0 0.0
    %3380 = vmatpush.xpose.msra.mxu0 0.0
    %3381 = vmatpush.xpose.msra.mxu0 0.0
    %3382 = vmatpush.xpose.msra.mxu0 0.0
    %3383 = vmatpush.xpose.msra.mxu0 0.0
    %3384 = vmatpush.xpose.msra.mxu0 0.0
    %3385 = vmatpush.xpose.msra.mxu0 0.0
    %3386 = vmatpush.xpose.msra.mxu0 0.0
    %3387 = vmatpush.xpose.msra.mxu0 0.0
    %3388 = vmatpush.xpose.msra.mxu0 0.0
    %3389 = vmatpush.xpose.msra.mxu0 %v3373
    %3390 = vmatpush.xpose.msra.mxu0 %v3371
    %3391 = vmatmul.f32.gmra.mxu0 %v3367
    %v3392 = vpop.f32.mrf.mxu0
    %v3393 = vadd.f32 %v3353, %v3392
    %3394 = vmatmul.f32.gmra.mxu0 %v3369
    %v3395 = vpop.f32.mrf.mxu0
    %v3396 = vadd.f32 %v3354, %v3395
    %3397 = vdwg.mxu0
    %3400 = vrot.lane.b32.xlu0 %v3338, 104
    %v3401 = vpop.permute.xlu0 %3400
    %3402 = vrot.lane.b32.xlu0 %v3339, 104
    %v3403 = vpop.permute.xlu0 %3402
    %3406 = vrot.lane.b32.xlu0 %v3322, 72
    %v3407 = vpop.permute.xlu0 %3406
    %3408 = vrot.lane.b32.xlu0 %v3323, 72
    %v3409 = vpop.permute.xlu0 %3408
    %v3410 = vsel %vm84, %v3401, 0
    %v3412 = vsel %vm84, %v3403, 0
    %v3414 = vsel %vm84, %v3407, 0
    %v3416 = vsel %vm84, %v3409, 0
    %3418 = vmatpush.xpose.msra.mxu0 0.0
    %3419 = vmatpush.xpose.msra.mxu0 0.0
    %3420 = vmatpush.xpose.msra.mxu0 0.0
    %3421 = vmatpush.xpose.msra.mxu0 0.0
    %3422 = vmatpush.xpose.msra.mxu0 0.0
    %3423 = vmatpush.xpose.msra.mxu0 0.0
    %3424 = vmatpush.xpose.msra.mxu0 0.0
    %3425 = vmatpush.xpose.msra.mxu0 0.0
    %3426 = vmatpush.xpose.msra.mxu0 0.0
    %3427 = vmatpush.xpose.msra.mxu0 0.0
    %3428 = vmatpush.xpose.msra.mxu0 0.0
    %3429 = vmatpush.xpose.msra.mxu0 0.0
    %3430 = vmatpush.xpose.msra.mxu0 0.0
    %3431 = vmatpush.xpose.msra.mxu0 0.0
    %3432 = vmatpush.xpose.msra.mxu0 %v3416
    %3433 = vmatpush.xpose.msra.mxu0 %v3414
    %3434 = vmatmul.f32.gmra.mxu0 %v3410
    %v3435 = vpop.f32.mrf.mxu0
    %v3436 = vadd.f32 %v3353, %v3435
    %3437 = vmatmul.f32.gmra.mxu0 %v3412
    %v3438 = vpop.f32.mrf.mxu0
    %v3439 = vadd.f32 %v3354, %v3438
    %3440 = vdwg.mxu0
    %3443 = vrot.lane.b32.xlu0 %v3340, 104
    %v3444 = vpop.permute.xlu0 %3443
    %3445 = vrot.lane.b32.xlu0 %v3341, 104
    %v3446 = vpop.permute.xlu0 %3445
    %3449 = vrot.lane.b32.xlu0 %v3324, 72
    %v3450 = vpop.permute.xlu0 %3449
    %3451 = vrot.lane.b32.xlu0 %v3325, 72
    %v3452 = vpop.permute.xlu0 %3451
    %v3453 = vsel %vm84, %v3444, 0
    %v3455 = vsel %vm84, %v3446, 0
    %v3457 = vsel %vm84, %v3450, 0
    %v3459 = vsel %vm84, %v3452, 0
    %3461 = vmatpush.xpose.msra.mxu0 0.0
    %3462 = vmatpush.xpose.msra.mxu0 0.0
    %3463 = vmatpush.xpose.msra.mxu0 0.0
    %3464 = vmatpush.xpose.msra.mxu0 0.0
    %3465 = vmatpush.xpose.msra.mxu0 0.0
    %3466 = vmatpush.xpose.msra.mxu0 0.0
    %3467 = vmatpush.xpose.msra.mxu0 0.0
    %3468 = vmatpush.xpose.msra.mxu0 0.0
    %3469 = vmatpush.xpose.msra.mxu0 0.0
    %3470 = vmatpush.xpose.msra.mxu0 0.0
    %3471 = vmatpush.xpose.msra.mxu0 0.0
    %3472 = vmatpush.xpose.msra.mxu0 0.0
    %3473 = vmatpush.xpose.msra.mxu0 0.0
    %3474 = vmatpush.xpose.msra.mxu0 0.0
    %3475 = vmatpush.xpose.msra.mxu0 %v3459
    %3476 = vmatpush.xpose.msra.mxu0 %v3457
    %3477 = vmatmul.f32.gmra.mxu0 %v3453
    %v3478 = vpop.f32.mrf.mxu0
    %v3479 = vadd.f32 %v3353, %v3478
    %3480 = vmatmul.f32.gmra.mxu0 %v3455
    %v3481 = vpop.f32.mrf.mxu0
    %v3482 = vadd.f32 %v3354, %v3481
    %3483 = vdwg.mxu0
    %3486 = vrot.lane.b32.xlu0 %v3342, 104
    %v3487 = vpop.permute.xlu0 %3486
    %3488 = vrot.lane.b32.xlu0 %v3343, 104
    %v3489 = vpop.permute.xlu0 %3488
    %3492 = vrot.lane.b32.xlu0 %v3326, 72
    %v3493 = vpop.permute.xlu0 %3492
    %3494 = vrot.lane.b32.xlu0 %v3327, 72
    %v3495 = vpop.permute.xlu0 %3494
    %v3496 = vsel %vm84, %v3487, 0
    %v3498 = vsel %vm84, %v3489, 0
    %v3500 = vsel %vm84, %v3493, 0
    %v3502 = vsel %vm84, %v3495, 0
    %3504 = vmatpush.xpose.msra.mxu0 0.0
    %3505 = vmatpush.xpose.msra.mxu0 0.0
    %3506 = vmatpush.xpose.msra.mxu0 0.0
    %3507 = vmatpush.xpose.msra.mxu0 0.0
    %3508 = vmatpush.xpose.msra.mxu0 0.0
    %3509 = vmatpush.xpose.msra.mxu0 0.0
    %3510 = vmatpush.xpose.msra.mxu0 0.0
    %3511 = vmatpush.xpose.msra.mxu0 0.0
    %3512 = vmatpush.xpose.msra.mxu0 0.0
    %3513 = vmatpush.xpose.msra.mxu0 0.0
    %3514 = vmatpush.xpose.msra.mxu0 0.0
    %3515 = vmatpush.xpose.msra.mxu0 0.0
    %3516 = vmatpush.xpose.msra.mxu0 0.0
    %3517 = vmatpush.xpose.msra.mxu0 0.0
    %3518 = vmatpush.xpose.msra.mxu0 %v3502
    %3519 = vmatpush.xpose.msra.mxu0 %v3500
    %3520 = vmatmul.f32.gmra.mxu0 %v3496
    %v3521 = vpop.f32.mrf.mxu0
    %v3522 = vadd.f32 %v3353, %v3521
    %3523 = vmatmul.f32.gmra.mxu0 %v3498
    %v3524 = vpop.f32.mrf.mxu0
    %v3525 = vadd.f32 %v3354, %v3524
    %3526 = vdwg.mxu0
    %3529 = vrot.lane.b32.xlu0 %v3344, 104
    %v3530 = vpop.permute.xlu0 %3529
    %3531 = vrot.lane.b32.xlu0 %v3345, 104
    %v3532 = vpop.permute.xlu0 %3531
    %3535 = vrot.lane.b32.xlu0 %v3328, 72
    %v3536 = vpop.permute.xlu0 %3535
    %3537 = vrot.lane.b32.xlu0 %v3329, 72
    %v3538 = vpop.permute.xlu0 %3537
    %v3539 = vsel %vm84, %v3530, 0
    %v3541 = vsel %vm84, %v3532, 0
    %v3543 = vsel %vm84, %v3536, 0
    %v3545 = vsel %vm84, %v3538, 0
    %3547 = vmatpush.xpose.msra.mxu0 0.0
    %3548 = vmatpush.xpose.msra.mxu0 0.0
    %3549 = vmatpush.xpose.msra.mxu0 0.0
    %3550 = vmatpush.xpose.msra.mxu0 0.0
    %3551 = vmatpush.xpose.msra.mxu0 0.0
    %3552 = vmatpush.xpose.msra.mxu0 0.0
    %3553 = vmatpush.xpose.msra.mxu0 0.0
    %3554 = vmatpush.xpose.msra.mxu0 0.0
    %3555 = vmatpush.xpose.msra.mxu0 0.0
    %3556 = vmatpush.xpose.msra.mxu0 0.0
    %3557 = vmatpush.xpose.msra.mxu0 0.0
    %3558 = vmatpush.xpose.msra.mxu0 0.0
    %3559 = vmatpush.xpose.msra.mxu0 0.0
    %3560 = vmatpush.xpose.msra.mxu0 0.0
    %3561 = vmatpush.xpose.msra.mxu0 %v3545
    %3562 = vmatpush.xpose.msra.mxu0 %v3543
    %3563 = vmatmul.f32.gmra.mxu0 %v3539
    %v3564 = vpop.f32.mrf.mxu0
    %v3565 = vadd.f32 %v3353, %v3564
    %3566 = vmatmul.f32.gmra.mxu0 %v3541
    %v3567 = vpop.f32.mrf.mxu0
    %v3568 = vadd.f32 %v3354, %v3567
    %3569 = vdwg.mxu0
    %3572 = vrot.lane.b32.xlu0 %v3346, 104
    %v3573 = vpop.permute.xlu0 %3572
    %3574 = vrot.lane.b32.xlu0 %v3347, 104
    %v3575 = vpop.permute.xlu0 %3574
    %3578 = vrot.lane.b32.xlu0 %v3330, 72
    %v3579 = vpop.permute.xlu0 %3578
    %3580 = vrot.lane.b32.xlu0 %v3331, 72
    %v3581 = vpop.permute.xlu0 %3580
    %v3582 = vsel %vm84, %v3573, 0
    %v3584 = vsel %vm84, %v3575, 0
    %v3586 = vsel %vm84, %v3579, 0
    %v3588 = vsel %vm84, %v3581, 0
    %3590 = vmatpush.xpose.msra.mxu0 0.0
    %3591 = vmatpush.xpose.msra.mxu0 0.0
    %3592 = vmatpush.xpose.msra.mxu0 0.0
    %3593 = vmatpush.xpose.msra.mxu0 0.0
    %3594 = vmatpush.xpose.msra.mxu0 0.0
    %3595 = vmatpush.xpose.msra.mxu0 0.0
    %3596 = vmatpush.xpose.msra.mxu0 0.0
    %3597 = vmatpush.xpose.msra.mxu0 0.0
    %3598 = vmatpush.xpose.msra.mxu0 0.0
    %3599 = vmatpush.xpose.msra.mxu0 0.0
    %3600 = vmatpush.xpose.msra.mxu0 0.0
    %3601 = vmatpush.xpose.msra.mxu0 0.0
    %3602 = vmatpush.xpose.msra.mxu0 0.0
    %3603 = vmatpush.xpose.msra.mxu0 0.0
    %3604 = vmatpush.xpose.msra.mxu0 %v3588
    %3605 = vmatpush.xpose.msra.mxu0 %v3586
    %3606 = vmatmul.f32.gmra.mxu0 %v3582
    %v3607 = vpop.f32.mrf.mxu0
    %v3608 = vadd.f32 %v3353, %v3607
    %3609 = vmatmul.f32.gmra.mxu0 %v3584
    %v3610 = vpop.f32.mrf.mxu0
    %v3611 = vadd.f32 %v3354, %v3610
    %3612 = vdwg.mxu0
    %3615 = vrot.lane.b32.xlu0 %v3348, 104
    %v3616 = vpop.permute.xlu0 %3615
    %3617 = vrot.lane.b32.xlu0 %v3349, 104
    %v3618 = vpop.permute.xlu0 %3617
    %3621 = vrot.lane.b32.xlu0 %v3332, 72
    %v3622 = vpop.permute.xlu0 %3621
    %3623 = vrot.lane.b32.xlu0 %v3333, 72
    %v3624 = vpop.permute.xlu0 %3623
    %v3625 = vsel %vm84, %v3616, 0
    %v3627 = vsel %vm84, %v3618, 0
    %v3629 = vsel %vm84, %v3622, 0
    %v3631 = vsel %vm84, %v3624, 0
    %3633 = vmatpush.xpose.msra.mxu0 0.0
    %3634 = vmatpush.xpose.msra.mxu0 0.0
    %3635 = vmatpush.xpose.msra.mxu0 0.0
    %3636 = vmatpush.xpose.msra.mxu0 0.0
    %3637 = vmatpush.xpose.msra.mxu0 0.0
    %3638 = vmatpush.xpose.msra.mxu0 0.0
    %3639 = vmatpush.xpose.msra.mxu0 0.0
    %3640 = vmatpush.xpose.msra.mxu0 0.0
    %3641 = vmatpush.xpose.msra.mxu0 0.0
    %3642 = vmatpush.xpose.msra.mxu0 0.0
    %3643 = vmatpush.xpose.msra.mxu0 0.0
    %3644 = vmatpush.xpose.msra.mxu0 0.0
    %3645 = vmatpush.xpose.msra.mxu0 0.0
    %3646 = vmatpush.xpose.msra.mxu0 0.0
    %3647 = vmatpush.xpose.msra.mxu0 %v3631
    %3648 = vmatpush.xpose.msra.mxu0 %v3629
    %3649 = vmatmul.f32.gmra.mxu0 %v3625
    %v3650 = vpop.f32.mrf.mxu0
    %v3651 = vadd.f32 %v3353, %v3650
    %3652 = vmatmul.f32.gmra.mxu0 %v3627
    %v3653 = vpop.f32.mrf.mxu0
    %v3654 = vadd.f32 %v3354, %v3653
    %3655 = vdwg.mxu0
    %3658 = vrot.lane.b32.xlu0 %v3350, 104
    %v3659 = vpop.permute.xlu0 %3658
    %3660 = vrot.lane.b32.xlu0 %v3351, 104
    %v3661 = vpop.permute.xlu0 %3660
    %3664 = vrot.lane.b32.xlu0 %v3334, 72
    %v3665 = vpop.permute.xlu0 %3664
    %3666 = vrot.lane.b32.xlu0 %v3335, 72
    %v3667 = vpop.permute.xlu0 %3666
    %v3668 = vsel %vm84, %v3659, 0
    %v3670 = vsel %vm84, %v3661, 0
    %v3672 = vsel %vm84, %v3665, 0
    %v3674 = vsel %vm84, %v3667, 0
    %3676 = vmatpush.xpose.msra.mxu0 0.0
    %3677 = vmatpush.xpose.msra.mxu0 0.0
    %3678 = vmatpush.xpose.msra.mxu0 0.0
    %3679 = vmatpush.xpose.msra.mxu0 0.0
    %3680 = vmatpush.xpose.msra.mxu0 0.0
    %3681 = vmatpush.xpose.msra.mxu0 0.0
    %3682 = vmatpush.xpose.msra.mxu0 0.0
    %3683 = vmatpush.xpose.msra.mxu0 0.0
    %3684 = vmatpush.xpose.msra.mxu0 0.0
    %3685 = vmatpush.xpose.msra.mxu0 0.0
    %3686 = vmatpush.xpose.msra.mxu0 0.0
    %3687 = vmatpush.xpose.msra.mxu0 0.0
    %3688 = vmatpush.xpose.msra.mxu0 0.0
    %3689 = vmatpush.xpose.msra.mxu0 0.0
    %3690 = vmatpush.xpose.msra.mxu0 %v3674
    %3691 = vmatpush.xpose.msra.mxu0 %v3672
    %3692 = vmatmul.f32.gmra.mxu0 %v3668
    %v3693 = vpop.f32.mrf.mxu0
    %v3694 = vadd.f32 %v3353, %v3693
    %3695 = vmatmul.f32.gmra.mxu0 %v3670
    %v3696 = vpop.f32.mrf.mxu0
    %v3697 = vadd.f32 %v3354, %v3696
    %3698 = vdwg.mxu0
    %v3699 = vsel %vm391, %v3393, -inf
    %3700 = vmax.xlane.f32.xlu0 %v3699
    %v3701 = vpop.xlane.xlu0 %3700
    %v3702 = vsel %vm391, %v3396, -inf
    %3703 = vmax.xlane.f32.xlu0 %v3702
    %v3704 = vpop.xlane.xlu0 %3703
    %v3705 = vsel %vm391, %v3436, -inf
    %3706 = vmax.xlane.f32.xlu0 %v3705
    %v3707 = vpop.xlane.xlu0 %3706
    %v3708 = vsel %vm391, %v3439, -inf
    %3709 = vmax.xlane.f32.xlu0 %v3708
    %v3710 = vpop.xlane.xlu0 %3709
    %v3711 = vsel %vm391, %v3479, -inf
    %3712 = vmax.xlane.f32.xlu0 %v3711
    %v3713 = vpop.xlane.xlu0 %3712
    %v3714 = vsel %vm391, %v3482, -inf
    %3715 = vmax.xlane.f32.xlu0 %v3714
    %v3716 = vpop.xlane.xlu0 %3715
    %v3717 = vsel %vm391, %v3522, -inf
    %3718 = vmax.xlane.f32.xlu0 %v3717
    %v3719 = vpop.xlane.xlu0 %3718
    %v3720 = vsel %vm391, %v3525, -inf
    %3721 = vmax.xlane.f32.xlu0 %v3720
    %v3722 = vpop.xlane.xlu0 %3721
    %v3723 = vsel %vm391, %v3565, -inf
    %3724 = vmax.xlane.f32.xlu0 %v3723
    %v3725 = vpop.xlane.xlu0 %3724
    %v3726 = vsel %vm391, %v3568, -inf
    %3727 = vmax.xlane.f32.xlu0 %v3726
    %v3728 = vpop.xlane.xlu0 %3727
    %v3729 = vsel %vm391, %v3608, -inf
    %3730 = vmax.xlane.f32.xlu0 %v3729
    %v3731 = vpop.xlane.xlu0 %3730
    %v3732 = vsel %vm391, %v3611, -inf
    %3733 = vmax.xlane.f32.xlu0 %v3732
    %v3734 = vpop.xlane.xlu0 %3733
    %v3735 = vsel %vm391, %v3651, -inf
    %3736 = vmax.xlane.f32.xlu0 %v3735
    %v3737 = vpop.xlane.xlu0 %3736
    %v3738 = vsel %vm391, %v3654, -inf
    %3739 = vmax.xlane.f32.xlu0 %v3738
    %v3740 = vpop.xlane.xlu0 %3739
    %v3741 = vsel %vm391, %v3694, -inf
    %3742 = vmax.xlane.f32.xlu0 %v3741
    %v3743 = vpop.xlane.xlu0 %3742
    %v3744 = vsel %vm391, %v3697, -inf
    %3745 = vmax.xlane.f32.xlu0 %v3744
    %v3746 = vpop.xlane.xlu0 %3745
    %v3747 = vsub.f32 %v3393, %v3701
    %v3748 = vsub.f32 %v3396, %v3704
    %v3749 = vsub.f32 %v3436, %v3707
    %v3750 = vsub.f32 %v3439, %v3710
    %v3751 = vsub.f32 %v3479, %v3713
    %v3752 = vsub.f32 %v3482, %v3716
    %v3753 = vsub.f32 %v3522, %v3719
    %v3754 = vsub.f32 %v3525, %v3722
    %v3755 = vsub.f32 %v3565, %v3725
    %v3756 = vsub.f32 %v3568, %v3728
    %v3757 = vsub.f32 %v3608, %v3731
    %v3758 = vsub.f32 %v3611, %v3734
    %v3759 = vsub.f32 %v3651, %v3737
    %v3760 = vsub.f32 %v3654, %v3740
    %v3761 = vsub.f32 %v3694, %v3743
    %v3762 = vsub.f32 %v3697, %v3746
    %v3763 = vmul.f32 %v3747, 1.442695
    %v3764 = vpow.pop %v3763
    %v3765 = vmul.f32 %v3748, 1.442695
    %v3766 = vpow.pop %v3765
    %v3767 = vmul.f32 %v3749, 1.442695
    %v3768 = vpow.pop %v3767
    %v3769 = vmul.f32 %v3750, 1.442695
    %v3770 = vpow.pop %v3769
    %v3771 = vmul.f32 %v3751, 1.442695
    %v3772 = vpow.pop %v3771
    %v3773 = vmul.f32 %v3752, 1.442695
    %v3774 = vpow.pop %v3773
    %v3775 = vmul.f32 %v3753, 1.442695
    %v3776 = vpow.pop %v3775
    %v3777 = vmul.f32 %v3754, 1.442695
    %v3778 = vpow.pop %v3777
    %v3779 = vmul.f32 %v3755, 1.442695
    %v3780 = vpow.pop %v3779
    %v3781 = vmul.f32 %v3756, 1.442695
    %v3782 = vpow.pop %v3781
    %v3783 = vmul.f32 %v3757, 1.442695
    %v3784 = vpow.pop %v3783
    %v3785 = vmul.f32 %v3758, 1.442695
    %v3786 = vpow.pop %v3785
    %v3787 = vmul.f32 %v3759, 1.442695
    %v3788 = vpow.pop %v3787
    %v3789 = vmul.f32 %v3760, 1.442695
    %v3790 = vpow.pop %v3789
    %v3791 = vmul.f32 %v3761, 1.442695
    %v3792 = vpow.pop %v3791
    %v3793 = vmul.f32 %v3762, 1.442695
    %v3794 = vpow.pop %v3793
    %v3795 = vsel %vm391, %v3764, 0.0
    %3796 = vadd.xlane.f32.xlu0 %v3795
    %v3797 = vpop.xlane.xlu0 %3796
    %v3798 = vsel %vm391, %v3766, 0.0
    %3799 = vadd.xlane.f32.xlu0 %v3798
    %v3800 = vpop.xlane.xlu0 %3799
    %v3801 = vsel %vm391, %v3768, 0.0
    %3802 = vadd.xlane.f32.xlu0 %v3801
    %v3803 = vpop.xlane.xlu0 %3802
    %v3804 = vsel %vm391, %v3770, 0.0
    %3805 = vadd.xlane.f32.xlu0 %v3804
    %v3806 = vpop.xlane.xlu0 %3805
    %v3807 = vsel %vm391, %v3772, 0.0
    %3808 = vadd.xlane.f32.xlu0 %v3807
    %v3809 = vpop.xlane.xlu0 %3808
    %v3810 = vsel %vm391, %v3774, 0.0
    %3811 = vadd.xlane.f32.xlu0 %v3810
    %v3812 = vpop.xlane.xlu0 %3811
    %v3813 = vsel %vm391, %v3776, 0.0
    %3814 = vadd.xlane.f32.xlu0 %v3813
    %v3815 = vpop.xlane.xlu0 %3814
    %v3816 = vsel %vm391, %v3778, 0.0
    %3817 = vadd.xlane.f32.xlu0 %v3816
    %v3818 = vpop.xlane.xlu0 %3817
    %v3819 = vsel %vm391, %v3780, 0.0
    %3820 = vadd.xlane.f32.xlu0 %v3819
    %v3821 = vpop.xlane.xlu0 %3820
    %v3822 = vsel %vm391, %v3782, 0.0
    %3823 = vadd.xlane.f32.xlu0 %v3822
    %v3824 = vpop.xlane.xlu0 %3823
    %v3825 = vsel %vm391, %v3784, 0.0
    %3826 = vadd.xlane.f32.xlu0 %v3825
    %v3827 = vpop.xlane.xlu0 %3826
    %v3828 = vsel %vm391, %v3786, 0.0
    %3829 = vadd.xlane.f32.xlu0 %v3828
    %v3830 = vpop.xlane.xlu0 %3829
    %v3831 = vsel %vm391, %v3788, 0.0
    %3832 = vadd.xlane.f32.xlu0 %v3831
    %v3833 = vpop.xlane.xlu0 %3832
    %v3834 = vsel %vm391, %v3790, 0.0
    %3835 = vadd.xlane.f32.xlu0 %v3834
    %v3836 = vpop.xlane.xlu0 %3835
    %v3837 = vsel %vm391, %v3792, 0.0
    %3838 = vadd.xlane.f32.xlu0 %v3837
    %v3839 = vpop.xlane.xlu0 %3838
    %v3840 = vsel %vm391, %v3794, 0.0
    %3841 = vadd.xlane.f32.xlu0 %v3840
    %v3842 = vpop.xlane.xlu0 %3841
    %v3843 = vrcp.pop %v3797
    %v3844 = vmul.f32 %v3797, %v3843
    %v3845 = vsub.f32 1.0, %v3844
    %v3846 = vmul.f32 %v3843, %v3845
    %v3847 = vadd.f32 %v3843, %v3846
    %vm3848 = vweird.f32 %v3797
    %vm3849 = vweird.f32 %v3843
    %vm3850 = vmor %vm3848, %vm3849
    %v3851 = vsel %vm3850, %v3843, %v3847
    %v3852 = vand.u32 2147483647, %v3797
    %vm3853 = vcmp.eq.f32.partialorder %v3852, 8.507059e+37
    %v3854 = vand.u32 %v3797, 2147483648
    %v3855 = vor.u32 1.1754944e-38, %v3854
    %v3856 = vsel %vm3853, %v3855, %v3851
    %v3857 = vmul.f32 %v3764, %v3856
    %v3858 = vrcp.pop %v3800
    %v3859 = vmul.f32 %v3800, %v3858
    %v3860 = vsub.f32 1.0, %v3859
    %v3861 = vmul.f32 %v3858, %v3860
    %v3862 = vadd.f32 %v3858, %v3861
    %vm3863 = vweird.f32 %v3800
    %vm3864 = vweird.f32 %v3858
    %vm3865 = vmor %vm3863, %vm3864
    %v3866 = vsel %vm3865, %v3858, %v3862
    %v3867 = vand.u32 2147483647, %v3800
    %vm3868 = vcmp.eq.f32.partialorder %v3867, 8.507059e+37
    %v3869 = vand.u32 %v3800, 2147483648
    %v3870 = vor.u32 1.1754944e-38, %v3869
    %v3871 = vsel %vm3868, %v3870, %v3866
    %v3872 = vmul.f32 %v3766, %v3871
    %v3873 = vrcp.pop %v3803
    %v3874 = vmul.f32 %v3803, %v3873
    %v3875 = vsub.f32 1.0, %v3874
    %v3876 = vmul.f32 %v3873, %v3875
    %v3877 = vadd.f32 %v3873, %v3876
    %vm3878 = vweird.f32 %v3803
    %vm3879 = vweird.f32 %v3873
    %vm3880 = vmor %vm3878, %vm3879
    %v3881 = vsel %vm3880, %v3873, %v3877
    %v3882 = vand.u32 2147483647, %v3803
    %vm3883 = vcmp.eq.f32.partialorder %v3882, 8.507059e+37
    %v3884 = vand.u32 %v3803, 2147483648
    %v3885 = vor.u32 1.1754944e-38, %v3884
    %v3886 = vsel %vm3883, %v3885, %v3881
    %v3887 = vmul.f32 %v3768, %v3886
    %v3888 = vrcp.pop %v3806
    %v3889 = vmul.f32 %v3806, %v3888
    %v3890 = vsub.f32 1.0, %v3889
    %v3891 = vmul.f32 %v3888, %v3890
    %v3892 = vadd.f32 %v3888, %v3891
    %vm3893 = vweird.f32 %v3806
    %vm3894 = vweird.f32 %v3888
    %vm3895 = vmor %vm3893, %vm3894
    %v3896 = vsel %vm3895, %v3888, %v3892
    %v3897 = vand.u32 2147483647, %v3806
    %vm3898 = vcmp.eq.f32.partialorder %v3897, 8.507059e+37
    %v3899 = vand.u32 %v3806, 2147483648
    %v3900 = vor.u32 1.1754944e-38, %v3899
    %v3901 = vsel %vm3898, %v3900, %v3896
    %v3902 = vmul.f32 %v3770, %v3901
    %v3903 = vrcp.pop %v3809
    %v3904 = vmul.f32 %v3809, %v3903
    %v3905 = vsub.f32 1.0, %v3904
    %v3906 = vmul.f32 %v3903, %v3905
    %v3907 = vadd.f32 %v3903, %v3906
    %vm3908 = vweird.f32 %v3809
    %vm3909 = vweird.f32 %v3903
    %vm3910 = vmor %vm3908, %vm3909
    %v3911 = vsel %vm3910, %v3903, %v3907
    %v3912 = vand.u32 2147483647, %v3809
    %vm3913 = vcmp.eq.f32.partialorder %v3912, 8.507059e+37
    %v3914 = vand.u32 %v3809, 2147483648
    %v3915 = vor.u32 1.1754944e-38, %v3914
    %v3916 = vsel %vm3913, %v3915, %v3911
    %v3917 = vmul.f32 %v3772, %v3916
    %v3918 = vrcp.pop %v3812
    %v3919 = vmul.f32 %v3812, %v3918
    %v3920 = vsub.f32 1.0, %v3919
    %v3921 = vmul.f32 %v3918, %v3920
    %v3922 = vadd.f32 %v3918, %v3921
    %vm3923 = vweird.f32 %v3812
    %vm3924 = vweird.f32 %v3918
    %vm3925 = vmor %vm3923, %vm3924
    %v3926 = vsel %vm3925, %v3918, %v3922
    %v3927 = vand.u32 2147483647, %v3812
    %vm3928 = vcmp.eq.f32.partialorder %v3927, 8.507059e+37
    %v3929 = vand.u32 %v3812, 2147483648
    %v3930 = vor.u32 1.1754944e-38, %v3929
    %v3931 = vsel %vm3928, %v3930, %v3926
    %v3932 = vmul.f32 %v3774, %v3931
    %v3933 = vrcp.pop %v3815
    %v3934 = vmul.f32 %v3815, %v3933
    %v3935 = vsub.f32 1.0, %v3934
    %v3936 = vmul.f32 %v3933, %v3935
    %v3937 = vadd.f32 %v3933, %v3936
    %vm3938 = vweird.f32 %v3815
    %vm3939 = vweird.f32 %v3933
    %vm3940 = vmor %vm3938, %vm3939
    %v3941 = vsel %vm3940, %v3933, %v3937
    %v3942 = vand.u32 2147483647, %v3815
    %vm3943 = vcmp.eq.f32.partialorder %v3942, 8.507059e+37
    %v3944 = vand.u32 %v3815, 2147483648
    %v3945 = vor.u32 1.1754944e-38, %v3944
    %v3946 = vsel %vm3943, %v3945, %v3941
    %v3947 = vmul.f32 %v3776, %v3946
    %v3948 = vrcp.pop %v3818
    %v3949 = vmul.f32 %v3818, %v3948
    %v3950 = vsub.f32 1.0, %v3949
    %v3951 = vmul.f32 %v3948, %v3950
    %v3952 = vadd.f32 %v3948, %v3951
    %vm3953 = vweird.f32 %v3818
    %vm3954 = vweird.f32 %v3948
    %vm3955 = vmor %vm3953, %vm3954
    %v3956 = vsel %vm3955, %v3948, %v3952
    %v3957 = vand.u32 2147483647, %v3818
    %vm3958 = vcmp.eq.f32.partialorder %v3957, 8.507059e+37
    %v3959 = vand.u32 %v3818, 2147483648
    %v3960 = vor.u32 1.1754944e-38, %v3959
    %v3961 = vsel %vm3958, %v3960, %v3956
    %v3962 = vmul.f32 %v3778, %v3961
    %v3963 = vrcp.pop %v3821
    %v3964 = vmul.f32 %v3821, %v3963
    %v3965 = vsub.f32 1.0, %v3964
    %v3966 = vmul.f32 %v3963, %v3965
    %v3967 = vadd.f32 %v3963, %v3966
    %vm3968 = vweird.f32 %v3821
    %vm3969 = vweird.f32 %v3963
    %vm3970 = vmor %vm3968, %vm3969
    %v3971 = vsel %vm3970, %v3963, %v3967
    %v3972 = vand.u32 2147483647, %v3821
    %vm3973 = vcmp.eq.f32.partialorder %v3972, 8.507059e+37
    %v3974 = vand.u32 %v3821, 2147483648
    %v3975 = vor.u32 1.1754944e-38, %v3974
    %v3976 = vsel %vm3973, %v3975, %v3971
    %v3977 = vmul.f32 %v3780, %v3976
    %v3978 = vrcp.pop %v3824
    %v3979 = vmul.f32 %v3824, %v3978
    %v3980 = vsub.f32 1.0, %v3979
    %v3981 = vmul.f32 %v3978, %v3980
    %v3982 = vadd.f32 %v3978, %v3981
    %vm3983 = vweird.f32 %v3824
    %vm3984 = vweird.f32 %v3978
    %vm3985 = vmor %vm3983, %vm3984
    %v3986 = vsel %vm3985, %v3978, %v3982
    %v3987 = vand.u32 2147483647, %v3824
    %vm3988 = vcmp.eq.f32.partialorder %v3987, 8.507059e+37
    %v3989 = vand.u32 %v3824, 2147483648
    %v3990 = vor.u32 1.1754944e-38, %v3989
    %v3991 = vsel %vm3988, %v3990, %v3986
    %v3992 = vmul.f32 %v3782, %v3991
    %v3993 = vrcp.pop %v3827
    %v3994 = vmul.f32 %v3827, %v3993
    %v3995 = vsub.f32 1.0, %v3994
    %v3996 = vmul.f32 %v3993, %v3995
    %v3997 = vadd.f32 %v3993, %v3996
    %vm3998 = vweird.f32 %v3827
    %vm3999 = vweird.f32 %v3993
    %vm4000 = vmor %vm3998, %vm3999
    %v4001 = vsel %vm4000, %v3993, %v3997
    %v4002 = vand.u32 2147483647, %v3827
    %vm4003 = vcmp.eq.f32.partialorder %v4002, 8.507059e+37
    %v4004 = vand.u32 %v3827, 2147483648
    %v4005 = vor.u32 1.1754944e-38, %v4004
    %v4006 = vsel %vm4003, %v4005, %v4001
    %v4007 = vmul.f32 %v3784, %v4006
    %v4008 = vrcp.pop %v3830
    %v4009 = vmul.f32 %v3830, %v4008
    %v4010 = vsub.f32 1.0, %v4009
    %v4011 = vmul.f32 %v4008, %v4010
    %v4012 = vadd.f32 %v4008, %v4011
    %vm4013 = vweird.f32 %v3830
    %vm4014 = vweird.f32 %v4008
    %vm4015 = vmor %vm4013, %vm4014
    %v4016 = vsel %vm4015, %v4008, %v4012
    %v4017 = vand.u32 2147483647, %v3830
    %vm4018 = vcmp.eq.f32.partialorder %v4017, 8.507059e+37
    %v4019 = vand.u32 %v3830, 2147483648
    %v4020 = vor.u32 1.1754944e-38, %v4019
    %v4021 = vsel %vm4018, %v4020, %v4016
    %v4022 = vmul.f32 %v3786, %v4021
    %v4023 = vrcp.pop %v3833
    %v4024 = vmul.f32 %v3833, %v4023
    %v4025 = vsub.f32 1.0, %v4024
    %v4026 = vmul.f32 %v4023, %v4025
    %v4027 = vadd.f32 %v4023, %v4026
    %vm4028 = vweird.f32 %v3833
    %vm4029 = vweird.f32 %v4023
    %vm4030 = vmor %vm4028, %vm4029
    %v4031 = vsel %vm4030, %v4023, %v4027
    %v4032 = vand.u32 2147483647, %v3833
    %vm4033 = vcmp.eq.f32.partialorder %v4032, 8.507059e+37
    %v4034 = vand.u32 %v3833, 2147483648
    %v4035 = vor.u32 1.1754944e-38, %v4034
    %v4036 = vsel %vm4033, %v4035, %v4031
    %v4037 = vmul.f32 %v3788, %v4036
    %v4038 = vrcp.pop %v3836
    %v4039 = vmul.f32 %v3836, %v4038
    %v4040 = vsub.f32 1.0, %v4039
    %v4041 = vmul.f32 %v4038, %v4040
    %v4042 = vadd.f32 %v4038, %v4041
    %vm4043 = vweird.f32 %v3836
    %vm4044 = vweird.f32 %v4038
    %vm4045 = vmor %vm4043, %vm4044
    %v4046 = vsel %vm4045, %v4038, %v4042
    %v4047 = vand.u32 2147483647, %v3836
    %vm4048 = vcmp.eq.f32.partialorder %v4047, 8.507059e+37
    %v4049 = vand.u32 %v3836, 2147483648
    %v4050 = vor.u32 1.1754944e-38, %v4049
    %v4051 = vsel %vm4048, %v4050, %v4046
    %v4052 = vmul.f32 %v3790, %v4051
    %v4053 = vrcp.pop %v3839
    %v4054 = vmul.f32 %v3839, %v4053
    %v4055 = vsub.f32 1.0, %v4054
    %v4056 = vmul.f32 %v4053, %v4055
    %v4057 = vadd.f32 %v4053, %v4056
    %vm4058 = vweird.f32 %v3839
    %vm4059 = vweird.f32 %v4053
    %vm4060 = vmor %vm4058, %vm4059
    %v4061 = vsel %vm4060, %v4053, %v4057
    %v4062 = vand.u32 2147483647, %v3839
    %vm4063 = vcmp.eq.f32.partialorder %v4062, 8.507059e+37
    %v4064 = vand.u32 %v3839, 2147483648
    %v4065 = vor.u32 1.1754944e-38, %v4064
    %v4066 = vsel %vm4063, %v4065, %v4061
    %v4067 = vmul.f32 %v3792, %v4066
    %v4068 = vrcp.pop %v3842
    %v4069 = vmul.f32 %v3842, %v4068
    %v4070 = vsub.f32 1.0, %v4069
    %v4071 = vmul.f32 %v4068, %v4070
    %v4072 = vadd.f32 %v4068, %v4071
    %vm4073 = vweird.f32 %v3842
    %vm4074 = vweird.f32 %v4068
    %vm4075 = vmor %vm4073, %vm4074
    %v4076 = vsel %vm4075, %v4068, %v4072
    %v4077 = vand.u32 2147483647, %v3842
    %vm4078 = vcmp.eq.f32.partialorder %v4077, 8.507059e+37
    %v4079 = vand.u32 %v3842, 2147483648
    %v4080 = vor.u32 1.1754944e-38, %v4079
    %v4081 = vsel %vm4078, %v4080, %v4076
    %v4082 = vmul.f32 %v3794, %v4081
    %4083 = vrot.lane.b32.xlu0 %v3320, 40
    %v4084 = vpop.permute.xlu0 %4083
    %4085 = vrot.lane.b32.xlu0 %v3321, 40
    %v4086 = vpop.permute.xlu0 %4085
    %v4090 = vsel %vm391, %v3857, 0
    %v4093 = vsel %vm391, %v3872, 0
    %4095 = vmatpush.msra.mxu0 0.0
    %4096 = vmatpush.msra.mxu0 0.0
    %4097 = vmatpush.msra.mxu0 0.0
    %4098 = vmatpush.msra.mxu0 0.0
    %4099 = vmatpush.msra.mxu0 0.0
    %4100 = vmatpush.msra.mxu0 0.0
    %4101 = vmatpush.msra.mxu0 0.0
    %4102 = vmatpush.msra.mxu0 0.0
    %4103 = vmatpush.msra.mxu0 0.0
    %4104 = vmatpush.msra.mxu0 0.0
    %4105 = vmatpush.msra.mxu0 0.0
    %4106 = vmatpush.msra.mxu0 0.0
    %4107 = vmatpush.msra.mxu0 0.0
    %4108 = vmatpush.msra.mxu0 0.0
    %4109 = vmatpush.msra.mxu0 %v4086
    %4110 = vmatpush.msra.mxu0 %v4084
    %4111 = vmatmul.f32.gmra.mxu0 %v4090
    %v4112 = vpop.f32.mrf.mxu0
    %v4113 = vadd.f32 0.0, %v4112
    %4114 = vmatmul.f32.gmra.mxu0 %v4093
    %v4115 = vpop.f32.mrf.mxu0
    %v4116 = vadd.f32 0.0, %v4115
    %4117 = vdwg.mxu0
    %4118 = vrot.lane.b32.xlu0 %v3322, 40
    %v4119 = vpop.permute.xlu0 %4118
    %4120 = vrot.lane.b32.xlu0 %v3323, 40
    %v4121 = vpop.permute.xlu0 %4120
    %v4125 = vsel %vm391, %v3887, 0
    %v4128 = vsel %vm391, %v3902, 0
    %4130 = vmatpush.msra.mxu0 0.0
    %4131 = vmatpush.msra.mxu0 0.0
    %4132 = vmatpush.msra.mxu0 0.0
    %4133 = vmatpush.msra.mxu0 0.0
    %4134 = vmatpush.msra.mxu0 0.0
    %4135 = vmatpush.msra.mxu0 0.0
    %4136 = vmatpush.msra.mxu0 0.0
    %4137 = vmatpush.msra.mxu0 0.0
    %4138 = vmatpush.msra.mxu0 0.0
    %4139 = vmatpush.msra.mxu0 0.0
    %4140 = vmatpush.msra.mxu0 0.0
    %4141 = vmatpush.msra.mxu0 0.0
    %4142 = vmatpush.msra.mxu0 0.0
    %4143 = vmatpush.msra.mxu0 0.0
    %4144 = vmatpush.msra.mxu0 %v4121
    %4145 = vmatpush.msra.mxu0 %v4119
    %4146 = vmatmul.f32.gmra.mxu0 %v4125
    %v4147 = vpop.f32.mrf.mxu0
    %v4148 = vadd.f32 0.0, %v4147
    %4149 = vmatmul.f32.gmra.mxu0 %v4128
    %v4150 = vpop.f32.mrf.mxu0
    %v4151 = vadd.f32 0.0, %v4150
    %4152 = vdwg.mxu0
    %4153 = vrot.lane.b32.xlu0 %v3324, 40
    %v4154 = vpop.permute.xlu0 %4153
    %4155 = vrot.lane.b32.xlu0 %v3325, 40
    %v4156 = vpop.permute.xlu0 %4155
    %v4160 = vsel %vm391, %v3917, 0
    %v4163 = vsel %vm391, %v3932, 0
    %4165 = vmatpush.msra.mxu0 0.0
    %4166 = vmatpush.msra.mxu0 0.0
    %4167 = vmatpush.msra.mxu0 0.0
    %4168 = vmatpush.msra.mxu0 0.0
    %4169 = vmatpush.msra.mxu0 0.0
    %4170 = vmatpush.msra.mxu0 0.0
    %4171 = vmatpush.msra.mxu0 0.0
    %4172 = vmatpush.msra.mxu0 0.0
    %4173 = vmatpush.msra.mxu0 0.0
    %4174 = vmatpush.msra.mxu0 0.0
    %4175 = vmatpush.msra.mxu0 0.0
    %4176 = vmatpush.msra.mxu0 0.0
    %4177 = vmatpush.msra.mxu0 0.0
    %4178 = vmatpush.msra.mxu0 0.0
    %4179 = vmatpush.msra.mxu0 %v4156
    %4180 = vmatpush.msra.mxu0 %v4154
    %4181 = vmatmul.f32.gmra.mxu0 %v4160
    %v4182 = vpop.f32.mrf.mxu0
    %v4183 = vadd.f32 0.0, %v4182
    %4184 = vmatmul.f32.gmra.mxu0 %v4163
    %v4185 = vpop.f32.mrf.mxu0
    %v4186 = vadd.f32 0.0, %v4185
    %4187 = vdwg.mxu0
    %4188 = vrot.lane.b32.xlu0 %v3326, 40
    %v4189 = vpop.permute.xlu0 %4188
    %4190 = vrot.lane.b32.xlu0 %v3327, 40
    %v4191 = vpop.permute.xlu0 %4190
    %v4195 = vsel %vm391, %v3947, 0
    %v4198 = vsel %vm391, %v3962, 0
    %4200 = vmatpush.msra.mxu0 0.0
    %4201 = vmatpush.msra.mxu0 0.0
    %4202 = vmatpush.msra.mxu0 0.0
    %4203 = vmatpush.msra.mxu0 0.0
    %4204 = vmatpush.msra.mxu0 0.0
    %4205 = vmatpush.msra.mxu0 0.0
    %4206 = vmatpush.msra.mxu0 0.0
    %4207 = vmatpush.msra.mxu0 0.0
    %4208 = vmatpush.msra.mxu0 0.0
    %4209 = vmatpush.msra.mxu0 0.0
    %4210 = vmatpush.msra.mxu0 0.0
    %4211 = vmatpush.msra.mxu0 0.0
    %4212 = vmatpush.msra.mxu0 0.0
    %4213 = vmatpush.msra.mxu0 0.0
    %4214 = vmatpush.msra.mxu0 %v4191
    %4215 = vmatpush.msra.mxu0 %v4189
    %4216 = vmatmul.f32.gmra.mxu0 %v4195
    %v4217 = vpop.f32.mrf.mxu0
    %v4218 = vadd.f32 0.0, %v4217
    %4219 = vmatmul.f32.gmra.mxu0 %v4198
    %v4220 = vpop.f32.mrf.mxu0
    %v4221 = vadd.f32 0.0, %v4220
    %4222 = vdwg.mxu0
    %4223 = vrot.lane.b32.xlu0 %v3328, 40
    %v4224 = vpop.permute.xlu0 %4223
    %4225 = vrot.lane.b32.xlu0 %v3329, 40
    %v4226 = vpop.permute.xlu0 %4225
    %v4230 = vsel %vm391, %v3977, 0
    %v4233 = vsel %vm391, %v3992, 0
    %4235 = vmatpush.msra.mxu0 0.0
    %4236 = vmatpush.msra.mxu0 0.0
    %4237 = vmatpush.msra.mxu0 0.0
    %4238 = vmatpush.msra.mxu0 0.0
    %4239 = vmatpush.msra.mxu0 0.0
    %4240 = vmatpush.msra.mxu0 0.0
    %4241 = vmatpush.msra.mxu0 0.0
    %4242 = vmatpush.msra.mxu0 0.0
    %4243 = vmatpush.msra.mxu0 0.0
    %4244 = vmatpush.msra.mxu0 0.0
    %4245 = vmatpush.msra.mxu0 0.0
    %4246 = vmatpush.msra.mxu0 0.0
    %4247 = vmatpush.msra.mxu0 0.0
    %4248 = vmatpush.msra.mxu0 0.0
    %4249 = vmatpush.msra.mxu0 %v4226
    %4250 = vmatpush.msra.mxu0 %v4224
    %4251 = vmatmul.f32.gmra.mxu0 %v4230
    %v4252 = vpop.f32.mrf.mxu0
    %v4253 = vadd.f32 0.0, %v4252
    %4254 = vmatmul.f32.gmra.mxu0 %v4233
    %v4255 = vpop.f32.mrf.mxu0
    %v4256 = vadd.f32 0.0, %v4255
    %4257 = vdwg.mxu0
    %4258 = vrot.lane.b32.xlu0 %v3330, 40
    %v4259 = vpop.permute.xlu0 %4258
    %4260 = vrot.lane.b32.xlu0 %v3331, 40
    %v4261 = vpop.permute.xlu0 %4260
    %v4265 = vsel %vm391, %v4007, 0
    %v4268 = vsel %vm391, %v4022, 0
    %4270 = vmatpush.msra.mxu0 0.0
    %4271 = vmatpush.msra.mxu0 0.0
    %4272 = vmatpush.msra.mxu0 0.0
    %4273 = vmatpush.msra.mxu0 0.0
    %4274 = vmatpush.msra.mxu0 0.0
    %4275 = vmatpush.msra.mxu0 0.0
    %4276 = vmatpush.msra.mxu0 0.0
    %4277 = vmatpush.msra.mxu0 0.0
    %4278 = vmatpush.msra.mxu0 0.0
    %4279 = vmatpush.msra.mxu0 0.0
    %4280 = vmatpush.msra.mxu0 0.0
    %4281 = vmatpush.msra.mxu0 0.0
    %4282 = vmatpush.msra.mxu0 0.0
    %4283 = vmatpush.msra.mxu0 0.0
    %4284 = vmatpush.msra.mxu0 %v4261
    %4285 = vmatpush.msra.mxu0 %v4259
    %4286 = vmatmul.f32.gmra.mxu0 %v4265
    %v4287 = vpop.f32.mrf.mxu0
    %v4288 = vadd.f32 0.0, %v4287
    %4289 = vmatmul.f32.gmra.mxu0 %v4268
    %v4290 = vpop.f32.mrf.mxu0
    %v4291 = vadd.f32 0.0, %v4290
    %4292 = vdwg.mxu0
    %4293 = vrot.lane.b32.xlu0 %v3332, 40
    %v4294 = vpop.permute.xlu0 %4293
    %4295 = vrot.lane.b32.xlu0 %v3333, 40
    %v4296 = vpop.permute.xlu0 %4295
    %v4300 = vsel %vm391, %v4037, 0
    %v4303 = vsel %vm391, %v4052, 0
    %4305 = vmatpush.msra.mxu0 0.0
    %4306 = vmatpush.msra.mxu0 0.0
    %4307 = vmatpush.msra.mxu0 0.0
    %4308 = vmatpush.msra.mxu0 0.0
    %4309 = vmatpush.msra.mxu0 0.0
    %4310 = vmatpush.msra.mxu0 0.0
    %4311 = vmatpush.msra.mxu0 0.0
    %4312 = vmatpush.msra.mxu0 0.0
    %4313 = vmatpush.msra.mxu0 0.0
    %4314 = vmatpush.msra.mxu0 0.0
    %4315 = vmatpush.msra.mxu0 0.0
    %4316 = vmatpush.msra.mxu0 0.0
    %4317 = vmatpush.msra.mxu0 0.0
    %4318 = vmatpush.msra.mxu0 0.0
    %4319 = vmatpush.msra.mxu0 %v4296
    %4320 = vmatpush.msra.mxu0 %v4294
    %4321 = vmatmul.f32.gmra.mxu0 %v4300
    %v4322 = vpop.f32.mrf.mxu0
    %v4323 = vadd.f32 0.0, %v4322
    %4324 = vmatmul.f32.gmra.mxu0 %v4303
    %v4325 = vpop.f32.mrf.mxu0
    %v4326 = vadd.f32 0.0, %v4325
    %4327 = vdwg.mxu0
    %4328 = vrot.lane.b32.xlu0 %v3334, 40
    %v4329 = vpop.permute.xlu0 %4328
    %4330 = vrot.lane.b32.xlu0 %v3335, 40
    %v4331 = vpop.permute.xlu0 %4330
    %v4335 = vsel %vm391, %v4067, 0
    %v4338 = vsel %vm391, %v4082, 0
    %4340 = vmatpush.msra.mxu0 0.0
    %4341 = vmatpush.msra.mxu0 0.0
    %4342 = vmatpush.msra.mxu0 0.0
    %4343 = vmatpush.msra.mxu0 0.0
    %4344 = vmatpush.msra.mxu0 0.0
    %4345 = vmatpush.msra.mxu0 0.0
    %4346 = vmatpush.msra.mxu0 0.0
    %4347 = vmatpush.msra.mxu0 0.0
    %4348 = vmatpush.msra.mxu0 0.0
    %4349 = vmatpush.msra.mxu0 0.0
    %4350 = vmatpush.msra.mxu0 0.0
    %4351 = vmatpush.msra.mxu0 0.0
    %4352 = vmatpush.msra.mxu0 0.0
    %4353 = vmatpush.msra.mxu0 0.0
    %4354 = vmatpush.msra.mxu0 %v4331
    %4355 = vmatpush.msra.mxu0 %v4329
    %4356 = vmatmul.f32.gmra.mxu0 %v4335
    %v4357 = vpop.f32.mrf.mxu0
    %v4358 = vadd.f32 0.0, %v4357
    %4359 = vmatmul.f32.gmra.mxu0 %v4338
    %v4360 = vpop.f32.mrf.mxu0
    %v4361 = vadd.f32 0.0, %v4360
    %4362 = vdwg.mxu0
    %4379 = vrot.lane.b32.xlu0 %v4113, 24
    %v4380 = vpop.permute.xlu0 %4379
    %4381 = vrot.lane.b32.xlu0 %v4116, 24
    %v4382 = vpop.permute.xlu0 %4381
    %4383 = vrot.lane.b32.xlu0 %v4148, 24
    %v4384 = vpop.permute.xlu0 %4383
    %4385 = vrot.lane.b32.xlu0 %v4151, 24
    %v4386 = vpop.permute.xlu0 %4385
    %4387 = vrot.lane.b32.xlu0 %v4183, 24
    %v4388 = vpop.permute.xlu0 %4387
    %4389 = vrot.lane.b32.xlu0 %v4186, 24
    %v4390 = vpop.permute.xlu0 %4389
    %4391 = vrot.lane.b32.xlu0 %v4218, 24
    %v4392 = vpop.permute.xlu0 %4391
    %4393 = vrot.lane.b32.xlu0 %v4221, 24
    %v4394 = vpop.permute.xlu0 %4393
    %4395 = vrot.lane.b32.xlu0 %v4253, 24
    %v4396 = vpop.permute.xlu0 %4395
    %4397 = vrot.lane.b32.xlu0 %v4256, 24
    %v4398 = vpop.permute.xlu0 %4397
    %4399 = vrot.lane.b32.xlu0 %v4288, 24
    %v4400 = vpop.permute.xlu0 %4399
    %4401 = vrot.lane.b32.xlu0 %v4291, 24
    %v4402 = vpop.permute.xlu0 %4401
    %4403 = vrot.lane.b32.xlu0 %v4323, 24
    %v4404 = vpop.permute.xlu0 %4403
    %4405 = vrot.lane.b32.xlu0 %v4326, 24
    %v4406 = vpop.permute.xlu0 %4405
    %4407 = vrot.lane.b32.xlu0 %v4358, 24
    %v4408 = vpop.permute.xlu0 %4407
    %4409 = vrot.lane.b32.xlu0 %v4361, 24
    %v4410 = vpop.permute.xlu0 %4409
    %vm4427 = vcmask 261312
    %4428 = vst.msk [vmem:[#allocation2] sm:$0xff] %vm4427, %v4380
    %4429 = vst.msk [vmem:[#allocation2 + $0x8] sm:$0xff] %vm4427, %v4382
    %4430 = vst.msk [vmem:[#allocation2 + $0x10] sm:$0xff] %vm4427, %v4384
    %4431 = vst.msk [vmem:[#allocation2 + $0x18] sm:$0xff] %vm4427, %v4386
    %4432 = vst.msk [vmem:[#allocation2 + $0x20] sm:$0xff] %vm4427, %v4388
    %4433 = vst.msk [vmem:[#allocation2 + $0x28] sm:$0xff] %vm4427, %v4390
    %4434 = vst.msk [vmem:[#allocation2 + $0x30] sm:$0xff] %vm4427, %v4392
    %4435 = vst.msk [vmem:[#allocation2 + $0x38] sm:$0xff] %vm4427, %v4394
    %4436 = vst.msk [vmem:[#allocation2 + $0x40] sm:$0xff] %vm4427, %v4396
    %4437 = vst.msk [vmem:[#allocation2 + $0x48] sm:$0xff] %vm4427, %v4398
    %4438 = vst.msk [vmem:[#allocation2 + $0x50] sm:$0xff] %vm4427, %v4400
    %4439 = vst.msk [vmem:[#allocation2 + $0x58] sm:$0xff] %vm4427, %v4402
    %4440 = vst.msk [vmem:[#allocation2 + $0x60] sm:$0xff] %vm4427, %v4404
    %4441 = vst.msk [vmem:[#allocation2 + $0x68] sm:$0xff] %vm4427, %v4406
    %4442 = vst.msk [vmem:[#allocation2 + $0x70] sm:$0xff] %vm4427, %v4408
    %4443 = vst.msk [vmem:[#allocation2 + $0x78] sm:$0xff] %vm4427, %v4410
    %v4444 = vld [vmem:[#allocation2] sm:$0xff]
    %v4445 = vld [vmem:[#allocation2 + $0x8] sm:$0xff]
    %v4446 = vld [vmem:[#allocation2 + $0x10] sm:$0xff]
    %v4447 = vld [vmem:[#allocation2 + $0x18] sm:$0xff]
    %v4448 = vld [vmem:[#allocation2 + $0x20] sm:$0xff]
    %v4449 = vld [vmem:[#allocation2 + $0x28] sm:$0xff]
    %v4450 = vld [vmem:[#allocation2 + $0x30] sm:$0xff]
    %v4451 = vld [vmem:[#allocation2 + $0x38] sm:$0xff]
    %v4452 = vld [vmem:[#allocation2 + $0x40] sm:$0xff]
    %v4453 = vld [vmem:[#allocation2 + $0x48] sm:$0xff]
    %v4454 = vld [vmem:[#allocation2 + $0x50] sm:$0xff]
    %v4455 = vld [vmem:[#allocation2 + $0x58] sm:$0xff]
    %v4456 = vld [vmem:[#allocation2 + $0x60] sm:$0xff]
    %v4457 = vld [vmem:[#allocation2 + $0x68] sm:$0xff]
    %v4458 = vld [vmem:[#allocation2 + $0x70] sm:$0xff]
    %v4459 = vld [vmem:[#allocation2 + $0x78] sm:$0xff]
    %v4460 = vrot.slane %v4448, 4
    %vm4461 = vcmask 1047556
    %v4462 = vsel %vm4461, %v4460, %v4444
    %v4463 = vrot.slane %v4444, 4
    %v4464 = vsel %vm4461, %v4448, %v4463
    %v4466 = vunpack.c.l.s4 1983009808
    %v4467 = vunpack.c.0.s8 %v4466
    %v4468 = vperm.slane %v4462, %v4467
    %v4470 = vunpack.c.l.s4 1983009808
    %v4471 = vunpack.c.0.s8 %v4470
    %v4472 = vperm.slane %v4464, %v4471
    %v4473 = vrot.slane %v4450, 4
    %v4474 = vsel %vm4461, %v4473, %v4446
    %v4475 = vrot.slane %v4446, 4
    %v4476 = vsel %vm4461, %v4450, %v4475
    %v4478 = vunpack.c.l.s4 1983009808
    %v4479 = vunpack.c.0.s8 %v4478
    %v4480 = vperm.slane %v4474, %v4479
    %v4482 = vunpack.c.l.s4 1983009808
    %v4483 = vunpack.c.0.s8 %v4482
    %v4484 = vperm.slane %v4476, %v4483
    %v4485 = vrot.slane %v4456, 4
    %v4486 = vsel %vm4461, %v4485, %v4452
    %v4487 = vrot.slane %v4452, 4
    %v4488 = vsel %vm4461, %v4456, %v4487
    %v4490 = vunpack.c.l.s4 1983009808
    %v4491 = vunpack.c.0.s8 %v4490
    %v4492 = vperm.slane %v4486, %v4491
    %v4494 = vunpack.c.l.s4 1983009808
    %v4495 = vunpack.c.0.s8 %v4494
    %v4496 = vperm.slane %v4488, %v4495
    %v4497 = vrot.slane %v4458, 4
    %v4498 = vsel %vm4461, %v4497, %v4454
    %v4499 = vrot.slane %v4454, 4
    %v4500 = vsel %vm4461, %v4458, %v4499
    %v4502 = vunpack.c.l.s4 1983009808
    %v4503 = vunpack.c.0.s8 %v4502
    %v4504 = vperm.slane %v4498, %v4503
    %v4506 = vunpack.c.l.s4 1983009808
    %v4507 = vunpack.c.0.s8 %v4506
    %v4508 = vperm.slane %v4500, %v4507
    %v4509 = vrot.slane %v4480, 4
    %v4510 = vsel %vm4461, %v4509, %v4468
    %v4511 = vrot.slane %v4468, 4
    %v4512 = vsel %vm4461, %v4480, %v4511
    %v4514 = vunpack.c.l.s4 1934713408
    %v4515 = vunpack.c.0.s8 %v4514
    %v4516 = vperm.slane %v4510, %v4515
    %v4518 = vunpack.c.l.s4 1934713408
    %v4519 = vunpack.c.0.s8 %v4518
    %v4520 = vperm.slane %v4512, %v4519
    %v4521 = vrot.slane %v4484, 4
    %v4522 = vsel %vm4461, %v4521, %v4472
    %v4523 = vrot.slane %v4472, 4
    %v4524 = vsel %vm4461, %v4484, %v4523
    %v4526 = vunpack.c.l.s4 1934713408
    %v4527 = vunpack.c.0.s8 %v4526
    %v4528 = vperm.slane %v4522, %v4527
    %v4530 = vunpack.c.l.s4 1934713408
    %v4531 = vunpack.c.0.s8 %v4530
    %v4532 = vperm.slane %v4524, %v4531
    %v4533 = vrot.slane %v4504, 4
    %v4534 = vsel %vm4461, %v4533, %v4492
    %v4535 = vrot.slane %v4492, 4
    %v4536 = vsel %vm4461, %v4504, %v4535
    %v4538 = vunpack.c.l.s4 1934713408
    %v4539 = vunpack.c.0.s8 %v4538
    %v4540 = vperm.slane %v4534, %v4539
    %v4542 = vunpack.c.l.s4 1934713408
    %v4543 = vunpack.c.0.s8 %v4542
    %v4544 = vperm.slane %v4536, %v4543
    %v4545 = vrot.slane %v4508, 4
    %v4546 = vsel %vm4461, %v4545, %v4496
    %v4547 = vrot.slane %v4496, 4
    %v4548 = vsel %vm4461, %v4508, %v4547
    %v4550 = vunpack.c.l.s4 1934713408
    %v4551 = vunpack.c.0.s8 %v4550
    %v4552 = vperm.slane %v4546, %v4551
    %v4554 = vunpack.c.l.s4 1934713408
    %v4555 = vunpack.c.0.s8 %v4554
    %v4556 = vperm.slane %v4548, %v4555
    %v4557 = vrot.slane %v4540, 4
    %v4558 = vsel %vm4461, %v4557, %v4516
    %v4559 = vrot.slane %v4516, 4
    %v4560 = vsel %vm4461, %v4540, %v4559
    %v4561 = vrot.slane %v4544, 4
    %v4562 = vsel %vm4461, %v4561, %v4520
    %v4563 = vrot.slane %v4520, 4
    %v4564 = vsel %vm4461, %v4544, %v4563
    %v4565 = vrot.slane %v4552, 4
    %v4566 = vsel %vm4461, %v4565, %v4528
    %v4567 = vrot.slane %v4528, 4
    %v4568 = vsel %vm4461, %v4552, %v4567
    %v4569 = vrot.slane %v4556, 4
    %v4570 = vsel %vm4461, %v4569, %v4532
    %v4571 = vrot.slane %v4532, 4
    %v4572 = vsel %vm4461, %v4556, %v4571
    %v4573 = vrot.slane %v4449, 4
    %v4574 = vsel %vm4461, %v4573, %v4445
    %v4575 = vrot.slane %v4445, 4
    %v4576 = vsel %vm4461, %v4449, %v4575
    %v4578 = vunpack.c.l.s4 1983009808
    %v4579 = vunpack.c.0.s8 %v4578
    %v4580 = vperm.slane %v4574, %v4579
    %v4582 = vunpack.c.l.s4 1983009808
    %v4583 = vunpack.c.0.s8 %v4582
    %v4584 = vperm.slane %v4576, %v4583
    %v4585 = vrot.slane %v4451, 4
    %v4586 = vsel %vm4461, %v4585, %v4447
    %v4587 = vrot.slane %v4447, 4
    %v4588 = vsel %vm4461, %v4451, %v4587
    %v4590 = vunpack.c.l.s4 1983009808
    %v4591 = vunpack.c.0.s8 %v4590
    %v4592 = vperm.slane %v4586, %v4591
    %v4594 = vunpack.c.l.s4 1983009808
    %v4595 = vunpack.c.0.s8 %v4594
    %v4596 = vperm.slane %v4588, %v4595
    %v4597 = vrot.slane %v4457, 4
    %v4598 = vsel %vm4461, %v4597, %v4453
    %v4599 = vrot.slane %v4453, 4
    %v4600 = vsel %vm4461, %v4457, %v4599
    %v4602 = vunpack.c.l.s4 1983009808
    %v4603 = vunpack.c.0.s8 %v4602
    %v4604 = vperm.slane %v4598, %v4603
    %v4606 = vunpack.c.l.s4 1983009808
    %v4607 = vunpack.c.0.s8 %v4606
    %v4608 = vperm.slane %v4600, %v4607
    %v4609 = vrot.slane %v4459, 4
    %v4610 = vsel %vm4461, %v4609, %v4455
    %v4611 = vrot.slane %v4455, 4
    %v4612 = vsel %vm4461, %v4459, %v4611
    %v4614 = vunpack.c.l.s4 1983009808
    %v4615 = vunpack.c.0.s8 %v4614
    %v4616 = vperm.slane %v4610, %v4615
    %v4618 = vunpack.c.l.s4 1983009808
    %v4619 = vunpack.c.0.s8 %v4618
    %v4620 = vperm.slane %v4612, %v4619
    %v4621 = vrot.slane %v4592, 4
    %v4622 = vsel %vm4461, %v4621, %v4580
    %v4623 = vrot.slane %v4580, 4
    %v4624 = vsel %vm4461, %v4592, %v4623
    %v4626 = vunpack.c.l.s4 1934713408
    %v4627 = vunpack.c.0.s8 %v4626
    %v4628 = vperm.slane %v4622, %v4627
    %v4630 = vunpack.c.l.s4 1934713408
    %v4631 = vunpack.c.0.s8 %v4630
    %v4632 = vperm.slane %v4624, %v4631
    %v4633 = vrot.slane %v4596, 4
    %v4634 = vsel %vm4461, %v4633, %v4584
    %v4635 = vrot.slane %v4584, 4
    %v4636 = vsel %vm4461, %v4596, %v4635
    %v4638 = vunpack.c.l.s4 1934713408
    %v4639 = vunpack.c.0.s8 %v4638
    %v4640 = vperm.slane %v4634, %v4639
    %v4642 = vunpack.c.l.s4 1934713408
    %v4643 = vunpack.c.0.s8 %v4642
    %v4644 = vperm.slane %v4636, %v4643
    %v4645 = vrot.slane %v4616, 4
    %v4646 = vsel %vm4461, %v4645, %v4604
    %v4647 = vrot.slane %v4604, 4
    %v4648 = vsel %vm4461, %v4616, %v4647
    %v4650 = vunpack.c.l.s4 1934713408
    %v4651 = vunpack.c.0.s8 %v4650
    %v4652 = vperm.slane %v4646, %v4651
    %v4654 = vunpack.c.l.s4 1934713408
    %v4655 = vunpack.c.0.s8 %v4654
    %v4656 = vperm.slane %v4648, %v4655
    %v4657 = vrot.slane %v4620, 4
    %v4658 = vsel %vm4461, %v4657, %v4608
    %v4659 = vrot.slane %v4608, 4
    %v4660 = vsel %vm4461, %v4620, %v4659
    %v4662 = vunpack.c.l.s4 1934713408
    %v4663 = vunpack.c.0.s8 %v4662
    %v4664 = vperm.slane %v4658, %v4663
    %v4666 = vunpack.c.l.s4 1934713408
    %v4667 = vunpack.c.0.s8 %v4666
    %v4668 = vperm.slane %v4660, %v4667
    %v4669 = vrot.slane %v4652, 4
    %v4670 = vsel %vm4461, %v4669, %v4628
    %v4671 = vrot.slane %v4628, 4
    %v4672 = vsel %vm4461, %v4652, %v4671
    %v4673 = vrot.slane %v4656, 4
    %v4674 = vsel %vm4461, %v4673, %v4632
    %v4675 = vrot.slane %v4632, 4
    %v4676 = vsel %vm4461, %v4656, %v4675
    %v4677 = vrot.slane %v4664, 4
    %v4678 = vsel %vm4461, %v4677, %v4640
    %v4679 = vrot.slane %v4640, 4
    %v4680 = vsel %vm4461, %v4664, %v4679
    %v4681 = vrot.slane %v4668, 4
    %v4682 = vsel %vm4461, %v4681, %v4644
    %v4683 = vrot.slane %v4644, 4
    %v4684 = vsel %vm4461, %v4668, %v4683
    %4686 = vrot.lane.b32.xlu0 %v4560, 32
    %v4687 = vpop.permute.xlu0 %4686
    %4690 = vrot.lane.b32.xlu0 %v4562, 64
    %v4691 = vpop.permute.xlu0 %4690
    %4694 = vrot.lane.b32.xlu0 %v4564, 96
    %v4695 = vpop.permute.xlu0 %4694
    %4698 = vrot.lane.b32.xlu0 %v4568, 32
    %v4699 = vpop.permute.xlu0 %4698
    %4702 = vrot.lane.b32.xlu0 %v4570, 64
    %v4703 = vpop.permute.xlu0 %4702
    %4706 = vrot.lane.b32.xlu0 %v4572, 96
    %v4707 = vpop.permute.xlu0 %4706
    %4710 = vrot.lane.b32.xlu0 %v4672, 32
    %v4711 = vpop.permute.xlu0 %4710
    %4714 = vrot.lane.b32.xlu0 %v4674, 64
    %v4715 = vpop.permute.xlu0 %4714
    %4718 = vrot.lane.b32.xlu0 %v4676, 96
    %v4719 = vpop.permute.xlu0 %4718
    %4722 = vrot.lane.b32.xlu0 %v4680, 32
    %v4723 = vpop.permute.xlu0 %4722
    %4726 = vrot.lane.b32.xlu0 %v4682, 64
    %v4727 = vpop.permute.xlu0 %4726
    %4730 = vrot.lane.b32.xlu0 %v4684, 96
    %v4731 = vpop.permute.xlu0 %4730
    %vm4733 = vcmask 261120
    %v4734 = vsel %vm4733, %v4558, %v4687
    %vm4735 = vcmask 523264
    %v4736 = vsel %vm4735, %v4734, %v4691
    %vm4737 = vcmask 785408
    %v4738 = vsel %vm4737, %v4736, %v4695
    %v4739 = vsel %vm4733, %v4566, %v4699
    %v4740 = vsel %vm4735, %v4739, %v4703
    %v4741 = vsel %vm4737, %v4740, %v4707
    %v4742 = vsel %vm4733, %v4670, %v4711
    %v4743 = vsel %vm4735, %v4742, %v4715
    %v4744 = vsel %vm4737, %v4743, %v4719
    %v4745 = vsel %vm4733, %v4678, %v4723
    %v4746 = vsel %vm4735, %v4745, %v4727
    %v4747 = vsel %vm4737, %v4746, %v4731
    %4748 = vst [vmem:[#allocation8] sm:$0xff] %v4738
    %4749 = vst [vmem:[#allocation8 + $0x8] sm:$0xff] %v4741
    %4750 = vst [vmem:[#allocation8 + $0x10] sm:$0xff] %v4744
    %4751 = vst [vmem:[#allocation8 + $0x18] sm:$0xff] %v4747
    // Predicated region
    $region18: #{tpu_custom_call.1} parent=1 // pred_check
      _
    $region19: #{tpu_custom_call.1} parent=1 // pred_check_branch
      %4753 = sbr.rel (0) target = $region21
    $region20: #{tpu_custom_call.1} parent=1 // pred_region
      %4755 = vsyncadd [#allocation5], 0
      %s4757 = sshll.u32 [#allocation8], 4
      %s4758 = int_to_ptr.vmem [resolvable:$true] %s4757
      %s4759 = sshll.u32 %s2, 4
      %s4760 = int_to_ptr.hbm [resolvable:$true] %s4759
      %4762 = dma.vmem_to_hbm [thread:$0]  %s4758, 512, %s4760, [#allocation5]
    $region21: #{tpu_custom_call.1} parent=1 // pred_fallthru
      _
    // Predicated region
    $region22: #{tpu_custom_call.1} parent=1 // pred_check
      _
    $region23: #{tpu_custom_call.1} parent=1 // pred_check_branch
      %4764 = sbr.rel (0) target = $region25
    $region24: #{tpu_custom_call.1} parent=1 // pred_region
      %4766 = dma.done [#allocation5], 512
    $region25: #{tpu_custom_call.1} parent=1 // pred_fallthru
      _
    %4767 = vsyncpa [#allocation4], 1
    %4768 = vsyncpa [#allocation7], 1
    %4769 = vsyncpa [#allocation5], 1

</llo_original>
